<compile_context>
chip_gen: v6e
topology: v6e:2x2x1
jax: 0.10.0
libtpu: 0.0.40
codegen_flags: <defaults>
</compile_context>

<pallas_src>
import functools

import jax
import jax.numpy as jnp
from jax import lax
from jax.experimental import pallas as pl
from jax.experimental.pallas import tpu as pltpu

# ----- small, module-consistent sizes --------------------------------------
V = 32        # vocabulary_size
E = 16        # embedding_size
H = 16        # gru hidden_size (bidirectional -> annotations are 2H wide)
A = 16        # attention_size
B = 2         # batch
T = 8         # source sequence length
MAX_LEN = 8   # target sequence length (y.size(1))
SOS, EOS, PAD = 1, 2, 0
# num_layers is taken as 1 (dropout between GRU layers is then a no-op).


# ---------------------------------------------------------------------------
# Fused-weight construction (plain JAX, runs once per forward call)
# Gate order inside each direction follows PyTorch GRU: (r, z, n).
# Fused column layout: [r_f r_b | z_f z_b | n_f n_b], each block H wide.
# ---------------------------------------------------------------------------
def _gate_blocks(w):
    return w[..., :H], w[..., H:2 * H], w[..., 2 * H:]


def _fuse_gate_cols(w_f, w_b):
    """Both directions read the SAME input rows: simple column interleave."""
    rf, zf, nf = _gate_blocks(w_f)
    rb, zb, nb = _gate_blocks(w_b)
    return jnp.concatenate([rf, rb, zf, zb, nf, nb], axis=-1)


def _fuse_gate_cols_blockdiag(w_f, w_b):
    """Directions read different input rows (input layout [x_fwd | x_bwd]):
    block-diagonal rows, gate-interleaved columns."""
    pad_f = jnp.zeros((w_f.shape[0], H), jnp.float32)
    pad_b = jnp.zeros((w_b.shape[0], H), jnp.float32)
    rf, zf, nf = _gate_blocks(w_f)
    rb, zb, nb = _gate_blocks(w_b)
    top = jnp.concatenate([rf, pad_f, zf, pad_f, nf, pad_f], axis=-1)
    bot = jnp.concatenate([pad_b, rb, pad_b, zb, pad_b, nb], axis=-1)
    return jnp.concatenate([top, bot], axis=0)


# ---------------------------------------------------------------------------
# The single fused kernel: encoder + attention + decoder + pointer mixture
# ---------------------------------------------------------------------------
def eda_cs_kernel(
        x_cat_ref,        # (T, B, 2E)        [fwd-time emb | bwd-time emb]
        dec_emb_ref,      # (MAX_LEN-1, B, E) teacher-forced input embeddings
        src_oh_ref,       # (T, B, V)         one-hot source tokens (pointer)
        enc_wih_ref,      # (2E, 6H)  block-diag over directions
        enc_bih_ref,      # (1, 6H)
        enc_whh_ref,      # (2H, 6H)  block-diag over directions
        enc_bhh_ref,      # (1, 6H)
        dec_wie_ref,      # (E, 6H+1)  emb rows; last col = pg_we
        dec_wic_ref,      # (2H, 6H+1) ctx rows [f|b]; last col = pg_wc
        dec_bih_ref,      # (1, 6H+1)
        dec_whh_ref,      # (2H, 6H)  block-diag over directions
        dec_bhh_ref,      # (1, 6H)
        att_wq_ref,       # (H, A)
        att_wk_ref,       # (2H, A)
        att_v_ref,        # (1, A)
        out_wd_ref,       # (2H, V+1) dec_out rows; last col = pg_wd
        out_wc_ref,       # (2H, V+1) ctx rows;     last col = 0
        out_b_ref,        # (1, V+1)  last col = pg_b
        probs_ref,        # OUT: (B, MAX_LEN*V)  lane-dense
        ann_ref,          # scratch: (T, B, 2H) annotations [fwd | bwd]
        kp_ref,           # scratch: (T, B, A)  precomputed attention keys
        rows_ref):        # scratch: (MAX_LEN, B, V) per-position prob rows
    f32 = jnp.float32
    t_len, b_sz, _ = x_cat_ref.shape
    max_len, _, v_sz = rows_ref.shape
    h2 = dec_whh_ref.shape[0]
    h = h2 // 2
    g6 = 3 * h2                                   # 6H

    def gru_gates(gi, gh, h_prev):
        # PyTorch GRU gate math; both directions vectorized along the lane axis.
        r = jax.nn.sigmoid(gi[:, :h2] + gh[:, :h2])
        z = jax.nn.sigmoid(gi[:, h2:2 * h2] + gh[:, h2:2 * h2])
        n = jnp.tanh(gi[:, 2 * h2:] + r * gh[:, 2 * h2:])
        return (1.0 - z) * n + z * h_prev

    # ---------------- encoder: both directions in one fused step -------------
    enc_wih = enc_wih_ref[...]
    enc_bih = enc_bih_ref[...]
    enc_whh = enc_whh_ref[...]
    enc_bhh = enc_bhh_ref[...]

    h_enc = jnp.zeros((b_sz, h2), f32)            # [h_fwd | h_bwd]
    states = []
    for i in range(t_len):                        # static unrolled (low pressure)
        gi = jnp.dot(x_cat_ref[i], enc_wih, preferred_element_type=f32) + enc_bih
        gh = jnp.dot(h_enc, enc_whh, preferred_element_type=f32) + enc_bhh
        h_enc = gru_gates(gi, gh, h_enc)
        states.append(h_enc)                      # fwd@i in [:h], bwd@(T-1-i) in [h:]

    # Annotations ([fwd_i | bwd_i]) and attention key projection, built ONCE
    # after the recurrence (no per-step sliced stores), then parked in VMEM so
    # the decode loop re-loads them instead of holding them in vregs.
    wk = att_wk_ref[...]
    for i in range(t_len):
        a = jnp.concatenate(
            [states[i][:, :h], states[t_len - 1 - i][:, h:]], axis=-1)   # (B, 2H)
        ann_ref[i] = a
        kp_ref[i] = jnp.dot(a, wk, preferred_element_type=f32)           # (B, A)

    # position 0: probability mass fixed on SOS (matches first_prob upstream)
    iota_v = jax.lax.broadcasted_iota(jnp.int32, (b_sz, v_sz), 1)
    rows_ref[0] = (iota_v == SOS).astype(f32)

    # ---------------- decoder: rolled fori_loop, carries only (h, out) -------
    def dec_step(pos, carry):
        dec_h, dec_out = carry
        emb = dec_emb_ref[pos - 1]                                   # (B, E)

        # Bahdanau attention (keys precomputed, reloaded from VMEM)
        kp = kp_ref[...]                                             # (T, B, A)
        ann = ann_ref[...]                                           # (T, B, 2H)
        qp = jnp.dot(dec_out[:, :h], att_wq_ref[...],
                     preferred_element_type=f32)                     # (B, A)
        e = jnp.tanh(kp + qp[None, :, :])                            # (T, B, A)
        sc = jnp.sum(e * att_v_ref[...][None, :, :],
                     axis=-1, keepdims=True)                         # (T, B, 1)
        m = jnp.max(sc, axis=0, keepdims=True)
        ew = jnp.exp(sc - m)
        att = ew * pl.reciprocal(jnp.sum(ew, axis=0, keepdims=True), approx=True)
        ctx = jnp.sum(att * ann, axis=0)                             # (B, 2H) [f|b]

        # fused GRU-input matmul; extra column carries emb/ctx p_gen partial
        gi_full = (jnp.dot(emb, dec_wie_ref[...], preferred_element_type=f32)
                   + jnp.dot(ctx, dec_wic_ref[...], preferred_element_type=f32)
                   + dec_bih_ref[...])                               # (B, 6H+1)
        gh = (jnp.dot(dec_h, dec_whh_ref[...], preferred_element_type=f32)
              + dec_bhh_ref[...])                                    # (B, 6H)
        new_h = gru_gates(gi_full[:, :g6], gh, dec_h)
        new_out = new_h                                              # (B, 2H)

        # fused vocab-logits / p_gen matmul
        out_full = (jnp.dot(new_out, out_wd_ref[...], preferred_element_type=f32)
                    + jnp.dot(ctx, out_wc_ref[...], preferred_element_type=f32)
                    + out_b_ref[...])                                # (B, V+1)
        logits = out_full[:, :v_sz]
        lm = jnp.max(logits, axis=-1, keepdims=True)
        lw = jnp.exp(logits - lm)
        p_vocab = lw * pl.reciprocal(jnp.sum(lw, axis=-1, keepdims=True),
                                     approx=True)

        pg_logit = out_full[:, v_sz:] + gi_full[:, g6:]              # (B, 1)
        p_gen = jax.nn.sigmoid(pg_logit)

        # pointer (copy) distribution over source tokens
        pointer = jnp.sum(att * src_oh_ref[...], axis=0)             # (B, V)

        rows_ref[pos] = p_gen * p_vocab + (1.0 - p_gen) * pointer
        return new_h, new_out

    lax.fori_loop(1, max_len, dec_step,
                  (h_enc, jnp.zeros((b_sz, h2), f32)))               # dec_h, dec_out

    # single lane-dense store of all positions: (B, MAX_LEN*V), lane dim 256
    probs_ref[...] = jnp.concatenate(
        [rows_ref[p] for p in range(max_len)], axis=-1)


# ---------------------------------------------------------------------------
# Parameters (deterministic init; synthetic weights, no checkpoint loading)
# ---------------------------------------------------------------------------
def init_params(key):
    keys = jax.random.split(key, 40)
    it = iter(keys)

    def nrm(shape, scale=0.1):
        return (scale * jax.random.normal(next(it), shape)).astype(jnp.float32)

    emb = nrm((V, E)).at[PAD].set(0.0)   # padding_idx=0

    def gru_dir():
        # GRU input size = 2*H + E (as declared in the module); gate order r,z,n
        return dict(wih=nrm((E + 2 * H, 3 * H)), whh=nrm((H, 3 * H)),
                    bih=nrm((1, 3 * H)), bhh=nrm((1, 3 * H)))

    return dict(
        embedding=emb,
        gru1_f=gru_dir(), gru1_b=gru_dir(),     # gru1 (bidirectional)
        gru2_f=gru_dir(), gru2_b=gru_dir(),     # gru2 (bidirectional)
        att_wq=nrm((H, A)), att_wk=nrm((2 * H, A)), att_v=nrm((A, 1)),
        out_wd=nrm((2 * H, V)), out_wc=nrm((2 * H, V)), out_b=nrm((1, V)),
        pg_wd=nrm((2 * H, 1)), pg_wc=nrm((2 * H, 1)), pg_we=nrm((E, 1)),
        pg_b=nrm((1, 1)),
    )


# ---------------------------------------------------------------------------
# Top-level forward (training path: teacher forcing).
# ---------------------------------------------------------------------------
@functools.partial(jax.jit, static_argnames=('reverse',))
def eda_cs_forward(params, x, lengths, y, reverse=False):
    del lengths  # TODO(synk): length masking not applied (see header note)
    if reverse:
        enc_f, enc_b = params['gru2_f'], params['gru2_b']
        dec_f, dec_b = params['gru1_f'], params['gru1_b']
    else:
        enc_f, enc_b = params['gru1_f'], params['gru1_b']
        dec_f, dec_b = params['gru2_f'], params['gru2_b']

    f32 = jnp.float32
    b, t = x.shape
    max_len = y.shape[1]
    emb_tbl = params['embedding']

    # ---- hoisted JAX glue (runs once per forward; all tiny) -----------------
    src_emb_tbe = jnp.transpose(emb_tbl[x], (1, 0, 2))                      # (T,B,E)
    x_cat_seq = jnp.concatenate([src_emb_tbe, src_emb_tbe[::-1]], axis=-1)  # (T,B,2E)

    # Teacher-forced decoder inputs: token fed at step pos is SOS (pos=1),
    # else y[:, pos-1]; gather embeddings once.
    dec_tokens = jnp.concatenate(
        [jnp.full((b, 1), SOS, jnp.int32), y[:, 1:max_len - 1]], axis=1)    # (B,L-1)
    dec_emb_seq = jnp.transpose(emb_tbl[dec_tokens], (1, 0, 2))             # (L-1,B,E)

    # Pointer one-hot of source tokens (constant across decoder steps).
    src_oh = jax.nn.one_hot(x.T, V, dtype=f32)                              # (T,B,V)

    # ---- fused / augmented weights ------------------------------------------
    enc_wih = _fuse_gate_cols_blockdiag(enc_f['wih'][:E], enc_b['wih'][:E])  # (2E,6H)
    enc_whh = _fuse_gate_cols_blockdiag(enc_f['whh'], enc_b['whh'])          # (2H,6H)
    enc_bih = _fuse_gate_cols(enc_f['bih'], enc_b['bih'])                    # (1,6H)
    enc_bhh = _fuse_gate_cols(enc_f['bhh'], enc_b['bhh'])

    dec_wih = _fuse_gate_cols(dec_f['wih'], dec_b['wih'])                    # (E+2H,6H)
    dec_wie = jnp.concatenate([dec_wih[:E], params['pg_we']], axis=1)        # (E,6H+1)
    dec_wic = jnp.concatenate([dec_wih[E:], params['pg_wc']], axis=1)        # (2H,6H+1)
    dec_bih = jnp.concatenate(
        [_fuse_gate_cols(dec_f['bih'], dec_b['bih']), jnp.zeros((1, 1), f32)],
        axis=1)                                                              # (1,6H+1)
    dec_whh = _fuse_gate_cols_blockdiag(dec_f['whh'], dec_b['whh'])          # (2H,6H)
    dec_bhh = _fuse_gate_cols(dec_f['bhh'], dec_b['bhh'])

    out_wd = jnp.concatenate([params['out_wd'], params['pg_wd']], axis=1)    # (2H,V+1)
    out_wc = jnp.concatenate([params['out_wc'],
                              jnp.zeros((2 * H, 1), f32)], axis=1)           # (2H,V+1)
    out_b = jnp.concatenate([params['out_b'], params['pg_b']], axis=1)       # (1,V+1)
    att_v_row = params['att_v'].T                                            # (1,A)

    vmem = pl.BlockSpec(memory_space=pltpu.MemorySpace.VMEM)
    probs_flat = pl.pallas_call(
        eda_cs_kernel,
        out_shape=jax.ShapeDtypeStruct((b, max_len * V), f32),
        in_specs=[vmem] * 18,
        out_specs=vmem,
        scratch_shapes=[pltpu.VMEM((t, b, 2 * H), f32),       # annotations
                        pltpu.VMEM((t, b, A), f32),           # key projection
                        pltpu.VMEM((max_len, b, V), f32)],    # per-position rows
    )(x_cat_seq, dec_emb_seq, src_oh,
      enc_wih, enc_bih, enc_whh, enc_bhh,
      dec_wie, dec_wic, dec_bih, dec_whh, dec_bhh,
      params['att_wq'], params['att_wk'], att_v_row,
      out_wd, out_wc, out_b)

    return probs_flat.reshape(b, max_len, V)                  # (B, max_len, V)


if __name__ == "__main__":
    key = jax.random.PRNGKey(0)
    pkey, xkey, ykey = jax.random.split(key, 3)
    params = init_params(pkey)

    x = jax.random.randint(xkey, (B, T), 3, V, dtype=jnp.int32)      # source tokens
    lengths = jnp.full((B,), T, jnp.int32)
    y = jax.random.randint(ykey, (B, MAX_LEN), 3, V, dtype=jnp.int32)
    y = y.at[:, 0].set(SOS)                                          # targets start w/ SOS

    out = eda_cs_forward(params, x, lengths, y)
    out = jax.block_until_ready(out)
    assert out.shape == (B, MAX_LEN, V), out.shape
    assert bool(jnp.all(jnp.isfinite(out)))
    print("KERNEL_OK")
</pallas_src>

<mosaic_0001>
module attributes {stable_mosaic.version = 11 : i64} {
  func.func @eda_cs_kernel(%arg0: memref<8x2x32xf32, #tpu.memory_space<vmem>>, %arg1: memref<7x2x16xf32, #tpu.memory_space<vmem>>, %arg2: memref<8x2x32xf32, #tpu.memory_space<vmem>>, %arg3: memref<32x96xf32, #tpu.memory_space<vmem>>, %arg4: memref<1x96xf32, #tpu.memory_space<vmem>>, %arg5: memref<32x96xf32, #tpu.memory_space<vmem>>, %arg6: memref<1x96xf32, #tpu.memory_space<vmem>>, %arg7: memref<16x97xf32, #tpu.memory_space<vmem>>, %arg8: memref<32x97xf32, #tpu.memory_space<vmem>>, %arg9: memref<1x97xf32, #tpu.memory_space<vmem>>, %arg10: memref<32x96xf32, #tpu.memory_space<vmem>>, %arg11: memref<1x96xf32, #tpu.memory_space<vmem>>, %arg12: memref<16x16xf32, #tpu.memory_space<vmem>>, %arg13: memref<32x16xf32, #tpu.memory_space<vmem>>, %arg14: memref<1x16xf32, #tpu.memory_space<vmem>>, %arg15: memref<32x33xf32, #tpu.memory_space<vmem>>, %arg16: memref<32x33xf32, #tpu.memory_space<vmem>>, %arg17: memref<1x33xf32, #tpu.memory_space<vmem>>, %arg18: memref<2x256xf32, #tpu.memory_space<vmem>>, %arg19: memref<8x2x32xf32, #tpu.memory_space<vmem>>, %arg20: memref<8x2x16xf32, #tpu.memory_space<vmem>>, %arg21: memref<8x2x32xf32, #tpu.memory_space<vmem>>) attributes {dimension_semantics = [], scalar_prefetch = 0 : i64, scratch_operands = 3 : i64, tpu.core_type = #tpu.core_type<tc>} {
    %c0 = arith.constant 0 : index
    %c0_0 = arith.constant 0 : index
    %0 = vector.load %arg3[%c0, %c0_0] : memref<32x96xf32, #tpu.memory_space<vmem>>, vector<32x96xf32>
    %c0_1 = arith.constant 0 : index
    %c0_2 = arith.constant 0 : index
    %1 = vector.load %arg4[%c0_1, %c0_2] : memref<1x96xf32, #tpu.memory_space<vmem>>, vector<1x96xf32>
    %c0_3 = arith.constant 0 : index
    %c0_4 = arith.constant 0 : index
    %2 = vector.load %arg5[%c0_3, %c0_4] : memref<32x96xf32, #tpu.memory_space<vmem>>, vector<32x96xf32>
    %c0_5 = arith.constant 0 : index
    %c0_6 = arith.constant 0 : index
    %3 = vector.load %arg6[%c0_5, %c0_6] : memref<1x96xf32, #tpu.memory_space<vmem>>, vector<1x96xf32>
    %cst = arith.constant 0.000000e+00 : f32
    %4 = vector.broadcast %cst : f32 to vector<2x32xf32>
    %c0_7 = arith.constant 0 : index
    %c0_8 = arith.constant 0 : index
    %c0_9 = arith.constant 0 : index
    %5 = vector.load %arg0[%c0_7, %c0_8, %c0_9] : memref<8x2x32xf32, #tpu.memory_space<vmem>>, vector<1x2x32xf32>
    %6 = vector.shape_cast %5 : vector<1x2x32xf32> to vector<2x32xf32>
    %cst_10 = arith.constant dense<0.000000e+00> : vector<2x96xf32>
    %7 = tpu.matmul %6, %0, %cst_10 {dimension_numbers = #tpu.dot_dimension_numbers<[1], [0], [0], [1], [0, 0, 1, 1], [], []>} : vector<2x32xf32>, vector<32x96xf32>, vector<2x96xf32> -> vector<2x96xf32>
    %8 = vector.broadcast %1 : vector<1x96xf32> to vector<2x96xf32>
    %9 = arith.addf %7, %8 : vector<2x96xf32>
    %cst_11 = arith.constant dense<0.000000e+00> : vector<2x96xf32>
    %10 = tpu.matmul %4, %2, %cst_11 {dimension_numbers = #tpu.dot_dimension_numbers<[1], [0], [0], [1], [0, 0, 1, 1], [], []>} : vector<2x32xf32>, vector<32x96xf32>, vector<2x96xf32> -> vector<2x96xf32>
    %11 = vector.broadcast %3 : vector<1x96xf32> to vector<2x96xf32>
    %12 = arith.addf %10, %11 : vector<2x96xf32>
    %13 = vector.extract_strided_slice %9 {offsets = [0, 0], sizes = [2, 32], strides = [1, 1]} : vector<2x96xf32> to vector<2x32xf32>
    %14 = vector.extract_strided_slice %12 {offsets = [0, 0], sizes = [2, 32], strides = [1, 1]} : vector<2x96xf32> to vector<2x32xf32>
    %15 = arith.addf %13, %14 : vector<2x32xf32>
    %16 = arith.negf %15 : vector<2x32xf32>
    %17 = math.exp %16 : vector<2x32xf32>
    %cst_12 = arith.constant 1.000000e+00 : f32
    %18 = vector.broadcast %cst_12 : f32 to vector<2x32xf32>
    %19 = arith.addf %18, %17 : vector<2x32xf32>
    %20 = arith.divf %18, %19 : vector<2x32xf32>
    %21 = vector.extract_strided_slice %9 {offsets = [0, 32], sizes = [2, 32], strides = [1, 1]} : vector<2x96xf32> to vector<2x32xf32>
    %22 = vector.extract_strided_slice %12 {offsets = [0, 32], sizes = [2, 32], strides = [1, 1]} : vector<2x96xf32> to vector<2x32xf32>
    %23 = arith.addf %21, %22 : vector<2x32xf32>
    %24 = arith.negf %23 : vector<2x32xf32>
    %25 = math.exp %24 : vector<2x32xf32>
    %cst_13 = arith.constant 1.000000e+00 : f32
    %26 = vector.broadcast %cst_13 : f32 to vector<2x32xf32>
    %27 = arith.addf %26, %25 : vector<2x32xf32>
    %28 = arith.divf %26, %27 : vector<2x32xf32>
    %29 = vector.extract_strided_slice %9 {offsets = [0, 64], sizes = [2, 32], strides = [1, 1]} : vector<2x96xf32> to vector<2x32xf32>
    %30 = vector.extract_strided_slice %12 {offsets = [0, 64], sizes = [2, 32], strides = [1, 1]} : vector<2x96xf32> to vector<2x32xf32>
    %31 = arith.mulf %20, %30 : vector<2x32xf32>
    %32 = arith.addf %29, %31 : vector<2x32xf32>
    %33 = math.tanh %32 : vector<2x32xf32>
    %cst_14 = arith.constant 1.000000e+00 : f32
    %34 = vector.broadcast %cst_14 : f32 to vector<2x32xf32>
    %35 = arith.subf %34, %28 : vector<2x32xf32>
    %36 = arith.mulf %35, %33 : vector<2x32xf32>
    %37 = arith.mulf %28, %4 : vector<2x32xf32>
    %38 = arith.addf %36, %37 : vector<2x32xf32>
    %c1 = arith.constant 1 : index
    %c0_15 = arith.constant 0 : index
    %c0_16 = arith.constant 0 : index
    %39 = vector.load %arg0[%c1, %c0_15, %c0_16] : memref<8x2x32xf32, #tpu.memory_space<vmem>>, vector<1x2x32xf32>
    %40 = vector.shape_cast %39 : vector<1x2x32xf32> to vector<2x32xf32>
    %cst_17 = arith.constant dense<0.000000e+00> : vector<2x96xf32>
    %41 = tpu.matmul %40, %0, %cst_17 {dimension_numbers = #tpu.dot_dimension_numbers<[1], [0], [0], [1], [0, 0, 1, 1], [], []>} : vector<2x32xf32>, vector<32x96xf32>, vector<2x96xf32> -> vector<2x96xf32>
    %42 = vector.broadcast %1 : vector<1x96xf32> to vector<2x96xf32>
    %43 = arith.addf %41, %42 : vector<2x96xf32>
    %cst_18 = arith.constant dense<0.000000e+00> : vector<2x96xf32>
    %44 = tpu.matmul %38, %2, %cst_18 {dimension_numbers = #tpu.dot_dimension_numbers<[1], [0], [0], [1], [0, 0, 1, 1], [], []>} : vector<2x32xf32>, vector<32x96xf32>, vector<2x96xf32> -> vector<2x96xf32>
    %45 = vector.broadcast %3 : vector<1x96xf32> to vector<2x96xf32>
    %46 = arith.addf %44, %45 : vector<2x96xf32>
    %47 = vector.extract_strided_slice %43 {offsets = [0, 0], sizes = [2, 32], strides = [1, 1]} : vector<2x96xf32> to vector<2x32xf32>
    %48 = vector.extract_strided_slice %46 {offsets = [0, 0], sizes = [2, 32], strides = [1, 1]} : vector<2x96xf32> to vector<2x32xf32>
    %49 = arith.addf %47, %48 : vector<2x32xf32>
    %50 = arith.negf %49 : vector<2x32xf32>
    %51 = math.exp %50 : vector<2x32xf32>
    %cst_19 = arith.constant 1.000000e+00 : f32
    %52 = vector.broadcast %cst_19 : f32 to vector<2x32xf32>
    %53 = arith.addf %52, %51 : vector<2x32xf32>
    %54 = arith.divf %52, %53 : vector<2x32xf32>
    %55 = vector.extract_strided_slice %43 {offsets = [0, 32], sizes = [2, 32], strides = [1, 1]} : vector<2x96xf32> to vector<2x32xf32>
    %56 = vector.extract_strided_slice %46 {offsets = [0, 32], sizes = [2, 32], strides = [1, 1]} : vector<2x96xf32> to vector<2x32xf32>
    %57 = arith.addf %55, %56 : vector<2x32xf32>
    %58 = arith.negf %57 : vector<2x32xf32>
    %59 = math.exp %58 : vector<2x32xf32>
    %cst_20 = arith.constant 1.000000e+00 : f32
    %60 = vector.broadcast %cst_20 : f32 to vector<2x32xf32>
    %61 = arith.addf %60, %59 : vector<2x32xf32>
    %62 = arith.divf %60, %61 : vector<2x32xf32>
    %63 = vector.extract_strided_slice %43 {offsets = [0, 64], sizes = [2, 32], strides = [1, 1]} : vector<2x96xf32> to vector<2x32xf32>
    %64 = vector.extract_strided_slice %46 {offsets = [0, 64], sizes = [2, 32], strides = [1, 1]} : vector<2x96xf32> to vector<2x32xf32>
    %65 = arith.mulf %54, %64 : vector<2x32xf32>
    %66 = arith.addf %63, %65 : vector<2x32xf32>
    %67 = math.tanh %66 : vector<2x32xf32>
    %cst_21 = arith.constant 1.000000e+00 : f32
    %68 = vector.broadcast %cst_21 : f32 to vector<2x32xf32>
    %69 = arith.subf %68, %62 : vector<2x32xf32>
    %70 = arith.mulf %69, %67 : vector<2x32xf32>
    %71 = arith.mulf %62, %38 : vector<2x32xf32>
    %72 = arith.addf %70, %71 : vector<2x32xf32>
    %c2 = arith.constant 2 : index
    %c0_22 = arith.constant 0 : index
    %c0_23 = arith.constant 0 : index
    %73 = vector.load %arg0[%c2, %c0_22, %c0_23] : memref<8x2x32xf32, #tpu.memory_space<vmem>>, vector<1x2x32xf32>
    %74 = vector.shape_cast %73 : vector<1x2x32xf32> to vector<2x32xf32>
    %cst_24 = arith.constant dense<0.000000e+00> : vector<2x96xf32>
    %75 = tpu.matmul %74, %0, %cst_24 {dimension_numbers = #tpu.dot_dimension_numbers<[1], [0], [0], [1], [0, 0, 1, 1], [], []>} : vector<2x32xf32>, vector<32x96xf32>, vector<2x96xf32> -> vector<2x96xf32>
    %76 = vector.broadcast %1 : vector<1x96xf32> to vector<2x96xf32>
    %77 = arith.addf %75, %76 : vector<2x96xf32>
    %cst_25 = arith.constant dense<0.000000e+00> : vector<2x96xf32>
    %78 = tpu.matmul %72, %2, %cst_25 {dimension_numbers = #tpu.dot_dimension_numbers<[1], [0], [0], [1], [0, 0, 1, 1], [], []>} : vector<2x32xf32>, vector<32x96xf32>, vector<2x96xf32> -> vector<2x96xf32>
    %79 = vector.broadcast %3 : vector<1x96xf32> to vector<2x96xf32>
    %80 = arith.addf %78, %79 : vector<2x96xf32>
    %81 = vector.extract_strided_slice %77 {offsets = [0, 0], sizes = [2, 32], strides = [1, 1]} : vector<2x96xf32> to vector<2x32xf32>
    %82 = vector.extract_strided_slice %80 {offsets = [0, 0], sizes = [2, 32], strides = [1, 1]} : vector<2x96xf32> to vector<2x32xf32>
    %83 = arith.addf %81, %82 : vector<2x32xf32>
    %84 = arith.negf %83 : vector<2x32xf32>
    %85 = math.exp %84 : vector<2x32xf32>
    %cst_26 = arith.constant 1.000000e+00 : f32
    %86 = vector.broadcast %cst_26 : f32 to vector<2x32xf32>
    %87 = arith.addf %86, %85 : vector<2x32xf32>
    %88 = arith.divf %86, %87 : vector<2x32xf32>
    %89 = vector.extract_strided_slice %77 {offsets = [0, 32], sizes = [2, 32], strides = [1, 1]} : vector<2x96xf32> to vector<2x32xf32>
    %90 = vector.extract_strided_slice %80 {offsets = [0, 32], sizes = [2, 32], strides = [1, 1]} : vector<2x96xf32> to vector<2x32xf32>
    %91 = arith.addf %89, %90 : vector<2x32xf32>
    %92 = arith.negf %91 : vector<2x32xf32>
    %93 = math.exp %92 : vector<2x32xf32>
    %cst_27 = arith.constant 1.000000e+00 : f32
    %94 = vector.broadcast %cst_27 : f32 to vector<2x32xf32>
    %95 = arith.addf %94, %93 : vector<2x32xf32>
    %96 = arith.divf %94, %95 : vector<2x32xf32>
    %97 = vector.extract_strided_slice %77 {offsets = [0, 64], sizes = [2, 32], strides = [1, 1]} : vector<2x96xf32> to vector<2x32xf32>
    %98 = vector.extract_strided_slice %80 {offsets = [0, 64], sizes = [2, 32], strides = [1, 1]} : vector<2x96xf32> to vector<2x32xf32>
    %99 = arith.mulf %88, %98 : vector<2x32xf32>
    %100 = arith.addf %97, %99 : vector<2x32xf32>
    %101 = math.tanh %100 : vector<2x32xf32>
    %cst_28 = arith.constant 1.000000e+00 : f32
    %102 = vector.broadcast %cst_28 : f32 to vector<2x32xf32>
    %103 = arith.subf %102, %96 : vector<2x32xf32>
    %104 = arith.mulf %103, %101 : vector<2x32xf32>
    %105 = arith.mulf %96, %72 : vector<2x32xf32>
    %106 = arith.addf %104, %105 : vector<2x32xf32>
    %c3 = arith.constant 3 : index
    %c0_29 = arith.constant 0 : index
    %c0_30 = arith.constant 0 : index
    %107 = vector.load %arg0[%c3, %c0_29, %c0_30] : memref<8x2x32xf32, #tpu.memory_space<vmem>>, vector<1x2x32xf32>
    %108 = vector.shape_cast %107 : vector<1x2x32xf32> to vector<2x32xf32>
    %cst_31 = arith.constant dense<0.000000e+00> : vector<2x96xf32>
    %109 = tpu.matmul %108, %0, %cst_31 {dimension_numbers = #tpu.dot_dimension_numbers<[1], [0], [0], [1], [0, 0, 1, 1], [], []>} : vector<2x32xf32>, vector<32x96xf32>, vector<2x96xf32> -> vector<2x96xf32>
    %110 = vector.broadcast %1 : vector<1x96xf32> to vector<2x96xf32>
    %111 = arith.addf %109, %110 : vector<2x96xf32>
    %cst_32 = arith.constant dense<0.000000e+00> : vector<2x96xf32>
    %112 = tpu.matmul %106, %2, %cst_32 {dimension_numbers = #tpu.dot_dimension_numbers<[1], [0], [0], [1], [0, 0, 1, 1], [], []>} : vector<2x32xf32>, vector<32x96xf32>, vector<2x96xf32> -> vector<2x96xf32>
    %113 = vector.broadcast %3 : vector<1x96xf32> to vector<2x96xf32>
    %114 = arith.addf %112, %113 : vector<2x96xf32>
    %115 = vector.extract_strided_slice %111 {offsets = [0, 0], sizes = [2, 32], strides = [1, 1]} : vector<2x96xf32> to vector<2x32xf32>
    %116 = vector.extract_strided_slice %114 {offsets = [0, 0], sizes = [2, 32], strides = [1, 1]} : vector<2x96xf32> to vector<2x32xf32>
    %117 = arith.addf %115, %116 : vector<2x32xf32>
    %118 = arith.negf %117 : vector<2x32xf32>
    %119 = math.exp %118 : vector<2x32xf32>
    %cst_33 = arith.constant 1.000000e+00 : f32
    %120 = vector.broadcast %cst_33 : f32 to vector<2x32xf32>
    %121 = arith.addf %120, %119 : vector<2x32xf32>
    %122 = arith.divf %120, %121 : vector<2x32xf32>
    %123 = vector.extract_strided_slice %111 {offsets = [0, 32], sizes = [2, 32], strides = [1, 1]} : vector<2x96xf32> to vector<2x32xf32>
    %124 = vector.extract_strided_slice %114 {offsets = [0, 32], sizes = [2, 32], strides = [1, 1]} : vector<2x96xf32> to vector<2x32xf32>
    %125 = arith.addf %123, %124 : vector<2x32xf32>
    %126 = arith.negf %125 : vector<2x32xf32>
    %127 = math.exp %126 : vector<2x32xf32>
    %cst_34 = arith.constant 1.000000e+00 : f32
    %128 = vector.broadcast %cst_34 : f32 to vector<2x32xf32>
    %129 = arith.addf %128, %127 : vector<2x32xf32>
    %130 = arith.divf %128, %129 : vector<2x32xf32>
    %131 = vector.extract_strided_slice %111 {offsets = [0, 64], sizes = [2, 32], strides = [1, 1]} : vector<2x96xf32> to vector<2x32xf32>
    %132 = vector.extract_strided_slice %114 {offsets = [0, 64], sizes = [2, 32], strides = [1, 1]} : vector<2x96xf32> to vector<2x32xf32>
    %133 = arith.mulf %122, %132 : vector<2x32xf32>
    %134 = arith.addf %131, %133 : vector<2x32xf32>
    %135 = math.tanh %134 : vector<2x32xf32>
    %cst_35 = arith.constant 1.000000e+00 : f32
    %136 = vector.broadcast %cst_35 : f32 to vector<2x32xf32>
    %137 = arith.subf %136, %130 : vector<2x32xf32>
    %138 = arith.mulf %137, %135 : vector<2x32xf32>
    %139 = arith.mulf %130, %106 : vector<2x32xf32>
    %140 = arith.addf %138, %139 : vector<2x32xf32>
    %c4 = arith.constant 4 : index
    %c0_36 = arith.constant 0 : index
    %c0_37 = arith.constant 0 : index
    %141 = vector.load %arg0[%c4, %c0_36, %c0_37] : memref<8x2x32xf32, #tpu.memory_space<vmem>>, vector<1x2x32xf32>
    %142 = vector.shape_cast %141 : vector<1x2x32xf32> to vector<2x32xf32>
    %cst_38 = arith.constant dense<0.000000e+00> : vector<2x96xf32>
    %143 = tpu.matmul %142, %0, %cst_38 {dimension_numbers = #tpu.dot_dimension_numbers<[1], [0], [0], [1], [0, 0, 1, 1], [], []>} : vector<2x32xf32>, vector<32x96xf32>, vector<2x96xf32> -> vector<2x96xf32>
    %144 = vector.broadcast %1 : vector<1x96xf32> to vector<2x96xf32>
    %145 = arith.addf %143, %144 : vector<2x96xf32>
    %cst_39 = arith.constant dense<0.000000e+00> : vector<2x96xf32>
    %146 = tpu.matmul %140, %2, %cst_39 {dimension_numbers = #tpu.dot_dimension_numbers<[1], [0], [0], [1], [0, 0, 1, 1], [], []>} : vector<2x32xf32>, vector<32x96xf32>, vector<2x96xf32> -> vector<2x96xf32>
    %147 = vector.broadcast %3 : vector<1x96xf32> to vector<2x96xf32>
    %148 = arith.addf %146, %147 : vector<2x96xf32>
    %149 = vector.extract_strided_slice %145 {offsets = [0, 0], sizes = [2, 32], strides = [1, 1]} : vector<2x96xf32> to vector<2x32xf32>
    %150 = vector.extract_strided_slice %148 {offsets = [0, 0], sizes = [2, 32], strides = [1, 1]} : vector<2x96xf32> to vector<2x32xf32>
    %151 = arith.addf %149, %150 : vector<2x32xf32>
    %152 = arith.negf %151 : vector<2x32xf32>
    %153 = math.exp %152 : vector<2x32xf32>
    %cst_40 = arith.constant 1.000000e+00 : f32
    %154 = vector.broadcast %cst_40 : f32 to vector<2x32xf32>
    %155 = arith.addf %154, %153 : vector<2x32xf32>
    %156 = arith.divf %154, %155 : vector<2x32xf32>
    %157 = vector.extract_strided_slice %145 {offsets = [0, 32], sizes = [2, 32], strides = [1, 1]} : vector<2x96xf32> to vector<2x32xf32>
    %158 = vector.extract_strided_slice %148 {offsets = [0, 32], sizes = [2, 32], strides = [1, 1]} : vector<2x96xf32> to vector<2x32xf32>
    %159 = arith.addf %157, %158 : vector<2x32xf32>
    %160 = arith.negf %159 : vector<2x32xf32>
    %161 = math.exp %160 : vector<2x32xf32>
    %cst_41 = arith.constant 1.000000e+00 : f32
    %162 = vector.broadcast %cst_41 : f32 to vector<2x32xf32>
    %163 = arith.addf %162, %161 : vector<2x32xf32>
    %164 = arith.divf %162, %163 : vector<2x32xf32>
    %165 = vector.extract_strided_slice %145 {offsets = [0, 64], sizes = [2, 32], strides = [1, 1]} : vector<2x96xf32> to vector<2x32xf32>
    %166 = vector.extract_strided_slice %148 {offsets = [0, 64], sizes = [2, 32], strides = [1, 1]} : vector<2x96xf32> to vector<2x32xf32>
    %167 = arith.mulf %156, %166 : vector<2x32xf32>
    %168 = arith.addf %165, %167 : vector<2x32xf32>
    %169 = math.tanh %168 : vector<2x32xf32>
    %cst_42 = arith.constant 1.000000e+00 : f32
    %170 = vector.broadcast %cst_42 : f32 to vector<2x32xf32>
    %171 = arith.subf %170, %164 : vector<2x32xf32>
    %172 = arith.mulf %171, %169 : vector<2x32xf32>
    %173 = arith.mulf %164, %140 : vector<2x32xf32>
    %174 = arith.addf %172, %173 : vector<2x32xf32>
    %c5 = arith.constant 5 : index
    %c0_43 = arith.constant 0 : index
    %c0_44 = arith.constant 0 : index
    %175 = vector.load %arg0[%c5, %c0_43, %c0_44] : memref<8x2x32xf32, #tpu.memory_space<vmem>>, vector<1x2x32xf32>
    %176 = vector.shape_cast %175 : vector<1x2x32xf32> to vector<2x32xf32>
    %cst_45 = arith.constant dense<0.000000e+00> : vector<2x96xf32>
    %177 = tpu.matmul %176, %0, %cst_45 {dimension_numbers = #tpu.dot_dimension_numbers<[1], [0], [0], [1], [0, 0, 1, 1], [], []>} : vector<2x32xf32>, vector<32x96xf32>, vector<2x96xf32> -> vector<2x96xf32>
    %178 = vector.broadcast %1 : vector<1x96xf32> to vector<2x96xf32>
    %179 = arith.addf %177, %178 : vector<2x96xf32>
    %cst_46 = arith.constant dense<0.000000e+00> : vector<2x96xf32>
    %180 = tpu.matmul %174, %2, %cst_46 {dimension_numbers = #tpu.dot_dimension_numbers<[1], [0], [0], [1], [0, 0, 1, 1], [], []>} : vector<2x32xf32>, vector<32x96xf32>, vector<2x96xf32> -> vector<2x96xf32>
    %181 = vector.broadcast %3 : vector<1x96xf32> to vector<2x96xf32>
    %182 = arith.addf %180, %181 : vector<2x96xf32>
    %183 = vector.extract_strided_slice %179 {offsets = [0, 0], sizes = [2, 32], strides = [1, 1]} : vector<2x96xf32> to vector<2x32xf32>
    %184 = vector.extract_strided_slice %182 {offsets = [0, 0], sizes = [2, 32], strides = [1, 1]} : vector<2x96xf32> to vector<2x32xf32>
    %185 = arith.addf %183, %184 : vector<2x32xf32>
    %186 = arith.negf %185 : vector<2x32xf32>
    %187 = math.exp %186 : vector<2x32xf32>
    %cst_47 = arith.constant 1.000000e+00 : f32
    %188 = vector.broadcast %cst_47 : f32 to vector<2x32xf32>
    %189 = arith.addf %188, %187 : vector<2x32xf32>
    %190 = arith.divf %188, %189 : vector<2x32xf32>
    %191 = vector.extract_strided_slice %179 {offsets = [0, 32], sizes = [2, 32], strides = [1, 1]} : vector<2x96xf32> to vector<2x32xf32>
    %192 = vector.extract_strided_slice %182 {offsets = [0, 32], sizes = [2, 32], strides = [1, 1]} : vector<2x96xf32> to vector<2x32xf32>
    %193 = arith.addf %191, %192 : vector<2x32xf32>
    %194 = arith.negf %193 : vector<2x32xf32>
    %195 = math.exp %194 : vector<2x32xf32>
    %cst_48 = arith.constant 1.000000e+00 : f32
    %196 = vector.broadcast %cst_48 : f32 to vector<2x32xf32>
    %197 = arith.addf %196, %195 : vector<2x32xf32>
    %198 = arith.divf %196, %197 : vector<2x32xf32>
    %199 = vector.extract_strided_slice %179 {offsets = [0, 64], sizes = [2, 32], strides = [1, 1]} : vector<2x96xf32> to vector<2x32xf32>
    %200 = vector.extract_strided_slice %182 {offsets = [0, 64], sizes = [2, 32], strides = [1, 1]} : vector<2x96xf32> to vector<2x32xf32>
    %201 = arith.mulf %190, %200 : vector<2x32xf32>
    %202 = arith.addf %199, %201 : vector<2x32xf32>
    %203 = math.tanh %202 : vector<2x32xf32>
    %cst_49 = arith.constant 1.000000e+00 : f32
    %204 = vector.broadcast %cst_49 : f32 to vector<2x32xf32>
    %205 = arith.subf %204, %198 : vector<2x32xf32>
    %206 = arith.mulf %205, %203 : vector<2x32xf32>
    %207 = arith.mulf %198, %174 : vector<2x32xf32>
    %208 = arith.addf %206, %207 : vector<2x32xf32>
    %c6 = arith.constant 6 : index
    %c0_50 = arith.constant 0 : index
    %c0_51 = arith.constant 0 : index
    %209 = vector.load %arg0[%c6, %c0_50, %c0_51] : memref<8x2x32xf32, #tpu.memory_space<vmem>>, vector<1x2x32xf32>
    %210 = vector.shape_cast %209 : vector<1x2x32xf32> to vector<2x32xf32>
    %cst_52 = arith.constant dense<0.000000e+00> : vector<2x96xf32>
    %211 = tpu.matmul %210, %0, %cst_52 {dimension_numbers = #tpu.dot_dimension_numbers<[1], [0], [0], [1], [0, 0, 1, 1], [], []>} : vector<2x32xf32>, vector<32x96xf32>, vector<2x96xf32> -> vector<2x96xf32>
    %212 = vector.broadcast %1 : vector<1x96xf32> to vector<2x96xf32>
    %213 = arith.addf %211, %212 : vector<2x96xf32>
    %cst_53 = arith.constant dense<0.000000e+00> : vector<2x96xf32>
    %214 = tpu.matmul %208, %2, %cst_53 {dimension_numbers = #tpu.dot_dimension_numbers<[1], [0], [0], [1], [0, 0, 1, 1], [], []>} : vector<2x32xf32>, vector<32x96xf32>, vector<2x96xf32> -> vector<2x96xf32>
    %215 = vector.broadcast %3 : vector<1x96xf32> to vector<2x96xf32>
    %216 = arith.addf %214, %215 : vector<2x96xf32>
    %217 = vector.extract_strided_slice %213 {offsets = [0, 0], sizes = [2, 32], strides = [1, 1]} : vector<2x96xf32> to vector<2x32xf32>
    %218 = vector.extract_strided_slice %216 {offsets = [0, 0], sizes = [2, 32], strides = [1, 1]} : vector<2x96xf32> to vector<2x32xf32>
    %219 = arith.addf %217, %218 : vector<2x32xf32>
    %220 = arith.negf %219 : vector<2x32xf32>
    %221 = math.exp %220 : vector<2x32xf32>
    %cst_54 = arith.constant 1.000000e+00 : f32
    %222 = vector.broadcast %cst_54 : f32 to vector<2x32xf32>
    %223 = arith.addf %222, %221 : vector<2x32xf32>
    %224 = arith.divf %222, %223 : vector<2x32xf32>
    %225 = vector.extract_strided_slice %213 {offsets = [0, 32], sizes = [2, 32], strides = [1, 1]} : vector<2x96xf32> to vector<2x32xf32>
    %226 = vector.extract_strided_slice %216 {offsets = [0, 32], sizes = [2, 32], strides = [1, 1]} : vector<2x96xf32> to vector<2x32xf32>
    %227 = arith.addf %225, %226 : vector<2x32xf32>
    %228 = arith.negf %227 : vector<2x32xf32>
    %229 = math.exp %228 : vector<2x32xf32>
    %cst_55 = arith.constant 1.000000e+00 : f32
    %230 = vector.broadcast %cst_55 : f32 to vector<2x32xf32>
    %231 = arith.addf %230, %229 : vector<2x32xf32>
    %232 = arith.divf %230, %231 : vector<2x32xf32>
    %233 = vector.extract_strided_slice %213 {offsets = [0, 64], sizes = [2, 32], strides = [1, 1]} : vector<2x96xf32> to vector<2x32xf32>
    %234 = vector.extract_strided_slice %216 {offsets = [0, 64], sizes = [2, 32], strides = [1, 1]} : vector<2x96xf32> to vector<2x32xf32>
    %235 = arith.mulf %224, %234 : vector<2x32xf32>
    %236 = arith.addf %233, %235 : vector<2x32xf32>
    %237 = math.tanh %236 : vector<2x32xf32>
    %cst_56 = arith.constant 1.000000e+00 : f32
    %238 = vector.broadcast %cst_56 : f32 to vector<2x32xf32>
    %239 = arith.subf %238, %232 : vector<2x32xf32>
    %240 = arith.mulf %239, %237 : vector<2x32xf32>
    %241 = arith.mulf %232, %208 : vector<2x32xf32>
    %242 = arith.addf %240, %241 : vector<2x32xf32>
    %c7 = arith.constant 7 : index
    %c0_57 = arith.constant 0 : index
    %c0_58 = arith.constant 0 : index
    %243 = vector.load %arg0[%c7, %c0_57, %c0_58] : memref<8x2x32xf32, #tpu.memory_space<vmem>>, vector<1x2x32xf32>
    %244 = vector.shape_cast %243 : vector<1x2x32xf32> to vector<2x32xf32>
    %cst_59 = arith.constant dense<0.000000e+00> : vector<2x96xf32>
    %245 = tpu.matmul %244, %0, %cst_59 {dimension_numbers = #tpu.dot_dimension_numbers<[1], [0], [0], [1], [0, 0, 1, 1], [], []>} : vector<2x32xf32>, vector<32x96xf32>, vector<2x96xf32> -> vector<2x96xf32>
    %246 = vector.broadcast %1 : vector<1x96xf32> to vector<2x96xf32>
    %247 = arith.addf %245, %246 : vector<2x96xf32>
    %cst_60 = arith.constant dense<0.000000e+00> : vector<2x96xf32>
    %248 = tpu.matmul %242, %2, %cst_60 {dimension_numbers = #tpu.dot_dimension_numbers<[1], [0], [0], [1], [0, 0, 1, 1], [], []>} : vector<2x32xf32>, vector<32x96xf32>, vector<2x96xf32> -> vector<2x96xf32>
    %249 = vector.broadcast %3 : vector<1x96xf32> to vector<2x96xf32>
    %250 = arith.addf %248, %249 : vector<2x96xf32>
    %251 = vector.extract_strided_slice %247 {offsets = [0, 0], sizes = [2, 32], strides = [1, 1]} : vector<2x96xf32> to vector<2x32xf32>
    %252 = vector.extract_strided_slice %250 {offsets = [0, 0], sizes = [2, 32], strides = [1, 1]} : vector<2x96xf32> to vector<2x32xf32>
    %253 = arith.addf %251, %252 : vector<2x32xf32>
    %254 = arith.negf %253 : vector<2x32xf32>
    %255 = math.exp %254 : vector<2x32xf32>
    %cst_61 = arith.constant 1.000000e+00 : f32
    %256 = vector.broadcast %cst_61 : f32 to vector<2x32xf32>
    %257 = arith.addf %256, %255 : vector<2x32xf32>
    %258 = arith.divf %256, %257 : vector<2x32xf32>
    %259 = vector.extract_strided_slice %247 {offsets = [0, 32], sizes = [2, 32], strides = [1, 1]} : vector<2x96xf32> to vector<2x32xf32>
    %260 = vector.extract_strided_slice %250 {offsets = [0, 32], sizes = [2, 32], strides = [1, 1]} : vector<2x96xf32> to vector<2x32xf32>
    %261 = arith.addf %259, %260 : vector<2x32xf32>
    %262 = arith.negf %261 : vector<2x32xf32>
    %263 = math.exp %262 : vector<2x32xf32>
    %cst_62 = arith.constant 1.000000e+00 : f32
    %264 = vector.broadcast %cst_62 : f32 to vector<2x32xf32>
    %265 = arith.addf %264, %263 : vector<2x32xf32>
    %266 = arith.divf %264, %265 : vector<2x32xf32>
    %267 = vector.extract_strided_slice %247 {offsets = [0, 64], sizes = [2, 32], strides = [1, 1]} : vector<2x96xf32> to vector<2x32xf32>
    %268 = vector.extract_strided_slice %250 {offsets = [0, 64], sizes = [2, 32], strides = [1, 1]} : vector<2x96xf32> to vector<2x32xf32>
    %269 = arith.mulf %258, %268 : vector<2x32xf32>
    %270 = arith.addf %267, %269 : vector<2x32xf32>
    %271 = math.tanh %270 : vector<2x32xf32>
    %cst_63 = arith.constant 1.000000e+00 : f32
    %272 = vector.broadcast %cst_63 : f32 to vector<2x32xf32>
    %273 = arith.subf %272, %266 : vector<2x32xf32>
    %274 = arith.mulf %273, %271 : vector<2x32xf32>
    %275 = arith.mulf %266, %242 : vector<2x32xf32>
    %276 = arith.addf %274, %275 : vector<2x32xf32>
    %c0_64 = arith.constant 0 : index
    %c0_65 = arith.constant 0 : index
    %277 = vector.load %arg13[%c0_64, %c0_65] : memref<32x16xf32, #tpu.memory_space<vmem>>, vector<32x16xf32>
    %278 = vector.extract_strided_slice %38 {offsets = [0, 0], sizes = [2, 16], strides = [1, 1]} : vector<2x32xf32> to vector<2x16xf32>
    %279 = vector.extract_strided_slice %276 {offsets = [0, 16], sizes = [2, 16], strides = [1, 1]} : vector<2x32xf32> to vector<2x16xf32>
    %280 = tpu.concatenate %278, %279 in 1 : vector<2x16xf32>, vector<2x16xf32> -> vector<2x32xf32>
    %c0_66 = arith.constant 0 : index
    %c0_67 = arith.constant 0 : index
    %c0_68 = arith.constant 0 : index
    %281 = vector.load %arg19[%c0_66, %c0_67, %c0_68] : memref<8x2x32xf32, #tpu.memory_space<vmem>>, vector<1x2x32xf32>
    %282 = vector.shape_cast %281 : vector<1x2x32xf32> to vector<2x32xf32>
    %283 = vector.shape_cast %280 : vector<2x32xf32> to vector<1x2x32xf32>
    tpu.vector_store %arg19[%c0_66, %c0_67, %c0_68], %283 {strides = array<i32>} : memref<8x2x32xf32, #tpu.memory_space<vmem>>, vector<1x2x32xf32>,
    %cst_69 = arith.constant dense<0.000000e+00> : vector<2x16xf32>
    %284 = tpu.matmul %280, %277, %cst_69 {dimension_numbers = #tpu.dot_dimension_numbers<[1], [0], [0], [1], [0, 0, 1, 1], [], []>} : vector<2x32xf32>, vector<32x16xf32>, vector<2x16xf32> -> vector<2x16xf32>
    %c0_70 = arith.constant 0 : index
    %c0_71 = arith.constant 0 : index
    %c0_72 = arith.constant 0 : index
    %285 = vector.load %arg20[%c0_70, %c0_71, %c0_72] : memref<8x2x16xf32, #tpu.memory_space<vmem>>, vector<1x2x16xf32>
    %286 = vector.shape_cast %285 : vector<1x2x16xf32> to vector<2x16xf32>
    %287 = vector.shape_cast %284 : vector<2x16xf32> to vector<1x2x16xf32>
    tpu.vector_store %arg20[%c0_70, %c0_71, %c0_72], %287 {strides = array<i32>} : memref<8x2x16xf32, #tpu.memory_space<vmem>>, vector<1x2x16xf32>,
    %288 = vector.extract_strided_slice %72 {offsets = [0, 0], sizes = [2, 16], strides = [1, 1]} : vector<2x32xf32> to vector<2x16xf32>
    %289 = vector.extract_strided_slice %242 {offsets = [0, 16], sizes = [2, 16], strides = [1, 1]} : vector<2x32xf32> to vector<2x16xf32>
    %290 = tpu.concatenate %288, %289 in 1 : vector<2x16xf32>, vector<2x16xf32> -> vector<2x32xf32>
    %c1_73 = arith.constant 1 : index
    %c0_74 = arith.constant 0 : index
    %c0_75 = arith.constant 0 : index
    %291 = vector.load %arg19[%c1_73, %c0_74, %c0_75] : memref<8x2x32xf32, #tpu.memory_space<vmem>>, vector<1x2x32xf32>
    %292 = vector.shape_cast %291 : vector<1x2x32xf32> to vector<2x32xf32>
    %293 = vector.shape_cast %290 : vector<2x32xf32> to vector<1x2x32xf32>
    tpu.vector_store %arg19[%c1_73, %c0_74, %c0_75], %293 {strides = array<i32>} : memref<8x2x32xf32, #tpu.memory_space<vmem>>, vector<1x2x32xf32>,
    %cst_76 = arith.constant dense<0.000000e+00> : vector<2x16xf32>
    %294 = tpu.matmul %290, %277, %cst_76 {dimension_numbers = #tpu.dot_dimension_numbers<[1], [0], [0], [1], [0, 0, 1, 1], [], []>} : vector<2x32xf32>, vector<32x16xf32>, vector<2x16xf32> -> vector<2x16xf32>
    %c1_77 = arith.constant 1 : index
    %c0_78 = arith.constant 0 : index
    %c0_79 = arith.constant 0 : index
    %295 = vector.load %arg20[%c1_77, %c0_78, %c0_79] : memref<8x2x16xf32, #tpu.memory_space<vmem>>, vector<1x2x16xf32>
    %296 = vector.shape_cast %295 : vector<1x2x16xf32> to vector<2x16xf32>
    %297 = vector.shape_cast %294 : vector<2x16xf32> to vector<1x2x16xf32>
    tpu.vector_store %arg20[%c1_77, %c0_78, %c0_79], %297 {strides = array<i32>} : memref<8x2x16xf32, #tpu.memory_space<vmem>>, vector<1x2x16xf32>,
    %298 = vector.extract_strided_slice %106 {offsets = [0, 0], sizes = [2, 16], strides = [1, 1]} : vector<2x32xf32> to vector<2x16xf32>
    %299 = vector.extract_strided_slice %208 {offsets = [0, 16], sizes = [2, 16], strides = [1, 1]} : vector<2x32xf32> to vector<2x16xf32>
    %300 = tpu.concatenate %298, %299 in 1 : vector<2x16xf32>, vector<2x16xf32> -> vector<2x32xf32>
    %c2_80 = arith.constant 2 : index
    %c0_81 = arith.constant 0 : index
    %c0_82 = arith.constant 0 : index
    %301 = vector.load %arg19[%c2_80, %c0_81, %c0_82] : memref<8x2x32xf32, #tpu.memory_space<vmem>>, vector<1x2x32xf32>
    %302 = vector.shape_cast %301 : vector<1x2x32xf32> to vector<2x32xf32>
    %303 = vector.shape_cast %300 : vector<2x32xf32> to vector<1x2x32xf32>
    tpu.vector_store %arg19[%c2_80, %c0_81, %c0_82], %303 {strides = array<i32>} : memref<8x2x32xf32, #tpu.memory_space<vmem>>, vector<1x2x32xf32>,
    %cst_83 = arith.constant dense<0.000000e+00> : vector<2x16xf32>
    %304 = tpu.matmul %300, %277, %cst_83 {dimension_numbers = #tpu.dot_dimension_numbers<[1], [0], [0], [1], [0, 0, 1, 1], [], []>} : vector<2x32xf32>, vector<32x16xf32>, vector<2x16xf32> -> vector<2x16xf32>
    %c2_84 = arith.constant 2 : index
    %c0_85 = arith.constant 0 : index
    %c0_86 = arith.constant 0 : index
    %305 = vector.load %arg20[%c2_84, %c0_85, %c0_86] : memref<8x2x16xf32, #tpu.memory_space<vmem>>, vector<1x2x16xf32>
    %306 = vector.shape_cast %305 : vector<1x2x16xf32> to vector<2x16xf32>
    %307 = vector.shape_cast %304 : vector<2x16xf32> to vector<1x2x16xf32>
    tpu.vector_store %arg20[%c2_84, %c0_85, %c0_86], %307 {strides = array<i32>} : memref<8x2x16xf32, #tpu.memory_space<vmem>>, vector<1x2x16xf32>,
    %308 = vector.extract_strided_slice %140 {offsets = [0, 0], sizes = [2, 16], strides = [1, 1]} : vector<2x32xf32> to vector<2x16xf32>
    %309 = vector.extract_strided_slice %174 {offsets = [0, 16], sizes = [2, 16], strides = [1, 1]} : vector<2x32xf32> to vector<2x16xf32>
    %310 = tpu.concatenate %308, %309 in 1 : vector<2x16xf32>, vector<2x16xf32> -> vector<2x32xf32>
    %c3_87 = arith.constant 3 : index
    %c0_88 = arith.constant 0 : index
    %c0_89 = arith.constant 0 : index
    %311 = vector.load %arg19[%c3_87, %c0_88, %c0_89] : memref<8x2x32xf32, #tpu.memory_space<vmem>>, vector<1x2x32xf32>
    %312 = vector.shape_cast %311 : vector<1x2x32xf32> to vector<2x32xf32>
    %313 = vector.shape_cast %310 : vector<2x32xf32> to vector<1x2x32xf32>
    tpu.vector_store %arg19[%c3_87, %c0_88, %c0_89], %313 {strides = array<i32>} : memref<8x2x32xf32, #tpu.memory_space<vmem>>, vector<1x2x32xf32>,
    %cst_90 = arith.constant dense<0.000000e+00> : vector<2x16xf32>
    %314 = tpu.matmul %310, %277, %cst_90 {dimension_numbers = #tpu.dot_dimension_numbers<[1], [0], [0], [1], [0, 0, 1, 1], [], []>} : vector<2x32xf32>, vector<32x16xf32>, vector<2x16xf32> -> vector<2x16xf32>
    %c3_91 = arith.constant 3 : index
    %c0_92 = arith.constant 0 : index
    %c0_93 = arith.constant 0 : index
    %315 = vector.load %arg20[%c3_91, %c0_92, %c0_93] : memref<8x2x16xf32, #tpu.memory_space<vmem>>, vector<1x2x16xf32>
    %316 = vector.shape_cast %315 : vector<1x2x16xf32> to vector<2x16xf32>
    %317 = vector.shape_cast %314 : vector<2x16xf32> to vector<1x2x16xf32>
    tpu.vector_store %arg20[%c3_91, %c0_92, %c0_93], %317 {strides = array<i32>} : memref<8x2x16xf32, #tpu.memory_space<vmem>>, vector<1x2x16xf32>,
    %318 = vector.extract_strided_slice %174 {offsets = [0, 0], sizes = [2, 16], strides = [1, 1]} : vector<2x32xf32> to vector<2x16xf32>
    %319 = vector.extract_strided_slice %140 {offsets = [0, 16], sizes = [2, 16], strides = [1, 1]} : vector<2x32xf32> to vector<2x16xf32>
    %320 = tpu.concatenate %318, %319 in 1 : vector<2x16xf32>, vector<2x16xf32> -> vector<2x32xf32>
    %c4_94 = arith.constant 4 : index
    %c0_95 = arith.constant 0 : index
    %c0_96 = arith.constant 0 : index
    %321 = vector.load %arg19[%c4_94, %c0_95, %c0_96] : memref<8x2x32xf32, #tpu.memory_space<vmem>>, vector<1x2x32xf32>
    %322 = vector.shape_cast %321 : vector<1x2x32xf32> to vector<2x32xf32>
    %323 = vector.shape_cast %320 : vector<2x32xf32> to vector<1x2x32xf32>
    tpu.vector_store %arg19[%c4_94, %c0_95, %c0_96], %323 {strides = array<i32>} : memref<8x2x32xf32, #tpu.memory_space<vmem>>, vector<1x2x32xf32>,
    %cst_97 = arith.constant dense<0.000000e+00> : vector<2x16xf32>
    %324 = tpu.matmul %320, %277, %cst_97 {dimension_numbers = #tpu.dot_dimension_numbers<[1], [0], [0], [1], [0, 0, 1, 1], [], []>} : vector<2x32xf32>, vector<32x16xf32>, vector<2x16xf32> -> vector<2x16xf32>
    %c4_98 = arith.constant 4 : index
    %c0_99 = arith.constant 0 : index
    %c0_100 = arith.constant 0 : index
    %325 = vector.load %arg20[%c4_98, %c0_99, %c0_100] : memref<8x2x16xf32, #tpu.memory_space<vmem>>, vector<1x2x16xf32>
    %326 = vector.shape_cast %325 : vector<1x2x16xf32> to vector<2x16xf32>
    %327 = vector.shape_cast %324 : vector<2x16xf32> to vector<1x2x16xf32>
    tpu.vector_store %arg20[%c4_98, %c0_99, %c0_100], %327 {strides = array<i32>} : memref<8x2x16xf32, #tpu.memory_space<vmem>>, vector<1x2x16xf32>,
    %328 = vector.extract_strided_slice %208 {offsets = [0, 0], sizes = [2, 16], strides = [1, 1]} : vector<2x32xf32> to vector<2x16xf32>
    %329 = vector.extract_strided_slice %106 {offsets = [0, 16], sizes = [2, 16], strides = [1, 1]} : vector<2x32xf32> to vector<2x16xf32>
    %330 = tpu.concatenate %328, %329 in 1 : vector<2x16xf32>, vector<2x16xf32> -> vector<2x32xf32>
    %c5_101 = arith.constant 5 : index
    %c0_102 = arith.constant 0 : index
    %c0_103 = arith.constant 0 : index
    %331 = vector.load %arg19[%c5_101, %c0_102, %c0_103] : memref<8x2x32xf32, #tpu.memory_space<vmem>>, vector<1x2x32xf32>
    %332 = vector.shape_cast %331 : vector<1x2x32xf32> to vector<2x32xf32>
    %333 = vector.shape_cast %330 : vector<2x32xf32> to vector<1x2x32xf32>
    tpu.vector_store %arg19[%c5_101, %c0_102, %c0_103], %333 {strides = array<i32>} : memref<8x2x32xf32, #tpu.memory_space<vmem>>, vector<1x2x32xf32>,
    %cst_104 = arith.constant dense<0.000000e+00> : vector<2x16xf32>
    %334 = tpu.matmul %330, %277, %cst_104 {dimension_numbers = #tpu.dot_dimension_numbers<[1], [0], [0], [1], [0, 0, 1, 1], [], []>} : vector<2x32xf32>, vector<32x16xf32>, vector<2x16xf32> -> vector<2x16xf32>
    %c5_105 = arith.constant 5 : index
    %c0_106 = arith.constant 0 : index
    %c0_107 = arith.constant 0 : index
    %335 = vector.load %arg20[%c5_105, %c0_106, %c0_107] : memref<8x2x16xf32, #tpu.memory_space<vmem>>, vector<1x2x16xf32>
    %336 = vector.shape_cast %335 : vector<1x2x16xf32> to vector<2x16xf32>
    %337 = vector.shape_cast %334 : vector<2x16xf32> to vector<1x2x16xf32>
    tpu.vector_store %arg20[%c5_105, %c0_106, %c0_107], %337 {strides = array<i32>} : memref<8x2x16xf32, #tpu.memory_space<vmem>>, vector<1x2x16xf32>,
    %338 = vector.extract_strided_slice %242 {offsets = [0, 0], sizes = [2, 16], strides = [1, 1]} : vector<2x32xf32> to vector<2x16xf32>
    %339 = vector.extract_strided_slice %72 {offsets = [0, 16], sizes = [2, 16], strides = [1, 1]} : vector<2x32xf32> to vector<2x16xf32>
    %340 = tpu.concatenate %338, %339 in 1 : vector<2x16xf32>, vector<2x16xf32> -> vector<2x32xf32>
    %c6_108 = arith.constant 6 : index
    %c0_109 = arith.constant 0 : index
    %c0_110 = arith.constant 0 : index
    %341 = vector.load %arg19[%c6_108, %c0_109, %c0_110] : memref<8x2x32xf32, #tpu.memory_space<vmem>>, vector<1x2x32xf32>
    %342 = vector.shape_cast %341 : vector<1x2x32xf32> to vector<2x32xf32>
    %343 = vector.shape_cast %340 : vector<2x32xf32> to vector<1x2x32xf32>
    tpu.vector_store %arg19[%c6_108, %c0_109, %c0_110], %343 {strides = array<i32>} : memref<8x2x32xf32, #tpu.memory_space<vmem>>, vector<1x2x32xf32>,
    %cst_111 = arith.constant dense<0.000000e+00> : vector<2x16xf32>
    %344 = tpu.matmul %340, %277, %cst_111 {dimension_numbers = #tpu.dot_dimension_numbers<[1], [0], [0], [1], [0, 0, 1, 1], [], []>} : vector<2x32xf32>, vector<32x16xf32>, vector<2x16xf32> -> vector<2x16xf32>
    %c6_112 = arith.constant 6 : index
    %c0_113 = arith.constant 0 : index
    %c0_114 = arith.constant 0 : index
    %345 = vector.load %arg20[%c6_112, %c0_113, %c0_114] : memref<8x2x16xf32, #tpu.memory_space<vmem>>, vector<1x2x16xf32>
    %346 = vector.shape_cast %345 : vector<1x2x16xf32> to vector<2x16xf32>
    %347 = vector.shape_cast %344 : vector<2x16xf32> to vector<1x2x16xf32>
    tpu.vector_store %arg20[%c6_112, %c0_113, %c0_114], %347 {strides = array<i32>} : memref<8x2x16xf32, #tpu.memory_space<vmem>>, vector<1x2x16xf32>,
    %348 = vector.extract_strided_slice %276 {offsets = [0, 0], sizes = [2, 16], strides = [1, 1]} : vector<2x32xf32> to vector<2x16xf32>
    %349 = vector.extract_strided_slice %38 {offsets = [0, 16], sizes = [2, 16], strides = [1, 1]} : vector<2x32xf32> to vector<2x16xf32>
    %350 = tpu.concatenate %348, %349 in 1 : vector<2x16xf32>, vector<2x16xf32> -> vector<2x32xf32>
    %c7_115 = arith.constant 7 : index
    %c0_116 = arith.constant 0 : index
    %c0_117 = arith.constant 0 : index
    %351 = vector.load %arg19[%c7_115, %c0_116, %c0_117] : memref<8x2x32xf32, #tpu.memory_space<vmem>>, vector<1x2x32xf32>
    %352 = vector.shape_cast %351 : vector<1x2x32xf32> to vector<2x32xf32>
    %353 = vector.shape_cast %350 : vector<2x32xf32> to vector<1x2x32xf32>
    tpu.vector_store %arg19[%c7_115, %c0_116, %c0_117], %353 {strides = array<i32>} : memref<8x2x32xf32, #tpu.memory_space<vmem>>, vector<1x2x32xf32>,
    %cst_118 = arith.constant dense<0.000000e+00> : vector<2x16xf32>
    %354 = tpu.matmul %350, %277, %cst_118 {dimension_numbers = #tpu.dot_dimension_numbers<[1], [0], [0], [1], [0, 0, 1, 1], [], []>} : vector<2x32xf32>, vector<32x16xf32>, vector<2x16xf32> -> vector<2x16xf32>
    %c7_119 = arith.constant 7 : index
    %c0_120 = arith.constant 0 : index
    %c0_121 = arith.constant 0 : index
    %355 = vector.load %arg20[%c7_119, %c0_120, %c0_121] : memref<8x2x16xf32, #tpu.memory_space<vmem>>, vector<1x2x16xf32>
    %356 = vector.shape_cast %355 : vector<1x2x16xf32> to vector<2x16xf32>
    %357 = vector.shape_cast %354 : vector<2x16xf32> to vector<1x2x16xf32>
    tpu.vector_store %arg20[%c7_119, %c0_120, %c0_121], %357 {strides = array<i32>} : memref<8x2x16xf32, #tpu.memory_space<vmem>>, vector<1x2x16xf32>,
    %358 = tpu.iota {dimensions = array<i32: 1>} : vector<2x32xi32>
    %c1_i32 = arith.constant 1 : i32
    %359 = vector.broadcast %c1_i32 : i32 to vector<2x32xi32>
    %360 = arith.cmpi eq, %358, %359 : vector<2x32xi32>
    %361 = arith.extui %360 : vector<2x32xi1> to vector<2x32xi32>
    %362 = arith.sitofp %361 : vector<2x32xi32> to vector<2x32xf32>
    %c0_122 = arith.constant 0 : index
    %c0_123 = arith.constant 0 : index
    %c0_124 = arith.constant 0 : index
    %363 = vector.load %arg21[%c0_122, %c0_123, %c0_124] : memref<8x2x32xf32, #tpu.memory_space<vmem>>, vector<1x2x32xf32>
    %364 = vector.shape_cast %363 : vector<1x2x32xf32> to vector<2x32xf32>
    %365 = vector.shape_cast %362 : vector<2x32xf32> to vector<1x2x32xf32>
    tpu.vector_store %arg21[%c0_122, %c0_123, %c0_124], %365 {strides = array<i32>} : memref<8x2x32xf32, #tpu.memory_space<vmem>>, vector<1x2x32xf32>,
    %cst_125 = arith.constant 0.000000e+00 : f32
    %366 = vector.broadcast %cst_125 : f32 to vector<2x32xf32>
    %c1_i32_126 = arith.constant 1 : i32
    %c7_i32 = arith.constant 7 : i32
    %367 = arith.addi %c1_i32_126, %c7_i32 : i32
    %c1_i32_127 = arith.constant 1 : i32
    %368:2 = scf.for %arg22 = %c1_i32_126 to %367 step %c1_i32_127 iter_args(%arg23 = %276, %arg24 = %366) -> (vector<2x32xf32>, vector<2x32xf32>)  : i32 {
      %c1_i32_155 = arith.constant 1 : i32
      %387 = arith.subi %arg22, %c1_i32_155 : i32
      %388 = arith.index_cast %387 : i32 to index
      %c0_156 = arith.constant 0 : index
      %c0_157 = arith.constant 0 : index
      %389 = vector.load %arg1[%388, %c0_156, %c0_157] : memref<7x2x16xf32, #tpu.memory_space<vmem>>, vector<1x2x16xf32>
      %390 = vector.shape_cast %389 : vector<1x2x16xf32> to vector<2x16xf32>
      %c0_158 = arith.constant 0 : index
      %c0_159 = arith.constant 0 : index
      %c0_160 = arith.constant 0 : index
      %391 = vector.load %arg20[%c0_158, %c0_159, %c0_160] : memref<8x2x16xf32, #tpu.memory_space<vmem>>, vector<8x2x16xf32>
      %c0_161 = arith.constant 0 : index
      %c0_162 = arith.constant 0 : index
      %c0_163 = arith.constant 0 : index
      %392 = vector.load %arg19[%c0_161, %c0_162, %c0_163] : memref<8x2x32xf32, #tpu.memory_space<vmem>>, vector<8x2x32xf32>
      %393 = vector.extract_strided_slice %arg24 {offsets = [0, 0], sizes = [2, 16], strides = [1, 1]} : vector<2x32xf32> to vector<2x16xf32>
      %c0_164 = arith.constant 0 : index
      %c0_165 = arith.constant 0 : index
      %394 = vector.load %arg12[%c0_164, %c0_165] : memref<16x16xf32, #tpu.memory_space<vmem>>, vector<16x16xf32>
      %cst_166 = arith.constant dense<0.000000e+00> : vector<2x16xf32>
      %395 = tpu.matmul %393, %394, %cst_166 {dimension_numbers = #tpu.dot_dimension_numbers<[1], [0], [0], [1], [0, 0, 1, 1], [], []>} : vector<2x16xf32>, vector<16x16xf32>, vector<2x16xf32> -> vector<2x16xf32>
      %396 = vector.shape_cast %395 : vector<2x16xf32> to vector<1x2x16xf32>
      %397 = vector.broadcast %396 : vector<1x2x16xf32> to vector<8x2x16xf32>
      %398 = arith.addf %391, %397 : vector<8x2x16xf32>
      %399 = math.tanh %398 : vector<8x2x16xf32>
      %c0_167 = arith.constant 0 : index
      %c0_168 = arith.constant 0 : index
      %400 = vector.load %arg14[%c0_167, %c0_168] : memref<1x16xf32, #tpu.memory_space<vmem>>, vector<1x16xf32>
      %401 = vector.shape_cast %400 : vector<1x16xf32> to vector<1x1x16xf32>
      %402 = vector.broadcast %401 : vector<1x1x16xf32> to vector<8x2x16xf32>
      %403 = arith.mulf %399, %402 : vector<8x2x16xf32>
      %cst_169 = arith.constant dense<0.000000e+00> : vector<8x2xf32>
      %404 = vector.multi_reduction <add>, %403, %cst_169 [2] : vector<8x2x16xf32> to vector<8x2xf32>
      %405 = vector.shape_cast %404 : vector<8x2xf32> to vector<8x2x1xf32>
      %cst_170 = arith.constant dense<0xFF800000> : vector<2x1xf32>
      %406 = vector.multi_reduction <maximumf>, %405, %cst_170 [0] : vector<8x2x1xf32> to vector<2x1xf32>
      %407 = vector.shape_cast %406 : vector<2x1xf32> to vector<1x2x1xf32>
      %408 = vector.broadcast %407 : vector<1x2x1xf32> to vector<8x2x1xf32>
      %409 = arith.subf %405, %408 : vector<8x2x1xf32>
      %410 = math.exp %409 : vector<8x2x1xf32>
      %cst_171 = arith.constant dense<0.000000e+00> : vector<2x1xf32>
      %411 = vector.multi_reduction <add>, %410, %cst_171 [0] : vector<8x2x1xf32> to vector<2x1xf32>
      %412 = vector.shape_cast %411 : vector<2x1xf32> to vector<1x2x1xf32>
      %413 = tpu.reciprocal %412 {approx = true} : vector<1x2x1xf32> -> vector<1x2x1xf32>
      %414 = vector.broadcast %413 : vector<1x2x1xf32> to vector<8x2x1xf32>
      %415 = arith.mulf %410, %414 : vector<8x2x1xf32>
      %416 = vector.broadcast %415 : vector<8x2x1xf32> to vector<8x2x32xf32>
      %417 = arith.mulf %416, %392 : vector<8x2x32xf32>
      %cst_172 = arith.constant dense<0.000000e+00> : vector<2x32xf32>
      %418 = vector.multi_reduction <add>, %417, %cst_172 [0] : vector<8x2x32xf32> to vector<2x32xf32>
      %c0_173 = arith.constant 0 : index
      %c0_174 = arith.constant 0 : index
      %419 = vector.load %arg7[%c0_173, %c0_174] : memref<16x97xf32, #tpu.memory_space<vmem>>, vector<16x97xf32>
      %cst_175 = arith.constant dense<0.000000e+00> : vector<2x97xf32>
      %420 = tpu.matmul %390, %419, %cst_175 {dimension_numbers = #tpu.dot_dimension_numbers<[1], [0], [0], [1], [0, 0, 1, 1], [], []>} : vector<2x16xf32>, vector<16x97xf32>, vector<2x97xf32> -> vector<2x97xf32>
      %c0_176 = arith.constant 0 : index
      %c0_177 = arith.constant 0 : index
      %421 = vector.load %arg8[%c0_176, %c0_177] : memref<32x97xf32, #tpu.memory_space<vmem>>, vector<32x97xf32>
      %cst_178 = arith.constant dense<0.000000e+00> : vector<2x97xf32>
      %422 = tpu.matmul %418, %421, %cst_178 {dimension_numbers = #tpu.dot_dimension_numbers<[1], [0], [0], [1], [0, 0, 1, 1], [], []>} : vector<2x32xf32>, vector<32x97xf32>, vector<2x97xf32> -> vector<2x97xf32>
      %423 = arith.addf %420, %422 : vector<2x97xf32>
      %c0_179 = arith.constant 0 : index
      %c0_180 = arith.constant 0 : index
      %424 = vector.load %arg9[%c0_179, %c0_180] : memref<1x97xf32, #tpu.memory_space<vmem>>, vector<1x97xf32>
      %425 = vector.broadcast %424 : vector<1x97xf32> to vector<2x97xf32>
      %426 = arith.addf %423, %425 : vector<2x97xf32>
      %c0_181 = arith.constant 0 : index
      %c0_182 = arith.constant 0 : index
      %427 = vector.load %arg10[%c0_181, %c0_182] : memref<32x96xf32, #tpu.memory_space<vmem>>, vector<32x96xf32>
      %cst_183 = arith.constant dense<0.000000e+00> : vector<2x96xf32>
      %428 = tpu.matmul %arg23, %427, %cst_183 {dimension_numbers = #tpu.dot_dimension_numbers<[1], [0], [0], [1], [0, 0, 1, 1], [], []>} : vector<2x32xf32>, vector<32x96xf32>, vector<2x96xf32> -> vector<2x96xf32>
      %c0_184 = arith.constant 0 : index
      %c0_185 = arith.constant 0 : index
      %429 = vector.load %arg11[%c0_184, %c0_185] : memref<1x96xf32, #tpu.memory_space<vmem>>, vector<1x96xf32>
      %430 = vector.broadcast %429 : vector<1x96xf32> to vector<2x96xf32>
      %431 = arith.addf %428, %430 : vector<2x96xf32>
      %432 = vector.extract_strided_slice %426 {offsets = [0, 0], sizes = [2, 96], strides = [1, 1]} : vector<2x97xf32> to vector<2x96xf32>
      %433 = vector.extract_strided_slice %432 {offsets = [0, 0], sizes = [2, 32], strides = [1, 1]} : vector<2x96xf32> to vector<2x32xf32>
      %434 = vector.extract_strided_slice %431 {offsets = [0, 0], sizes = [2, 32], strides = [1, 1]} : vector<2x96xf32> to vector<2x32xf32>
      %435 = arith.addf %433, %434 : vector<2x32xf32>
      %436 = arith.negf %435 : vector<2x32xf32>
      %437 = math.exp %436 : vector<2x32xf32>
      %cst_186 = arith.constant 1.000000e+00 : f32
      %438 = vector.broadcast %cst_186 : f32 to vector<2x32xf32>
      %439 = arith.addf %438, %437 : vector<2x32xf32>
      %440 = arith.divf %438, %439 : vector<2x32xf32>
      %441 = vector.extract_strided_slice %432 {offsets = [0, 32], sizes = [2, 32], strides = [1, 1]} : vector<2x96xf32> to vector<2x32xf32>
      %442 = vector.extract_strided_slice %431 {offsets = [0, 32], sizes = [2, 32], strides = [1, 1]} : vector<2x96xf32> to vector<2x32xf32>
      %443 = arith.addf %441, %442 : vector<2x32xf32>
      %444 = arith.negf %443 : vector<2x32xf32>
      %445 = math.exp %444 : vector<2x32xf32>
      %cst_187 = arith.constant 1.000000e+00 : f32
      %446 = vector.broadcast %cst_187 : f32 to vector<2x32xf32>
      %447 = arith.addf %446, %445 : vector<2x32xf32>
      %448 = arith.divf %446, %447 : vector<2x32xf32>
      %449 = vector.extract_strided_slice %432 {offsets = [0, 64], sizes = [2, 32], strides = [1, 1]} : vector<2x96xf32> to vector<2x32xf32>
      %450 = vector.extract_strided_slice %431 {offsets = [0, 64], sizes = [2, 32], strides = [1, 1]} : vector<2x96xf32> to vector<2x32xf32>
      %451 = arith.mulf %440, %450 : vector<2x32xf32>
      %452 = arith.addf %449, %451 : vector<2x32xf32>
      %453 = math.tanh %452 : vector<2x32xf32>
      %cst_188 = arith.constant 1.000000e+00 : f32
      %454 = vector.broadcast %cst_188 : f32 to vector<2x32xf32>
      %455 = arith.subf %454, %448 : vector<2x32xf32>
      %456 = arith.mulf %455, %453 : vector<2x32xf32>
      %457 = arith.mulf %448, %arg23 : vector<2x32xf32>
      %458 = arith.addf %456, %457 : vector<2x32xf32>
      %c0_189 = arith.constant 0 : index
      %c0_190 = arith.constant 0 : index
      %459 = vector.load %arg15[%c0_189, %c0_190] : memref<32x33xf32, #tpu.memory_space<vmem>>, vector<32x33xf32>
      %cst_191 = arith.constant dense<0.000000e+00> : vector<2x33xf32>
      %460 = tpu.matmul %458, %459, %cst_191 {dimension_numbers = #tpu.dot_dimension_numbers<[1], [0], [0], [1], [0, 0, 1, 1], [], []>} : vector<2x32xf32>, vector<32x33xf32>, vector<2x33xf32> -> vector<2x33xf32>
      %c0_192 = arith.constant 0 : index
      %c0_193 = arith.constant 0 : index
      %461 = vector.load %arg16[%c0_192, %c0_193] : memref<32x33xf32, #tpu.memory_space<vmem>>, vector<32x33xf32>
      %cst_194 = arith.constant dense<0.000000e+00> : vector<2x33xf32>
      %462 = tpu.matmul %418, %461, %cst_194 {dimension_numbers = #tpu.dot_dimension_numbers<[1], [0], [0], [1], [0, 0, 1, 1], [], []>} : vector<2x32xf32>, vector<32x33xf32>, vector<2x33xf32> -> vector<2x33xf32>
      %463 = arith.addf %460, %462 : vector<2x33xf32>
      %c0_195 = arith.constant 0 : index
      %c0_196 = arith.constant 0 : index
      %464 = vector.load %arg17[%c0_195, %c0_196] : memref<1x33xf32, #tpu.memory_space<vmem>>, vector<1x33xf32>
      %465 = vector.broadcast %464 : vector<1x33xf32> to vector<2x33xf32>
      %466 = arith.addf %463, %465 : vector<2x33xf32>
      %467 = vector.extract_strided_slice %466 {offsets = [0, 0], sizes = [2, 32], strides = [1, 1]} : vector<2x33xf32> to vector<2x32xf32>
      %cst_197 = arith.constant dense<0xFF800000> : vector<2xf32>
      %468 = vector.multi_reduction <maximumf>, %467, %cst_197 [1] : vector<2x32xf32> to vector<2xf32>
      %469 = vector.shape_cast %468 : vector<2xf32> to vector<2x1xf32>
      %470 = vector.broadcast %469 : vector<2x1xf32> to vector<2x32xf32>
      %471 = arith.subf %467, %470 : vector<2x32xf32>
      %472 = math.exp %471 : vector<2x32xf32>
      %cst_198 = arith.constant dense<0.000000e+00> : vector<2xf32>
      %473 = vector.multi_reduction <add>, %472, %cst_198 [1] : vector<2x32xf32> to vector<2xf32>
      %474 = vector.shape_cast %473 : vector<2xf32> to vector<2x1xf32>
      %475 = tpu.reciprocal %474 {approx = true} : vector<2x1xf32> -> vector<2x1xf32>
      %476 = vector.broadcast %475 : vector<2x1xf32> to vector<2x32xf32>
      %477 = arith.mulf %472, %476 : vector<2x32xf32>
      %478 = vector.extract_strided_slice %466 {offsets = [0, 32], sizes = [2, 1], strides = [1, 1]} : vector<2x33xf32> to vector<2x1xf32>
      %479 = vector.extract_strided_slice %426 {offsets = [0, 96], sizes = [2, 1], strides = [1, 1]} : vector<2x97xf32> to vector<2x1xf32>
      %480 = arith.addf %478, %479 : vector<2x1xf32>
      %481 = arith.negf %480 : vector<2x1xf32>
      %482 = math.exp %481 : vector<2x1xf32>
      %cst_199 = arith.constant 1.000000e+00 : f32
      %483 = vector.broadcast %cst_199 : f32 to vector<2x1xf32>
      %484 = arith.addf %483, %482 : vector<2x1xf32>
      %485 = arith.divf %483, %484 : vector<2x1xf32>
      %c0_200 = arith.constant 0 : index
      %c0_201 = arith.constant 0 : index
      %c0_202 = arith.constant 0 : index
      %486 = vector.load %arg2[%c0_200, %c0_201, %c0_202] : memref<8x2x32xf32, #tpu.memory_space<vmem>>, vector<8x2x32xf32>
      %487 = vector.broadcast %415 : vector<8x2x1xf32> to vector<8x2x32xf32>
      %488 = arith.mulf %487, %486 : vector<8x2x32xf32>
      %cst_203 = arith.constant dense<0.000000e+00> : vector<2x32xf32>
      %489 = vector.multi_reduction <add>, %488, %cst_203 [0] : vector<8x2x32xf32> to vector<2x32xf32>
      %490 = vector.broadcast %485 : vector<2x1xf32> to vector<2x32xf32>
      %491 = arith.mulf %490, %477 : vector<2x32xf32>
      %cst_204 = arith.constant 1.000000e+00 : f32
      %492 = vector.broadcast %cst_204 : f32 to vector<2x1xf32>
      %493 = arith.subf %492, %485 : vector<2x1xf32>
      %494 = vector.broadcast %493 : vector<2x1xf32> to vector<2x32xf32>
      %495 = arith.mulf %494, %489 : vector<2x32xf32>
      %496 = arith.addf %491, %495 : vector<2x32xf32>
      %497 = arith.index_cast %arg22 : i32 to index
      %c0_205 = arith.constant 0 : index
      %c0_206 = arith.constant 0 : index
      %498 = vector.load %arg21[%497, %c0_205, %c0_206] : memref<8x2x32xf32, #tpu.memory_space<vmem>>, vector<1x2x32xf32>
      %499 = vector.shape_cast %498 : vector<1x2x32xf32> to vector<2x32xf32>
      %500 = vector.shape_cast %496 : vector<2x32xf32> to vector<1x2x32xf32>
      tpu.vector_store %arg21[%497, %c0_205, %c0_206], %500 {strides = array<i32>} : memref<8x2x32xf32, #tpu.memory_space<vmem>>, vector<1x2x32xf32>,
      scf.yield %458, %458 : vector<2x32xf32>, vector<2x32xf32>
    }
    %c7_i32_128 = arith.constant 7 : i32
    %c0_129 = arith.constant 0 : index
    %c0_130 = arith.constant 0 : index
    %c0_131 = arith.constant 0 : index
    %369 = vector.load %arg21[%c0_129, %c0_130, %c0_131] : memref<8x2x32xf32, #tpu.memory_space<vmem>>, vector<1x2x32xf32>
    %370 = vector.shape_cast %369 : vector<1x2x32xf32> to vector<2x32xf32>
    %c1_132 = arith.constant 1 : index
    %c0_133 = arith.constant 0 : index
    %c0_134 = arith.constant 0 : index
    %371 = vector.load %arg21[%c1_132, %c0_133, %c0_134] : memref<8x2x32xf32, #tpu.memory_space<vmem>>, vector<1x2x32xf32>
    %372 = vector.shape_cast %371 : vector<1x2x32xf32> to vector<2x32xf32>
    %c2_135 = arith.constant 2 : index
    %c0_136 = arith.constant 0 : index
    %c0_137 = arith.constant 0 : index
    %373 = vector.load %arg21[%c2_135, %c0_136, %c0_137] : memref<8x2x32xf32, #tpu.memory_space<vmem>>, vector<1x2x32xf32>
    %374 = vector.shape_cast %373 : vector<1x2x32xf32> to vector<2x32xf32>
    %c3_138 = arith.constant 3 : index
    %c0_139 = arith.constant 0 : index
    %c0_140 = arith.constant 0 : index
    %375 = vector.load %arg21[%c3_138, %c0_139, %c0_140] : memref<8x2x32xf32, #tpu.memory_space<vmem>>, vector<1x2x32xf32>
    %376 = vector.shape_cast %375 : vector<1x2x32xf32> to vector<2x32xf32>
    %c4_141 = arith.constant 4 : index
    %c0_142 = arith.constant 0 : index
    %c0_143 = arith.constant 0 : index
    %377 = vector.load %arg21[%c4_141, %c0_142, %c0_143] : memref<8x2x32xf32, #tpu.memory_space<vmem>>, vector<1x2x32xf32>
    %378 = vector.shape_cast %377 : vector<1x2x32xf32> to vector<2x32xf32>
    %c5_144 = arith.constant 5 : index
    %c0_145 = arith.constant 0 : index
    %c0_146 = arith.constant 0 : index
    %379 = vector.load %arg21[%c5_144, %c0_145, %c0_146] : memref<8x2x32xf32, #tpu.memory_space<vmem>>, vector<1x2x32xf32>
    %380 = vector.shape_cast %379 : vector<1x2x32xf32> to vector<2x32xf32>
    %c6_147 = arith.constant 6 : index
    %c0_148 = arith.constant 0 : index
    %c0_149 = arith.constant 0 : index
    %381 = vector.load %arg21[%c6_147, %c0_148, %c0_149] : memref<8x2x32xf32, #tpu.memory_space<vmem>>, vector<1x2x32xf32>
    %382 = vector.shape_cast %381 : vector<1x2x32xf32> to vector<2x32xf32>
    %c7_150 = arith.constant 7 : index
    %c0_151 = arith.constant 0 : index
    %c0_152 = arith.constant 0 : index
    %383 = vector.load %arg21[%c7_150, %c0_151, %c0_152] : memref<8x2x32xf32, #tpu.memory_space<vmem>>, vector<1x2x32xf32>
    %384 = vector.shape_cast %383 : vector<1x2x32xf32> to vector<2x32xf32>
    %385 = tpu.concatenate %370, %372, %374, %376, %378, %380, %382, %384 in 1 : vector<2x32xf32>, vector<2x32xf32>, vector<2x32xf32>, vector<2x32xf32>, vector<2x32xf32>, vector<2x32xf32>, vector<2x32xf32>, vector<2x32xf32> -> vector<2x256xf32>
    %c0_153 = arith.constant 0 : index
    %c0_154 = arith.constant 0 : index
    %386 = vector.load %arg18[%c0_153, %c0_154] : memref<2x256xf32, #tpu.memory_space<vmem>>, vector<2x256xf32>
    tpu.vector_store %arg18[%c0_153, %c0_154], %385 {strides = array<i32>} : memref<2x256xf32, #tpu.memory_space<vmem>>, vector<2x256xf32>,
    return
  }
}

</mosaic_0001>

<llo_original>
// kernel: eda_cs_forward.1
$region0: #{eda_cs_forward.1}
  #allocation0 [shape = 'u32[]', space=smem, size = 0x4, offset = 0x4, fixed_abs, tag = 'smem constant byte address 0x4 - core index']
  #allocation1 [shape = 'u32[144,128]{1,0:T(1,128)}', space=vmem, size = 0x12000, scoped, tag = 'internal scratch']
  #allocation2 [shape = 'f32[8,2,32]{2,1,0:T(2,128)}', space=vmem, size = 0x2000, scoped, tag = 'scratch operand']
  #allocation3 [shape = 'f32[8,2,16]{2,1,0:T(2,128)}', space=vmem, size = 0x2000, scoped, tag = 'scratch operand']
  #allocation4 [shape = 'f32[8,2,32]{2,1,0:T(2,128)}', space=vmem, size = 0x2000, scoped, tag = 'scratch operand']
  %s0 = inlined_call_operand.vmem [shape: f32[8,2,32], index: 0, kind: input, shape index: {}]
  %s1 = inlined_call_operand.vmem [shape: f32[7,2,16], index: 1, kind: input, shape index: {}]
  %s2 = inlined_call_operand.vmem [shape: f32[8,2,32], index: 2, kind: input, shape index: {}]
  %s3 = inlined_call_operand.vmem [shape: f32[32,96], index: 3, kind: input, shape index: {}]
  %s4 = inlined_call_operand.vmem [shape: f32[1,96], index: 4, kind: input, shape index: {}]
  %s5 = inlined_call_operand.vmem [shape: f32[32,96], index: 5, kind: input, shape index: {}]
  %s6 = inlined_call_operand.vmem [shape: f32[1,96], index: 6, kind: input, shape index: {}]
  %s7 = inlined_call_operand.vmem [shape: f32[16,97], index: 7, kind: input, shape index: {}]
  %s8 = inlined_call_operand.vmem [shape: f32[32,97], index: 8, kind: input, shape index: {}]
  %s9 = inlined_call_operand.vmem [shape: f32[1,97], index: 9, kind: input, shape index: {}]
  %s10 = inlined_call_operand.vmem [shape: f32[32,96], index: 10, kind: input, shape index: {}]
  %s11 = inlined_call_operand.vmem [shape: f32[1,96], index: 11, kind: input, shape index: {}]
  %s12 = inlined_call_operand.vmem [shape: f32[16,16], index: 12, kind: input, shape index: {}]
  %s13 = inlined_call_operand.vmem [shape: f32[32,16], index: 13, kind: input, shape index: {}]
  %s14 = inlined_call_operand.vmem [shape: f32[1,16], index: 14, kind: input, shape index: {}]
  %s15 = inlined_call_operand.vmem [shape: f32[32,33], index: 15, kind: input, shape index: {}]
  %s16 = inlined_call_operand.vmem [shape: f32[32,33], index: 16, kind: input, shape index: {}]
  %s17 = inlined_call_operand.vmem [shape: f32[1,33], index: 17, kind: input, shape index: {}]
  %s18 = inlined_call_operand.vmem [shape: f32[2,256], index: 18, kind: output, shape index: {}]
  %s19 = sld [smem:[#allocation0]]
  $region89: #{eda_cs_forward.1} parent=0
    _
  %s21 = ssub.s32 1, %s19
  %s22 = scalar_select 0, %s21, %s19
  // Predicated region
  $region2: #{eda_cs_forward.1} parent=0 // pred_check
    _
  $region3: #{eda_cs_forward.1} parent=0 // pred_check_branch
    %24 = sbr.rel (0) target = $region5
  $region4: #{eda_cs_forward.1} parent=0 // pred_region
    _
  $region5: #{eda_cs_forward.1} parent=0 // pred_fallthru
    _
  // Predicated region
  $region6: #{eda_cs_forward.1} parent=0 // pred_check
    _
  $region7: #{eda_cs_forward.1} parent=0 // pred_check_branch
    %26 = sbr.rel (0) target = $region9
  $region8: #{eda_cs_forward.1} parent=0 // pred_region
    _
  $region9: #{eda_cs_forward.1} parent=0 // pred_fallthru
    _
  // Predicated region
  $region10: #{eda_cs_forward.1} parent=0 // pred_check
    _
  $region11: #{eda_cs_forward.1} parent=0 // pred_check_branch
    %28 = sbr.rel (0) target = $region13
  $region12: #{eda_cs_forward.1} parent=0 // pred_region
    _
  $region13: #{eda_cs_forward.1} parent=0 // pred_fallthru
    _
  // Predicated region
  $region14: #{eda_cs_forward.1} parent=0 // pred_check
    _
  $region15: #{eda_cs_forward.1} parent=0 // pred_check_branch
    %30 = sbr.rel (0) target = $region17
  $region16: #{eda_cs_forward.1} parent=0 // pred_region
    _
  $region17: #{eda_cs_forward.1} parent=0 // pred_fallthru
    _
  // Predicated region
  $region18: #{eda_cs_forward.1} parent=0 // pred_check
    _
  $region19: #{eda_cs_forward.1} parent=0 // pred_check_branch
    %32 = sbr.rel (0) target = $region21
  $region20: #{eda_cs_forward.1} parent=0 // pred_region
    _
  $region21: #{eda_cs_forward.1} parent=0 // pred_fallthru
    _
  // Predicated region
  $region22: #{eda_cs_forward.1} parent=0 // pred_check
    _
  $region23: #{eda_cs_forward.1} parent=0 // pred_check_branch
    %34 = sbr.rel (0) target = $region25
  $region24: #{eda_cs_forward.1} parent=0 // pred_region
    _
  $region25: #{eda_cs_forward.1} parent=0 // pred_fallthru
    _
  // Predicated region
  $region26: #{eda_cs_forward.1} parent=0 // pred_check
    _
  $region27: #{eda_cs_forward.1} parent=0 // pred_check_branch
    %36 = sbr.rel (0) target = $region29
  $region28: #{eda_cs_forward.1} parent=0 // pred_region
    _
  $region29: #{eda_cs_forward.1} parent=0 // pred_fallthru
    _
  // Predicated region
  $region30: #{eda_cs_forward.1} parent=0 // pred_check
    _
  $region31: #{eda_cs_forward.1} parent=0 // pred_check_branch
    %38 = sbr.rel (0) target = $region33
  $region32: #{eda_cs_forward.1} parent=0 // pred_region
    _
  $region33: #{eda_cs_forward.1} parent=0 // pred_fallthru
    _
  // Predicated region
  $region34: #{eda_cs_forward.1} parent=0 // pred_check
    _
  $region35: #{eda_cs_forward.1} parent=0 // pred_check_branch
    %40 = sbr.rel (0) target = $region37
  $region36: #{eda_cs_forward.1} parent=0 // pred_region
    _
  $region37: #{eda_cs_forward.1} parent=0 // pred_fallthru
    _
  // Predicated region
  $region38: #{eda_cs_forward.1} parent=0 // pred_check
    _
  $region39: #{eda_cs_forward.1} parent=0 // pred_check_branch
    %42 = sbr.rel (0) target = $region41
  $region40: #{eda_cs_forward.1} parent=0 // pred_region
    _
  $region41: #{eda_cs_forward.1} parent=0 // pred_fallthru
    _
  // Predicated region
  $region42: #{eda_cs_forward.1} parent=0 // pred_check
    _
  $region43: #{eda_cs_forward.1} parent=0 // pred_check_branch
    %44 = sbr.rel (0) target = $region45
  $region44: #{eda_cs_forward.1} parent=0 // pred_region
    _
  $region45: #{eda_cs_forward.1} parent=0 // pred_fallthru
    _
  // Predicated region
  $region46: #{eda_cs_forward.1} parent=0 // pred_check
    _
  $region47: #{eda_cs_forward.1} parent=0 // pred_check_branch
    %46 = sbr.rel (0) target = $region49
  $region48: #{eda_cs_forward.1} parent=0 // pred_region
    _
  $region49: #{eda_cs_forward.1} parent=0 // pred_fallthru
    _
  // Predicated region
  $region50: #{eda_cs_forward.1} parent=0 // pred_check
    _
  $region51: #{eda_cs_forward.1} parent=0 // pred_check_branch
    %48 = sbr.rel (0) target = $region53
  $region52: #{eda_cs_forward.1} parent=0 // pred_region
    _
  $region53: #{eda_cs_forward.1} parent=0 // pred_fallthru
    _
  // Predicated region
  $region54: #{eda_cs_forward.1} parent=0 // pred_check
    _
  $region55: #{eda_cs_forward.1} parent=0 // pred_check_branch
    %50 = sbr.rel (0) target = $region57
  $region56: #{eda_cs_forward.1} parent=0 // pred_region
    _
  $region57: #{eda_cs_forward.1} parent=0 // pred_fallthru
    _
  // Predicated region
  $region58: #{eda_cs_forward.1} parent=0 // pred_check
    _
  $region59: #{eda_cs_forward.1} parent=0 // pred_check_branch
    %52 = sbr.rel (0) target = $region61
  $region60: #{eda_cs_forward.1} parent=0 // pred_region
    _
  $region61: #{eda_cs_forward.1} parent=0 // pred_fallthru
    _
  // Predicated region
  $region62: #{eda_cs_forward.1} parent=0 // pred_check
    _
  $region63: #{eda_cs_forward.1} parent=0 // pred_check_branch
    %54 = sbr.rel (0) target = $region65
  $region64: #{eda_cs_forward.1} parent=0 // pred_region
    _
  $region65: #{eda_cs_forward.1} parent=0 // pred_fallthru
    _
  // Predicated region
  $region66: #{eda_cs_forward.1} parent=0 // pred_check
    _
  $region67: #{eda_cs_forward.1} parent=0 // pred_check_branch
    %56 = sbr.rel (0) target = $region69
  $region68: #{eda_cs_forward.1} parent=0 // pred_region
    _
  $region69: #{eda_cs_forward.1} parent=0 // pred_fallthru
    _
  // Predicated region
  $region70: #{eda_cs_forward.1} parent=0 // pred_check
    _
  $region71: #{eda_cs_forward.1} parent=0 // pred_check_branch
    %58 = sbr.rel (0) target = $region73
  $region72: #{eda_cs_forward.1} parent=0 // pred_region
    _
  $region73: #{eda_cs_forward.1} parent=0 // pred_fallthru
    _
  %v59 = vld [vmem:[%s3] sm:$0xff]
  %v60 = vld [vmem:[%s3 + $0x8] sm:$0xff]
  %v61 = vld [vmem:[%s3 + $0x10] sm:$0xff]
  %v62 = vld [vmem:[%s3 + $0x18] sm:$0xff]
  %v63 = vld [vmem:[%s4] sm:$0x1]
  %v64 = vld [vmem:[%s5] sm:$0xff]
  %v65 = vld [vmem:[%s5 + $0x8] sm:$0xff]
  %v66 = vld [vmem:[%s5 + $0x10] sm:$0xff]
  %v67 = vld [vmem:[%s5 + $0x18] sm:$0xff]
  %v68 = vld [vmem:[%s6] sm:$0x1]
  %v69 = vld [vmem:[%s0] sm:$0x3]
  %v71 = vlaneseq
  %v72 = vshrl.u32 %v71, 7
  %v73 = vsub.s32 0, %v72
  %v74 = vrot.slane %v63, %v73
  %vm76 = vcmask 261120
  %v78 = vsel %vm76, %v69, 0
  %80 = vmatprep.subr.mxu0 0.0
  %81 = vmatpush1.msra.mxu0 0.0
  %82 = vmatprep.subr.mxu0 0.0
  %83 = vmatpush1.msra.mxu0 0.0
  %84 = vmatprep.subr.mxu0 0.0
  %85 = vmatpush1.msra.mxu0 0.0
  %86 = vmatprep.subr.mxu0 0.0
  %87 = vmatpush1.msra.mxu0 0.0
  %88 = vmatprep.subr.mxu0 0.0
  %89 = vmatpush1.msra.mxu0 0.0
  %90 = vmatprep.subr.mxu0 0.0
  %91 = vmatpush1.msra.mxu0 0.0
  %92 = vmatprep.subr.mxu0 0.0
  %93 = vmatpush1.msra.mxu0 0.0
  %94 = vmatprep.subr.mxu0 0.0
  %95 = vmatpush1.msra.mxu0 0.0
  %96 = vmatprep.subr.mxu0 0.0
  %97 = vmatpush1.msra.mxu0 0.0
  %98 = vmatprep.subr.mxu0 0.0
  %99 = vmatpush1.msra.mxu0 0.0
  %100 = vmatprep.subr.mxu0 0.0
  %101 = vmatpush1.msra.mxu0 0.0
  %102 = vmatprep.subr.mxu0 0.0
  %103 = vmatpush1.msra.mxu0 0.0
  %104 = vmatprep.subr.mxu0 0.0
  %105 = vmatpush1.msra.mxu0 %v62
  %106 = vmatprep.subr.mxu0 0.0
  %107 = vmatpush1.msra.mxu0 %v61
  %108 = vmatprep.subr.mxu0 0.0
  %109 = vmatpush1.msra.mxu0 %v60
  %110 = vmatprep.subr.mxu0 0.0
  %111 = vmatpush1.msra.mxu0 %v59
  %112 = vmatprep.subr.mxu0 0.0
  %113 = vmatpush2.msra.mxu0 0.0
  %114 = vmatprep.subr.mxu0 0.0
  %115 = vmatpush2.msra.mxu0 0.0
  %116 = vmatprep.subr.mxu0 0.0
  %117 = vmatpush2.msra.mxu0 0.0
  %118 = vmatprep.subr.mxu0 0.0
  %119 = vmatpush2.msra.mxu0 0.0
  %120 = vmatprep.subr.mxu0 0.0
  %121 = vmatpush2.msra.mxu0 0.0
  %122 = vmatprep.subr.mxu0 0.0
  %123 = vmatpush2.msra.mxu0 0.0
  %124 = vmatprep.subr.mxu0 0.0
  %125 = vmatpush2.msra.mxu0 0.0
  %126 = vmatprep.subr.mxu0 0.0
  %127 = vmatpush2.msra.mxu0 0.0
  %128 = vmatprep.subr.mxu0 0.0
  %129 = vmatpush2.msra.mxu0 0.0
  %130 = vmatprep.subr.mxu0 0.0
  %131 = vmatpush2.msra.mxu0 0.0
  %132 = vmatprep.subr.mxu0 0.0
  %133 = vmatpush2.msra.mxu0 0.0
  %134 = vmatprep.subr.mxu0 0.0
  %135 = vmatpush2.msra.mxu0 0.0
  %136 = vmatprep.subr.mxu0 0.0
  %137 = vmatpush2.msra.mxu0 0.0
  %138 = vmatprep.subr.mxu0 0.0
  %139 = vmatpush2.msra.mxu0 0.0
  %140 = vmatprep.subr.mxu0 0.0
  %141 = vmatpush2.msra.mxu0 0.0
  %142 = vmatprep.subr.mxu0 0.0
  %143 = vmatpush2.msra.mxu0 0.0
  %144 = vmatprep.mubr.f32.mxu0 0.0
  %145 = vmatmul.mubr.f32.gmra.mxu0 %v78
  %v146 = vpop.f32.mrf.mxu0
  %v147 = vadd.f32 %v74, %v146
  %v148 = vpop.f32.mrf.mxu0
  %149 = vdwg.mxu0
  %v151 = vlaneseq
  %v152 = vshrl.u32 %v151, 7
  %v153 = vsub.s32 0, %v152
  %v154 = vrot.slane %v68, %v153
  %v157 = vsel %vm76, 0.0, 0
  %159 = vmatprep.subr.mxu0 0.0
  %160 = vmatpush1.msra.mxu0 0.0
  %161 = vmatprep.subr.mxu0 0.0
  %162 = vmatpush1.msra.mxu0 0.0
  %163 = vmatprep.subr.mxu0 0.0
  %164 = vmatpush1.msra.mxu0 0.0
  %165 = vmatprep.subr.mxu0 0.0
  %166 = vmatpush1.msra.mxu0 0.0
  %167 = vmatprep.subr.mxu0 0.0
  %168 = vmatpush1.msra.mxu0 0.0
  %169 = vmatprep.subr.mxu0 0.0
  %170 = vmatpush1.msra.mxu0 0.0
  %171 = vmatprep.subr.mxu0 0.0
  %172 = vmatpush1.msra.mxu0 0.0
  %173 = vmatprep.subr.mxu0 0.0
  %174 = vmatpush1.msra.mxu0 0.0
  %175 = vmatprep.subr.mxu0 0.0
  %176 = vmatpush1.msra.mxu0 0.0
  %177 = vmatprep.subr.mxu0 0.0
  %178 = vmatpush1.msra.mxu0 0.0
  %179 = vmatprep.subr.mxu0 0.0
  %180 = vmatpush1.msra.mxu0 0.0
  %181 = vmatprep.subr.mxu0 0.0
  %182 = vmatpush1.msra.mxu0 0.0
  %183 = vmatprep.subr.mxu0 0.0
  %184 = vmatpush1.msra.mxu0 %v67
  %185 = vmatprep.subr.mxu0 0.0
  %186 = vmatpush1.msra.mxu0 %v66
  %187 = vmatprep.subr.mxu0 0.0
  %188 = vmatpush1.msra.mxu0 %v65
  %189 = vmatprep.subr.mxu0 0.0
  %190 = vmatpush1.msra.mxu0 %v64
  %191 = vmatprep.subr.mxu0 0.0
  %192 = vmatpush2.msra.mxu0 0.0
  %193 = vmatprep.subr.mxu0 0.0
  %194 = vmatpush2.msra.mxu0 0.0
  %195 = vmatprep.subr.mxu0 0.0
  %196 = vmatpush2.msra.mxu0 0.0
  %197 = vmatprep.subr.mxu0 0.0
  %198 = vmatpush2.msra.mxu0 0.0
  %199 = vmatprep.subr.mxu0 0.0
  %200 = vmatpush2.msra.mxu0 0.0
  %201 = vmatprep.subr.mxu0 0.0
  %202 = vmatpush2.msra.mxu0 0.0
  %203 = vmatprep.subr.mxu0 0.0
  %204 = vmatpush2.msra.mxu0 0.0
  %205 = vmatprep.subr.mxu0 0.0
  %206 = vmatpush2.msra.mxu0 0.0
  %207 = vmatprep.subr.mxu0 0.0
  %208 = vmatpush2.msra.mxu0 0.0
  %209 = vmatprep.subr.mxu0 0.0
  %210 = vmatpush2.msra.mxu0 0.0
  %211 = vmatprep.subr.mxu0 0.0
  %212 = vmatpush2.msra.mxu0 0.0
  %213 = vmatprep.subr.mxu0 0.0
  %214 = vmatpush2.msra.mxu0 0.0
  %215 = vmatprep.subr.mxu0 0.0
  %216 = vmatpush2.msra.mxu0 0.0
  %217 = vmatprep.subr.mxu0 0.0
  %218 = vmatpush2.msra.mxu0 0.0
  %219 = vmatprep.subr.mxu0 0.0
  %220 = vmatpush2.msra.mxu0 0.0
  %221 = vmatprep.subr.mxu0 0.0
  %222 = vmatpush2.msra.mxu0 0.0
  %223 = vmatprep.mubr.f32.mxu0 0.0
  %224 = vmatmul.mubr.f32.gmra.mxu0 %v157
  %v225 = vpop.f32.mrf.mxu0
  %v226 = vadd.f32 %v154, %v225
  %v227 = vpop.f32.mrf.mxu0
  %228 = vdwg.mxu0
  %v229 = vadd.f32 %v147, %v226
  %v230 = vxor.u32 %v229, 2147483648
  %v231 = vmul.f32 %v230, 1.442695
  %v232 = vpow.pop %v231
  %v233 = vadd.f32 %v232, 1.0
  %v234 = vrcp.pop %v233
  %v235 = vmul.f32 1.0, %v234
  %237 = vrot.lane.b32.xlu0 %v226, 64
  %v238 = vpop.permute.xlu0 %237
  %v240 = vmul.f32 %v235, %v238
  %242 = vrot.lane.b32.xlu0 %v240, 64
  %v243 = vpop.permute.xlu0 %242
  %v245 = vadd.f32 %v147, %v243
  %v246 = vtanh.pop %v245
  %v247 = vsub.f32 1.0, %v235
  %249 = vrot.lane.b32.xlu0 %v246, 96
  %v250 = vpop.permute.xlu0 %249
  %v252 = vmul.f32 %v247, %v250
  %v253 = vmul.f32 %v235, 0.0
  %v254 = vadd.f32 %v252, %v253
  %s255 = scalar_lea.vmem %s0, 2
  %v256 = vld [vmem:[%s255] sm:$0x3]
  %v258 = vsel %vm76, %v256, 0
  %260 = vmatprep.subr.mxu0 0.0
  %261 = vmatpush1.msra.mxu0 0.0
  %262 = vmatprep.subr.mxu0 0.0
  %263 = vmatpush1.msra.mxu0 0.0
  %264 = vmatprep.subr.mxu0 0.0
  %265 = vmatpush1.msra.mxu0 0.0
  %266 = vmatprep.subr.mxu0 0.0
  %267 = vmatpush1.msra.mxu0 0.0
  %268 = vmatprep.subr.mxu0 0.0
  %269 = vmatpush1.msra.mxu0 0.0
  %270 = vmatprep.subr.mxu0 0.0
  %271 = vmatpush1.msra.mxu0 0.0
  %272 = vmatprep.subr.mxu0 0.0
  %273 = vmatpush1.msra.mxu0 0.0
  %274 = vmatprep.subr.mxu0 0.0
  %275 = vmatpush1.msra.mxu0 0.0
  %276 = vmatprep.subr.mxu0 0.0
  %277 = vmatpush1.msra.mxu0 0.0
  %278 = vmatprep.subr.mxu0 0.0
  %279 = vmatpush1.msra.mxu0 0.0
  %280 = vmatprep.subr.mxu0 0.0
  %281 = vmatpush1.msra.mxu0 0.0
  %282 = vmatprep.subr.mxu0 0.0
  %283 = vmatpush1.msra.mxu0 0.0
  %284 = vmatprep.subr.mxu0 0.0
  %285 = vmatpush1.msra.mxu0 %v62
  %286 = vmatprep.subr.mxu0 0.0
  %287 = vmatpush1.msra.mxu0 %v61
  %288 = vmatprep.subr.mxu0 0.0
  %289 = vmatpush1.msra.mxu0 %v60
  %290 = vmatprep.subr.mxu0 0.0
  %291 = vmatpush1.msra.mxu0 %v59
  %292 = vmatprep.subr.mxu0 0.0
  %293 = vmatpush2.msra.mxu0 0.0
  %294 = vmatprep.subr.mxu0 0.0
  %295 = vmatpush2.msra.mxu0 0.0
  %296 = vmatprep.subr.mxu0 0.0
  %297 = vmatpush2.msra.mxu0 0.0
  %298 = vmatprep.subr.mxu0 0.0
  %299 = vmatpush2.msra.mxu0 0.0
  %300 = vmatprep.subr.mxu0 0.0
  %301 = vmatpush2.msra.mxu0 0.0
  %302 = vmatprep.subr.mxu0 0.0
  %303 = vmatpush2.msra.mxu0 0.0
  %304 = vmatprep.subr.mxu0 0.0
  %305 = vmatpush2.msra.mxu0 0.0
  %306 = vmatprep.subr.mxu0 0.0
  %307 = vmatpush2.msra.mxu0 0.0
  %308 = vmatprep.subr.mxu0 0.0
  %309 = vmatpush2.msra.mxu0 0.0
  %310 = vmatprep.subr.mxu0 0.0
  %311 = vmatpush2.msra.mxu0 0.0
  %312 = vmatprep.subr.mxu0 0.0
  %313 = vmatpush2.msra.mxu0 0.0
  %314 = vmatprep.subr.mxu0 0.0
  %315 = vmatpush2.msra.mxu0 0.0
  %316 = vmatprep.subr.mxu0 0.0
  %317 = vmatpush2.msra.mxu0 0.0
  %318 = vmatprep.subr.mxu0 0.0
  %319 = vmatpush2.msra.mxu0 0.0
  %320 = vmatprep.subr.mxu0 0.0
  %321 = vmatpush2.msra.mxu0 0.0
  %322 = vmatprep.subr.mxu0 0.0
  %323 = vmatpush2.msra.mxu0 0.0
  %324 = vmatprep.mubr.f32.mxu0 0.0
  %325 = vmatmul.mubr.f32.gmra.mxu0 %v258
  %v326 = vpop.f32.mrf.mxu0
  %v327 = vadd.f32 %v74, %v326
  %v328 = vpop.f32.mrf.mxu0
  %329 = vdwg.mxu0
  %331 = vrot.lane.b32.xlu0 %v254, 96
  %v332 = vpop.permute.xlu0 %331
  %v333 = vsel %vm76, %v332, 0
  %335 = vmatprep.subr.mxu0 0.0
  %336 = vmatpush1.msra.mxu0 0.0
  %337 = vmatprep.subr.mxu0 0.0
  %338 = vmatpush1.msra.mxu0 0.0
  %339 = vmatprep.subr.mxu0 0.0
  %340 = vmatpush1.msra.mxu0 0.0
  %341 = vmatprep.subr.mxu0 0.0
  %342 = vmatpush1.msra.mxu0 0.0
  %343 = vmatprep.subr.mxu0 0.0
  %344 = vmatpush1.msra.mxu0 0.0
  %345 = vmatprep.subr.mxu0 0.0
  %346 = vmatpush1.msra.mxu0 0.0
  %347 = vmatprep.subr.mxu0 0.0
  %348 = vmatpush1.msra.mxu0 0.0
  %349 = vmatprep.subr.mxu0 0.0
  %350 = vmatpush1.msra.mxu0 0.0
  %351 = vmatprep.subr.mxu0 0.0
  %352 = vmatpush1.msra.mxu0 0.0
  %353 = vmatprep.subr.mxu0 0.0
  %354 = vmatpush1.msra.mxu0 0.0
  %355 = vmatprep.subr.mxu0 0.0
  %356 = vmatpush1.msra.mxu0 0.0
  %357 = vmatprep.subr.mxu0 0.0
  %358 = vmatpush1.msra.mxu0 0.0
  %359 = vmatprep.subr.mxu0 0.0
  %360 = vmatpush1.msra.mxu0 %v67
  %361 = vmatprep.subr.mxu0 0.0
  %362 = vmatpush1.msra.mxu0 %v66
  %363 = vmatprep.subr.mxu0 0.0
  %364 = vmatpush1.msra.mxu0 %v65
  %365 = vmatprep.subr.mxu0 0.0
  %366 = vmatpush1.msra.mxu0 %v64
  %367 = vmatprep.subr.mxu0 0.0
  %368 = vmatpush2.msra.mxu0 0.0
  %369 = vmatprep.subr.mxu0 0.0
  %370 = vmatpush2.msra.mxu0 0.0
  %371 = vmatprep.subr.mxu0 0.0
  %372 = vmatpush2.msra.mxu0 0.0
  %373 = vmatprep.subr.mxu0 0.0
  %374 = vmatpush2.msra.mxu0 0.0
  %375 = vmatprep.subr.mxu0 0.0
  %376 = vmatpush2.msra.mxu0 0.0
  %377 = vmatprep.subr.mxu0 0.0
  %378 = vmatpush2.msra.mxu0 0.0
  %379 = vmatprep.subr.mxu0 0.0
  %380 = vmatpush2.msra.mxu0 0.0
  %381 = vmatprep.subr.mxu0 0.0
  %382 = vmatpush2.msra.mxu0 0.0
  %383 = vmatprep.subr.mxu0 0.0
  %384 = vmatpush2.msra.mxu0 0.0
  %385 = vmatprep.subr.mxu0 0.0
  %386 = vmatpush2.msra.mxu0 0.0
  %387 = vmatprep.subr.mxu0 0.0
  %388 = vmatpush2.msra.mxu0 0.0
  %389 = vmatprep.subr.mxu0 0.0
  %390 = vmatpush2.msra.mxu0 0.0
  %391 = vmatprep.subr.mxu0 0.0
  %392 = vmatpush2.msra.mxu0 0.0
  %393 = vmatprep.subr.mxu0 0.0
  %394 = vmatpush2.msra.mxu0 0.0
  %395 = vmatprep.subr.mxu0 0.0
  %396 = vmatpush2.msra.mxu0 0.0
  %397 = vmatprep.subr.mxu0 0.0
  %398 = vmatpush2.msra.mxu0 0.0
  %399 = vmatprep.mubr.f32.mxu0 0.0
  %400 = vmatmul.mubr.f32.gmra.mxu0 %v333
  %v401 = vpop.f32.mrf.mxu0
  %v402 = vadd.f32 %v154, %v401
  %v403 = vpop.f32.mrf.mxu0
  %404 = vdwg.mxu0
  %v405 = vadd.f32 %v327, %v402
  %v406 = vxor.u32 %v405, 2147483648
  %v407 = vmul.f32 %v406, 1.442695
  %v408 = vpow.pop %v407
  %v409 = vadd.f32 %v408, 1.0
  %v410 = vrcp.pop %v409
  %v411 = vmul.f32 1.0, %v410
  %413 = vrot.lane.b32.xlu0 %v402, 64
  %v414 = vpop.permute.xlu0 %413
  %v416 = vmul.f32 %v411, %v414
  %418 = vrot.lane.b32.xlu0 %v416, 64
  %v419 = vpop.permute.xlu0 %418
  %v421 = vadd.f32 %v327, %v419
  %v422 = vtanh.pop %v421
  %v423 = vsub.f32 1.0, %v411
  %425 = vrot.lane.b32.xlu0 %v422, 96
  %v426 = vpop.permute.xlu0 %425
  %v428 = vmul.f32 %v423, %v426
  %v429 = vmul.f32 %v411, %v254
  %v430 = vadd.f32 %v428, %v429
  %s431 = scalar_lea.vmem %s0, 4
  %v432 = vld [vmem:[%s431] sm:$0x3]
  %v434 = vsel %vm76, %v432, 0
  %436 = vmatprep.subr.mxu0 0.0
  %437 = vmatpush1.msra.mxu0 0.0
  %438 = vmatprep.subr.mxu0 0.0
  %439 = vmatpush1.msra.mxu0 0.0
  %440 = vmatprep.subr.mxu0 0.0
  %441 = vmatpush1.msra.mxu0 0.0
  %442 = vmatprep.subr.mxu0 0.0
  %443 = vmatpush1.msra.mxu0 0.0
  %444 = vmatprep.subr.mxu0 0.0
  %445 = vmatpush1.msra.mxu0 0.0
  %446 = vmatprep.subr.mxu0 0.0
  %447 = vmatpush1.msra.mxu0 0.0
  %448 = vmatprep.subr.mxu0 0.0
  %449 = vmatpush1.msra.mxu0 0.0
  %450 = vmatprep.subr.mxu0 0.0
  %451 = vmatpush1.msra.mxu0 0.0
  %452 = vmatprep.subr.mxu0 0.0
  %453 = vmatpush1.msra.mxu0 0.0
  %454 = vmatprep.subr.mxu0 0.0
  %455 = vmatpush1.msra.mxu0 0.0
  %456 = vmatprep.subr.mxu0 0.0
  %457 = vmatpush1.msra.mxu0 0.0
  %458 = vmatprep.subr.mxu0 0.0
  %459 = vmatpush1.msra.mxu0 0.0
  %460 = vmatprep.subr.mxu0 0.0
  %461 = vmatpush1.msra.mxu0 %v62
  %462 = vmatprep.subr.mxu0 0.0
  %463 = vmatpush1.msra.mxu0 %v61
  %464 = vmatprep.subr.mxu0 0.0
  %465 = vmatpush1.msra.mxu0 %v60
  %466 = vmatprep.subr.mxu0 0.0
  %467 = vmatpush1.msra.mxu0 %v59
  %468 = vmatprep.subr.mxu0 0.0
  %469 = vmatpush2.msra.mxu0 0.0
  %470 = vmatprep.subr.mxu0 0.0
  %471 = vmatpush2.msra.mxu0 0.0
  %472 = vmatprep.subr.mxu0 0.0
  %473 = vmatpush2.msra.mxu0 0.0
  %474 = vmatprep.subr.mxu0 0.0
  %475 = vmatpush2.msra.mxu0 0.0
  %476 = vmatprep.subr.mxu0 0.0
  %477 = vmatpush2.msra.mxu0 0.0
  %478 = vmatprep.subr.mxu0 0.0
  %479 = vmatpush2.msra.mxu0 0.0
  %480 = vmatprep.subr.mxu0 0.0
  %481 = vmatpush2.msra.mxu0 0.0
  %482 = vmatprep.subr.mxu0 0.0
  %483 = vmatpush2.msra.mxu0 0.0
  %484 = vmatprep.subr.mxu0 0.0
  %485 = vmatpush2.msra.mxu0 0.0
  %486 = vmatprep.subr.mxu0 0.0
  %487 = vmatpush2.msra.mxu0 0.0
  %488 = vmatprep.subr.mxu0 0.0
  %489 = vmatpush2.msra.mxu0 0.0
  %490 = vmatprep.subr.mxu0 0.0
  %491 = vmatpush2.msra.mxu0 0.0
  %492 = vmatprep.subr.mxu0 0.0
  %493 = vmatpush2.msra.mxu0 0.0
  %494 = vmatprep.subr.mxu0 0.0
  %495 = vmatpush2.msra.mxu0 0.0
  %496 = vmatprep.subr.mxu0 0.0
  %497 = vmatpush2.msra.mxu0 0.0
  %498 = vmatprep.subr.mxu0 0.0
  %499 = vmatpush2.msra.mxu0 0.0
  %500 = vmatprep.mubr.f32.mxu0 0.0
  %501 = vmatmul.mubr.f32.gmra.mxu0 %v434
  %v502 = vpop.f32.mrf.mxu0
  %v503 = vadd.f32 %v74, %v502
  %v504 = vpop.f32.mrf.mxu0
  %505 = vdwg.mxu0
  %507 = vrot.lane.b32.xlu0 %v430, 96
  %v508 = vpop.permute.xlu0 %507
  %v509 = vsel %vm76, %v508, 0
  %511 = vmatprep.subr.mxu0 0.0
  %512 = vmatpush1.msra.mxu0 0.0
  %513 = vmatprep.subr.mxu0 0.0
  %514 = vmatpush1.msra.mxu0 0.0
  %515 = vmatprep.subr.mxu0 0.0
  %516 = vmatpush1.msra.mxu0 0.0
  %517 = vmatprep.subr.mxu0 0.0
  %518 = vmatpush1.msra.mxu0 0.0
  %519 = vmatprep.subr.mxu0 0.0
  %520 = vmatpush1.msra.mxu0 0.0
  %521 = vmatprep.subr.mxu0 0.0
  %522 = vmatpush1.msra.mxu0 0.0
  %523 = vmatprep.subr.mxu0 0.0
  %524 = vmatpush1.msra.mxu0 0.0
  %525 = vmatprep.subr.mxu0 0.0
  %526 = vmatpush1.msra.mxu0 0.0
  %527 = vmatprep.subr.mxu0 0.0
  %528 = vmatpush1.msra.mxu0 0.0
  %529 = vmatprep.subr.mxu0 0.0
  %530 = vmatpush1.msra.mxu0 0.0
  %531 = vmatprep.subr.mxu0 0.0
  %532 = vmatpush1.msra.mxu0 0.0
  %533 = vmatprep.subr.mxu0 0.0
  %534 = vmatpush1.msra.mxu0 0.0
  %535 = vmatprep.subr.mxu0 0.0
  %536 = vmatpush1.msra.mxu0 %v67
  %537 = vmatprep.subr.mxu0 0.0
  %538 = vmatpush1.msra.mxu0 %v66
  %539 = vmatprep.subr.mxu0 0.0
  %540 = vmatpush1.msra.mxu0 %v65
  %541 = vmatprep.subr.mxu0 0.0
  %542 = vmatpush1.msra.mxu0 %v64
  %543 = vmatprep.subr.mxu0 0.0
  %544 = vmatpush2.msra.mxu0 0.0
  %545 = vmatprep.subr.mxu0 0.0
  %546 = vmatpush2.msra.mxu0 0.0
  %547 = vmatprep.subr.mxu0 0.0
  %548 = vmatpush2.msra.mxu0 0.0
  %549 = vmatprep.subr.mxu0 0.0
  %550 = vmatpush2.msra.mxu0 0.0
  %551 = vmatprep.subr.mxu0 0.0
  %552 = vmatpush2.msra.mxu0 0.0
  %553 = vmatprep.subr.mxu0 0.0
  %554 = vmatpush2.msra.mxu0 0.0
  %555 = vmatprep.subr.mxu0 0.0
  %556 = vmatpush2.msra.mxu0 0.0
  %557 = vmatprep.subr.mxu0 0.0
  %558 = vmatpush2.msra.mxu0 0.0
  %559 = vmatprep.subr.mxu0 0.0
  %560 = vmatpush2.msra.mxu0 0.0
  %561 = vmatprep.subr.mxu0 0.0
  %562 = vmatpush2.msra.mxu0 0.0
  %563 = vmatprep.subr.mxu0 0.0
  %564 = vmatpush2.msra.mxu0 0.0
  %565 = vmatprep.subr.mxu0 0.0
  %566 = vmatpush2.msra.mxu0 0.0
  %567 = vmatprep.subr.mxu0 0.0
  %568 = vmatpush2.msra.mxu0 0.0
  %569 = vmatprep.subr.mxu0 0.0
  %570 = vmatpush2.msra.mxu0 0.0
  %571 = vmatprep.subr.mxu0 0.0
  %572 = vmatpush2.msra.mxu0 0.0
  %573 = vmatprep.subr.mxu0 0.0
  %574 = vmatpush2.msra.mxu0 0.0
  %575 = vmatprep.mubr.f32.mxu0 0.0
  %576 = vmatmul.mubr.f32.gmra.mxu0 %v509
  %v577 = vpop.f32.mrf.mxu0
  %v578 = vadd.f32 %v154, %v577
  %v579 = vpop.f32.mrf.mxu0
  %580 = vdwg.mxu0
  %v581 = vadd.f32 %v503, %v578
  %v582 = vxor.u32 %v581, 2147483648
  %v583 = vmul.f32 %v582, 1.442695
  %v584 = vpow.pop %v583
  %v585 = vadd.f32 %v584, 1.0
  %v586 = vrcp.pop %v585
  %v587 = vmul.f32 1.0, %v586
  %589 = vrot.lane.b32.xlu0 %v578, 64
  %v590 = vpop.permute.xlu0 %589
  %v592 = vmul.f32 %v587, %v590
  %594 = vrot.lane.b32.xlu0 %v592, 64
  %v595 = vpop.permute.xlu0 %594
  %v597 = vadd.f32 %v503, %v595
  %v598 = vtanh.pop %v597
  %v599 = vsub.f32 1.0, %v587
  %601 = vrot.lane.b32.xlu0 %v598, 96
  %v602 = vpop.permute.xlu0 %601
  %v604 = vmul.f32 %v599, %v602
  %v605 = vmul.f32 %v587, %v430
  %v606 = vadd.f32 %v604, %v605
  %s607 = scalar_lea.vmem %s0, 6
  %v608 = vld [vmem:[%s607] sm:$0x3]
  %v610 = vsel %vm76, %v608, 0
  %612 = vmatprep.subr.mxu0 0.0
  %613 = vmatpush1.msra.mxu0 0.0
  %614 = vmatprep.subr.mxu0 0.0
  %615 = vmatpush1.msra.mxu0 0.0
  %616 = vmatprep.subr.mxu0 0.0
  %617 = vmatpush1.msra.mxu0 0.0
  %618 = vmatprep.subr.mxu0 0.0
  %619 = vmatpush1.msra.mxu0 0.0
  %620 = vmatprep.subr.mxu0 0.0
  %621 = vmatpush1.msra.mxu0 0.0
  %622 = vmatprep.subr.mxu0 0.0
  %623 = vmatpush1.msra.mxu0 0.0
  %624 = vmatprep.subr.mxu0 0.0
  %625 = vmatpush1.msra.mxu0 0.0
  %626 = vmatprep.subr.mxu0 0.0
  %627 = vmatpush1.msra.mxu0 0.0
  %628 = vmatprep.subr.mxu0 0.0
  %629 = vmatpush1.msra.mxu0 0.0
  %630 = vmatprep.subr.mxu0 0.0
  %631 = vmatpush1.msra.mxu0 0.0
  %632 = vmatprep.subr.mxu0 0.0
  %633 = vmatpush1.msra.mxu0 0.0
  %634 = vmatprep.subr.mxu0 0.0
  %635 = vmatpush1.msra.mxu0 0.0
  %636 = vmatprep.subr.mxu0 0.0
  %637 = vmatpush1.msra.mxu0 %v62
  %638 = vmatprep.subr.mxu0 0.0
  %639 = vmatpush1.msra.mxu0 %v61
  %640 = vmatprep.subr.mxu0 0.0
  %641 = vmatpush1.msra.mxu0 %v60
  %642 = vmatprep.subr.mxu0 0.0
  %643 = vmatpush1.msra.mxu0 %v59
  %644 = vmatprep.subr.mxu0 0.0
  %645 = vmatpush2.msra.mxu0 0.0
  %646 = vmatprep.subr.mxu0 0.0
  %647 = vmatpush2.msra.mxu0 0.0
  %648 = vmatprep.subr.mxu0 0.0
  %649 = vmatpush2.msra.mxu0 0.0
  %650 = vmatprep.subr.mxu0 0.0
  %651 = vmatpush2.msra.mxu0 0.0
  %652 = vmatprep.subr.mxu0 0.0
  %653 = vmatpush2.msra.mxu0 0.0
  %654 = vmatprep.subr.mxu0 0.0
  %655 = vmatpush2.msra.mxu0 0.0
  %656 = vmatprep.subr.mxu0 0.0
  %657 = vmatpush2.msra.mxu0 0.0
  %658 = vmatprep.subr.mxu0 0.0
  %659 = vmatpush2.msra.mxu0 0.0
  %660 = vmatprep.subr.mxu0 0.0
  %661 = vmatpush2.msra.mxu0 0.0
  %662 = vmatprep.subr.mxu0 0.0
  %663 = vmatpush2.msra.mxu0 0.0
  %664 = vmatprep.subr.mxu0 0.0
  %665 = vmatpush2.msra.mxu0 0.0
  %666 = vmatprep.subr.mxu0 0.0
  %667 = vmatpush2.msra.mxu0 0.0
  %668 = vmatprep.subr.mxu0 0.0
  %669 = vmatpush2.msra.mxu0 0.0
  %670 = vmatprep.subr.mxu0 0.0
  %671 = vmatpush2.msra.mxu0 0.0
  %672 = vmatprep.subr.mxu0 0.0
  %673 = vmatpush2.msra.mxu0 0.0
  %674 = vmatprep.subr.mxu0 0.0
  %675 = vmatpush2.msra.mxu0 0.0
  %676 = vmatprep.mubr.f32.mxu0 0.0
  %677 = vmatmul.mubr.f32.gmra.mxu0 %v610
  %v678 = vpop.f32.mrf.mxu0
  %v679 = vadd.f32 %v74, %v678
  %v680 = vpop.f32.mrf.mxu0
  %681 = vdwg.mxu0
  %683 = vrot.lane.b32.xlu0 %v606, 96
  %v684 = vpop.permute.xlu0 %683
  %v685 = vsel %vm76, %v684, 0
  %687 = vmatprep.subr.mxu0 0.0
  %688 = vmatpush1.msra.mxu0 0.0
  %689 = vmatprep.subr.mxu0 0.0
  %690 = vmatpush1.msra.mxu0 0.0
  %691 = vmatprep.subr.mxu0 0.0
  %692 = vmatpush1.msra.mxu0 0.0
  %693 = vmatprep.subr.mxu0 0.0
  %694 = vmatpush1.msra.mxu0 0.0
  %695 = vmatprep.subr.mxu0 0.0
  %696 = vmatpush1.msra.mxu0 0.0
  %697 = vmatprep.subr.mxu0 0.0
  %698 = vmatpush1.msra.mxu0 0.0
  %699 = vmatprep.subr.mxu0 0.0
  %700 = vmatpush1.msra.mxu0 0.0
  %701 = vmatprep.subr.mxu0 0.0
  %702 = vmatpush1.msra.mxu0 0.0
  %703 = vmatprep.subr.mxu0 0.0
  %704 = vmatpush1.msra.mxu0 0.0
  %705 = vmatprep.subr.mxu0 0.0
  %706 = vmatpush1.msra.mxu0 0.0
  %707 = vmatprep.subr.mxu0 0.0
  %708 = vmatpush1.msra.mxu0 0.0
  %709 = vmatprep.subr.mxu0 0.0
  %710 = vmatpush1.msra.mxu0 0.0
  %711 = vmatprep.subr.mxu0 0.0
  %712 = vmatpush1.msra.mxu0 %v67
  %713 = vmatprep.subr.mxu0 0.0
  %714 = vmatpush1.msra.mxu0 %v66
  %715 = vmatprep.subr.mxu0 0.0
  %716 = vmatpush1.msra.mxu0 %v65
  %717 = vmatprep.subr.mxu0 0.0
  %718 = vmatpush1.msra.mxu0 %v64
  %719 = vmatprep.subr.mxu0 0.0
  %720 = vmatpush2.msra.mxu0 0.0
  %721 = vmatprep.subr.mxu0 0.0
  %722 = vmatpush2.msra.mxu0 0.0
  %723 = vmatprep.subr.mxu0 0.0
  %724 = vmatpush2.msra.mxu0 0.0
  %725 = vmatprep.subr.mxu0 0.0
  %726 = vmatpush2.msra.mxu0 0.0
  %727 = vmatprep.subr.mxu0 0.0
  %728 = vmatpush2.msra.mxu0 0.0
  %729 = vmatprep.subr.mxu0 0.0
  %730 = vmatpush2.msra.mxu0 0.0
  %731 = vmatprep.subr.mxu0 0.0
  %732 = vmatpush2.msra.mxu0 0.0
  %733 = vmatprep.subr.mxu0 0.0
  %734 = vmatpush2.msra.mxu0 0.0
  %735 = vmatprep.subr.mxu0 0.0
  %736 = vmatpush2.msra.mxu0 0.0
  %737 = vmatprep.subr.mxu0 0.0
  %738 = vmatpush2.msra.mxu0 0.0
  %739 = vmatprep.subr.mxu0 0.0
  %740 = vmatpush2.msra.mxu0 0.0
  %741 = vmatprep.subr.mxu0 0.0
  %742 = vmatpush2.msra.mxu0 0.0
  %743 = vmatprep.subr.mxu0 0.0
  %744 = vmatpush2.msra.mxu0 0.0
  %745 = vmatprep.subr.mxu0 0.0
  %746 = vmatpush2.msra.mxu0 0.0
  %747 = vmatprep.subr.mxu0 0.0
  %748 = vmatpush2.msra.mxu0 0.0
  %749 = vmatprep.subr.mxu0 0.0
  %750 = vmatpush2.msra.mxu0 0.0
  %751 = vmatprep.mubr.f32.mxu0 0.0
  %752 = vmatmul.mubr.f32.gmra.mxu0 %v685
  %v753 = vpop.f32.mrf.mxu0
  %v754 = vadd.f32 %v154, %v753
  %v755 = vpop.f32.mrf.mxu0
  %756 = vdwg.mxu0
  %v757 = vadd.f32 %v679, %v754
  %v758 = vxor.u32 %v757, 2147483648
  %v759 = vmul.f32 %v758, 1.442695
  %v760 = vpow.pop %v759
  %v761 = vadd.f32 %v760, 1.0
  %v762 = vrcp.pop %v761
  %v763 = vmul.f32 1.0, %v762
  %765 = vrot.lane.b32.xlu0 %v754, 64
  %v766 = vpop.permute.xlu0 %765
  %v768 = vmul.f32 %v763, %v766
  %770 = vrot.lane.b32.xlu0 %v768, 64
  %v771 = vpop.permute.xlu0 %770
  %v773 = vadd.f32 %v679, %v771
  %v774 = vtanh.pop %v773
  %v775 = vsub.f32 1.0, %v763
  %777 = vrot.lane.b32.xlu0 %v774, 96
  %v778 = vpop.permute.xlu0 %777
  %v780 = vmul.f32 %v775, %v778
  %v781 = vmul.f32 %v763, %v606
  %v782 = vadd.f32 %v780, %v781
  %s783 = scalar_lea.vmem %s0, 8
  %v784 = vld [vmem:[%s783] sm:$0x3]
  %v786 = vsel %vm76, %v784, 0
  %788 = vmatprep.subr.mxu0 0.0
  %789 = vmatpush1.msra.mxu0 0.0
  %790 = vmatprep.subr.mxu0 0.0
  %791 = vmatpush1.msra.mxu0 0.0
  %792 = vmatprep.subr.mxu0 0.0
  %793 = vmatpush1.msra.mxu0 0.0
  %794 = vmatprep.subr.mxu0 0.0
  %795 = vmatpush1.msra.mxu0 0.0
  %796 = vmatprep.subr.mxu0 0.0
  %797 = vmatpush1.msra.mxu0 0.0
  %798 = vmatprep.subr.mxu0 0.0
  %799 = vmatpush1.msra.mxu0 0.0
  %800 = vmatprep.subr.mxu0 0.0
  %801 = vmatpush1.msra.mxu0 0.0
  %802 = vmatprep.subr.mxu0 0.0
  %803 = vmatpush1.msra.mxu0 0.0
  %804 = vmatprep.subr.mxu0 0.0
  %805 = vmatpush1.msra.mxu0 0.0
  %806 = vmatprep.subr.mxu0 0.0
  %807 = vmatpush1.msra.mxu0 0.0
  %808 = vmatprep.subr.mxu0 0.0
  %809 = vmatpush1.msra.mxu0 0.0
  %810 = vmatprep.subr.mxu0 0.0
  %811 = vmatpush1.msra.mxu0 0.0
  %812 = vmatprep.subr.mxu0 0.0
  %813 = vmatpush1.msra.mxu0 %v62
  %814 = vmatprep.subr.mxu0 0.0
  %815 = vmatpush1.msra.mxu0 %v61
  %816 = vmatprep.subr.mxu0 0.0
  %817 = vmatpush1.msra.mxu0 %v60
  %818 = vmatprep.subr.mxu0 0.0
  %819 = vmatpush1.msra.mxu0 %v59
  %820 = vmatprep.subr.mxu0 0.0
  %821 = vmatpush2.msra.mxu0 0.0
  %822 = vmatprep.subr.mxu0 0.0
  %823 = vmatpush2.msra.mxu0 0.0
  %824 = vmatprep.subr.mxu0 0.0
  %825 = vmatpush2.msra.mxu0 0.0
  %826 = vmatprep.subr.mxu0 0.0
  %827 = vmatpush2.msra.mxu0 0.0
  %828 = vmatprep.subr.mxu0 0.0
  %829 = vmatpush2.msra.mxu0 0.0
  %830 = vmatprep.subr.mxu0 0.0
  %831 = vmatpush2.msra.mxu0 0.0
  %832 = vmatprep.subr.mxu0 0.0
  %833 = vmatpush2.msra.mxu0 0.0
  %834 = vmatprep.subr.mxu0 0.0
  %835 = vmatpush2.msra.mxu0 0.0
  %836 = vmatprep.subr.mxu0 0.0
  %837 = vmatpush2.msra.mxu0 0.0
  %838 = vmatprep.subr.mxu0 0.0
  %839 = vmatpush2.msra.mxu0 0.0
  %840 = vmatprep.subr.mxu0 0.0
  %841 = vmatpush2.msra.mxu0 0.0
  %842 = vmatprep.subr.mxu0 0.0
  %843 = vmatpush2.msra.mxu0 0.0
  %844 = vmatprep.subr.mxu0 0.0
  %845 = vmatpush2.msra.mxu0 0.0
  %846 = vmatprep.subr.mxu0 0.0
  %847 = vmatpush2.msra.mxu0 0.0
  %848 = vmatprep.subr.mxu0 0.0
  %849 = vmatpush2.msra.mxu0 0.0
  %850 = vmatprep.subr.mxu0 0.0
  %851 = vmatpush2.msra.mxu0 0.0
  %852 = vmatprep.mubr.f32.mxu0 0.0
  %853 = vmatmul.mubr.f32.gmra.mxu0 %v786
  %v854 = vpop.f32.mrf.mxu0
  %v855 = vadd.f32 %v74, %v854
  %v856 = vpop.f32.mrf.mxu0
  %857 = vdwg.mxu0
  %859 = vrot.lane.b32.xlu0 %v782, 96
  %v860 = vpop.permute.xlu0 %859
  %v861 = vsel %vm76, %v860, 0
  %863 = vmatprep.subr.mxu0 0.0
  %864 = vmatpush1.msra.mxu0 0.0
  %865 = vmatprep.subr.mxu0 0.0
  %866 = vmatpush1.msra.mxu0 0.0
  %867 = vmatprep.subr.mxu0 0.0
  %868 = vmatpush1.msra.mxu0 0.0
  %869 = vmatprep.subr.mxu0 0.0
  %870 = vmatpush1.msra.mxu0 0.0
  %871 = vmatprep.subr.mxu0 0.0
  %872 = vmatpush1.msra.mxu0 0.0
  %873 = vmatprep.subr.mxu0 0.0
  %874 = vmatpush1.msra.mxu0 0.0
  %875 = vmatprep.subr.mxu0 0.0
  %876 = vmatpush1.msra.mxu0 0.0
  %877 = vmatprep.subr.mxu0 0.0
  %878 = vmatpush1.msra.mxu0 0.0
  %879 = vmatprep.subr.mxu0 0.0
  %880 = vmatpush1.msra.mxu0 0.0
  %881 = vmatprep.subr.mxu0 0.0
  %882 = vmatpush1.msra.mxu0 0.0
  %883 = vmatprep.subr.mxu0 0.0
  %884 = vmatpush1.msra.mxu0 0.0
  %885 = vmatprep.subr.mxu0 0.0
  %886 = vmatpush1.msra.mxu0 0.0
  %887 = vmatprep.subr.mxu0 0.0
  %888 = vmatpush1.msra.mxu0 %v67
  %889 = vmatprep.subr.mxu0 0.0
  %890 = vmatpush1.msra.mxu0 %v66
  %891 = vmatprep.subr.mxu0 0.0
  %892 = vmatpush1.msra.mxu0 %v65
  %893 = vmatprep.subr.mxu0 0.0
  %894 = vmatpush1.msra.mxu0 %v64
  %895 = vmatprep.subr.mxu0 0.0
  %896 = vmatpush2.msra.mxu0 0.0
  %897 = vmatprep.subr.mxu0 0.0
  %898 = vmatpush2.msra.mxu0 0.0
  %899 = vmatprep.subr.mxu0 0.0
  %900 = vmatpush2.msra.mxu0 0.0
  %901 = vmatprep.subr.mxu0 0.0
  %902 = vmatpush2.msra.mxu0 0.0
  %903 = vmatprep.subr.mxu0 0.0
  %904 = vmatpush2.msra.mxu0 0.0
  %905 = vmatprep.subr.mxu0 0.0
  %906 = vmatpush2.msra.mxu0 0.0
  %907 = vmatprep.subr.mxu0 0.0
  %908 = vmatpush2.msra.mxu0 0.0
  %909 = vmatprep.subr.mxu0 0.0
  %910 = vmatpush2.msra.mxu0 0.0
  %911 = vmatprep.subr.mxu0 0.0
  %912 = vmatpush2.msra.mxu0 0.0
  %913 = vmatprep.subr.mxu0 0.0
  %914 = vmatpush2.msra.mxu0 0.0
  %915 = vmatprep.subr.mxu0 0.0
  %916 = vmatpush2.msra.mxu0 0.0
  %917 = vmatprep.subr.mxu0 0.0
  %918 = vmatpush2.msra.mxu0 0.0
  %919 = vmatprep.subr.mxu0 0.0
  %920 = vmatpush2.msra.mxu0 0.0
  %921 = vmatprep.subr.mxu0 0.0
  %922 = vmatpush2.msra.mxu0 0.0
  %923 = vmatprep.subr.mxu0 0.0
  %924 = vmatpush2.msra.mxu0 0.0
  %925 = vmatprep.subr.mxu0 0.0
  %926 = vmatpush2.msra.mxu0 0.0
  %927 = vmatprep.mubr.f32.mxu0 0.0
  %928 = vmatmul.mubr.f32.gmra.mxu0 %v861
  %v929 = vpop.f32.mrf.mxu0
  %v930 = vadd.f32 %v154, %v929
  %v931 = vpop.f32.mrf.mxu0
  %932 = vdwg.mxu0
  %v933 = vadd.f32 %v855, %v930
  %v934 = vxor.u32 %v933, 2147483648
  %v935 = vmul.f32 %v934, 1.442695
  %v936 = vpow.pop %v935
  %v937 = vadd.f32 %v936, 1.0
  %v938 = vrcp.pop %v937
  %v939 = vmul.f32 1.0, %v938
  %941 = vrot.lane.b32.xlu0 %v930, 64
  %v942 = vpop.permute.xlu0 %941
  %v944 = vmul.f32 %v939, %v942
  %946 = vrot.lane.b32.xlu0 %v944, 64
  %v947 = vpop.permute.xlu0 %946
  %v949 = vadd.f32 %v855, %v947
  %v950 = vtanh.pop %v949
  %v951 = vsub.f32 1.0, %v939
  %953 = vrot.lane.b32.xlu0 %v950, 96
  %v954 = vpop.permute.xlu0 %953
  %v956 = vmul.f32 %v951, %v954
  %v957 = vmul.f32 %v939, %v782
  %v958 = vadd.f32 %v956, %v957
  %s959 = scalar_lea.vmem %s0, 10
  %v960 = vld [vmem:[%s959] sm:$0x3]
  %v962 = vsel %vm76, %v960, 0
  %964 = vmatprep.subr.mxu0 0.0
  %965 = vmatpush1.msra.mxu0 0.0
  %966 = vmatprep.subr.mxu0 0.0
  %967 = vmatpush1.msra.mxu0 0.0
  %968 = vmatprep.subr.mxu0 0.0
  %969 = vmatpush1.msra.mxu0 0.0
  %970 = vmatprep.subr.mxu0 0.0
  %971 = vmatpush1.msra.mxu0 0.0
  %972 = vmatprep.subr.mxu0 0.0
  %973 = vmatpush1.msra.mxu0 0.0
  %974 = vmatprep.subr.mxu0 0.0
  %975 = vmatpush1.msra.mxu0 0.0
  %976 = vmatprep.subr.mxu0 0.0
  %977 = vmatpush1.msra.mxu0 0.0
  %978 = vmatprep.subr.mxu0 0.0
  %979 = vmatpush1.msra.mxu0 0.0
  %980 = vmatprep.subr.mxu0 0.0
  %981 = vmatpush1.msra.mxu0 0.0
  %982 = vmatprep.subr.mxu0 0.0
  %983 = vmatpush1.msra.mxu0 0.0
  %984 = vmatprep.subr.mxu0 0.0
  %985 = vmatpush1.msra.mxu0 0.0
  %986 = vmatprep.subr.mxu0 0.0
  %987 = vmatpush1.msra.mxu0 0.0
  %988 = vmatprep.subr.mxu0 0.0
  %989 = vmatpush1.msra.mxu0 %v62
  %990 = vmatprep.subr.mxu0 0.0
  %991 = vmatpush1.msra.mxu0 %v61
  %992 = vmatprep.subr.mxu0 0.0
  %993 = vmatpush1.msra.mxu0 %v60
  %994 = vmatprep.subr.mxu0 0.0
  %995 = vmatpush1.msra.mxu0 %v59
  %996 = vmatprep.subr.mxu0 0.0
  %997 = vmatpush2.msra.mxu0 0.0
  %998 = vmatprep.subr.mxu0 0.0
  %999 = vmatpush2.msra.mxu0 0.0
  %1000 = vmatprep.subr.mxu0 0.0
  %1001 = vmatpush2.msra.mxu0 0.0
  %1002 = vmatprep.subr.mxu0 0.0
  %1003 = vmatpush2.msra.mxu0 0.0
  %1004 = vmatprep.subr.mxu0 0.0
  %1005 = vmatpush2.msra.mxu0 0.0
  %1006 = vmatprep.subr.mxu0 0.0
  %1007 = vmatpush2.msra.mxu0 0.0
  %1008 = vmatprep.subr.mxu0 0.0
  %1009 = vmatpush2.msra.mxu0 0.0
  %1010 = vmatprep.subr.mxu0 0.0
  %1011 = vmatpush2.msra.mxu0 0.0
  %1012 = vmatprep.subr.mxu0 0.0
  %1013 = vmatpush2.msra.mxu0 0.0
  %1014 = vmatprep.subr.mxu0 0.0
  %1015 = vmatpush2.msra.mxu0 0.0
  %1016 = vmatprep.subr.mxu0 0.0
  %1017 = vmatpush2.msra.mxu0 0.0
  %1018 = vmatprep.subr.mxu0 0.0
  %1019 = vmatpush2.msra.mxu0 0.0
  %1020 = vmatprep.subr.mxu0 0.0
  %1021 = vmatpush2.msra.mxu0 0.0
  %1022 = vmatprep.subr.mxu0 0.0
  %1023 = vmatpush2.msra.mxu0 0.0
  %1024 = vmatprep.subr.mxu0 0.0
  %1025 = vmatpush2.msra.mxu0 0.0
  %1026 = vmatprep.subr.mxu0 0.0
  %1027 = vmatpush2.msra.mxu0 0.0
  %1028 = vmatprep.mubr.f32.mxu0 0.0
  %1029 = vmatmul.mubr.f32.gmra.mxu0 %v962
  %v1030 = vpop.f32.mrf.mxu0
  %v1031 = vadd.f32 %v74, %v1030
  %v1032 = vpop.f32.mrf.mxu0
  %1033 = vdwg.mxu0
  %1035 = vrot.lane.b32.xlu0 %v958, 96
  %v1036 = vpop.permute.xlu0 %1035
  %v1037 = vsel %vm76, %v1036, 0
  %1039 = vmatprep.subr.mxu0 0.0
  %1040 = vmatpush1.msra.mxu0 0.0
  %1041 = vmatprep.subr.mxu0 0.0
  %1042 = vmatpush1.msra.mxu0 0.0
  %1043 = vmatprep.subr.mxu0 0.0
  %1044 = vmatpush1.msra.mxu0 0.0
  %1045 = vmatprep.subr.mxu0 0.0
  %1046 = vmatpush1.msra.mxu0 0.0
  %1047 = vmatprep.subr.mxu0 0.0
  %1048 = vmatpush1.msra.mxu0 0.0
  %1049 = vmatprep.subr.mxu0 0.0
  %1050 = vmatpush1.msra.mxu0 0.0
  %1051 = vmatprep.subr.mxu0 0.0
  %1052 = vmatpush1.msra.mxu0 0.0
  %1053 = vmatprep.subr.mxu0 0.0
  %1054 = vmatpush1.msra.mxu0 0.0
  %1055 = vmatprep.subr.mxu0 0.0
  %1056 = vmatpush1.msra.mxu0 0.0
  %1057 = vmatprep.subr.mxu0 0.0
  %1058 = vmatpush1.msra.mxu0 0.0
  %1059 = vmatprep.subr.mxu0 0.0
  %1060 = vmatpush1.msra.mxu0 0.0
  %1061 = vmatprep.subr.mxu0 0.0
  %1062 = vmatpush1.msra.mxu0 0.0
  %1063 = vmatprep.subr.mxu0 0.0
  %1064 = vmatpush1.msra.mxu0 %v67
  %1065 = vmatprep.subr.mxu0 0.0
  %1066 = vmatpush1.msra.mxu0 %v66
  %1067 = vmatprep.subr.mxu0 0.0
  %1068 = vmatpush1.msra.mxu0 %v65
  %1069 = vmatprep.subr.mxu0 0.0
  %1070 = vmatpush1.msra.mxu0 %v64
  %1071 = vmatprep.subr.mxu0 0.0
  %1072 = vmatpush2.msra.mxu0 0.0
  %1073 = vmatprep.subr.mxu0 0.0
  %1074 = vmatpush2.msra.mxu0 0.0
  %1075 = vmatprep.subr.mxu0 0.0
  %1076 = vmatpush2.msra.mxu0 0.0
  %1077 = vmatprep.subr.mxu0 0.0
  %1078 = vmatpush2.msra.mxu0 0.0
  %1079 = vmatprep.subr.mxu0 0.0
  %1080 = vmatpush2.msra.mxu0 0.0
  %1081 = vmatprep.subr.mxu0 0.0
  %1082 = vmatpush2.msra.mxu0 0.0
  %1083 = vmatprep.subr.mxu0 0.0
  %1084 = vmatpush2.msra.mxu0 0.0
  %1085 = vmatprep.subr.mxu0 0.0
  %1086 = vmatpush2.msra.mxu0 0.0
  %1087 = vmatprep.subr.mxu0 0.0
  %1088 = vmatpush2.msra.mxu0 0.0
  %1089 = vmatprep.subr.mxu0 0.0
  %1090 = vmatpush2.msra.mxu0 0.0
  %1091 = vmatprep.subr.mxu0 0.0
  %1092 = vmatpush2.msra.mxu0 0.0
  %1093 = vmatprep.subr.mxu0 0.0
  %1094 = vmatpush2.msra.mxu0 0.0
  %1095 = vmatprep.subr.mxu0 0.0
  %1096 = vmatpush2.msra.mxu0 0.0
  %1097 = vmatprep.subr.mxu0 0.0
  %1098 = vmatpush2.msra.mxu0 0.0
  %1099 = vmatprep.subr.mxu0 0.0
  %1100 = vmatpush2.msra.mxu0 0.0
  %1101 = vmatprep.subr.mxu0 0.0
  %1102 = vmatpush2.msra.mxu0 0.0
  %1103 = vmatprep.mubr.f32.mxu0 0.0
  %1104 = vmatmul.mubr.f32.gmra.mxu0 %v1037
  %v1105 = vpop.f32.mrf.mxu0
  %v1106 = vadd.f32 %v154, %v1105
  %v1107 = vpop.f32.mrf.mxu0
  %1108 = vdwg.mxu0
  %v1109 = vadd.f32 %v1031, %v1106
  %v1110 = vxor.u32 %v1109, 2147483648
  %v1111 = vmul.f32 %v1110, 1.442695
  %v1112 = vpow.pop %v1111
  %v1113 = vadd.f32 %v1112, 1.0
  %v1114 = vrcp.pop %v1113
  %v1115 = vmul.f32 1.0, %v1114
  %1117 = vrot.lane.b32.xlu0 %v1106, 64
  %v1118 = vpop.permute.xlu0 %1117
  %v1120 = vmul.f32 %v1115, %v1118
  %1122 = vrot.lane.b32.xlu0 %v1120, 64
  %v1123 = vpop.permute.xlu0 %1122
  %v1125 = vadd.f32 %v1031, %v1123
  %v1126 = vtanh.pop %v1125
  %v1127 = vsub.f32 1.0, %v1115
  %1129 = vrot.lane.b32.xlu0 %v1126, 96
  %v1130 = vpop.permute.xlu0 %1129
  %v1132 = vmul.f32 %v1127, %v1130
  %v1133 = vmul.f32 %v1115, %v958
  %v1134 = vadd.f32 %v1132, %v1133
  %s1135 = scalar_lea.vmem %s0, 12
  %v1136 = vld [vmem:[%s1135] sm:$0x3]
  %v1138 = vsel %vm76, %v1136, 0
  %1140 = vmatprep.subr.mxu0 0.0
  %1141 = vmatpush1.msra.mxu0 0.0
  %1142 = vmatprep.subr.mxu0 0.0
  %1143 = vmatpush1.msra.mxu0 0.0
  %1144 = vmatprep.subr.mxu0 0.0
  %1145 = vmatpush1.msra.mxu0 0.0
  %1146 = vmatprep.subr.mxu0 0.0
  %1147 = vmatpush1.msra.mxu0 0.0
  %1148 = vmatprep.subr.mxu0 0.0
  %1149 = vmatpush1.msra.mxu0 0.0
  %1150 = vmatprep.subr.mxu0 0.0
  %1151 = vmatpush1.msra.mxu0 0.0
  %1152 = vmatprep.subr.mxu0 0.0
  %1153 = vmatpush1.msra.mxu0 0.0
  %1154 = vmatprep.subr.mxu0 0.0
  %1155 = vmatpush1.msra.mxu0 0.0
  %1156 = vmatprep.subr.mxu0 0.0
  %1157 = vmatpush1.msra.mxu0 0.0
  %1158 = vmatprep.subr.mxu0 0.0
  %1159 = vmatpush1.msra.mxu0 0.0
  %1160 = vmatprep.subr.mxu0 0.0
  %1161 = vmatpush1.msra.mxu0 0.0
  %1162 = vmatprep.subr.mxu0 0.0
  %1163 = vmatpush1.msra.mxu0 0.0
  %1164 = vmatprep.subr.mxu0 0.0
  %1165 = vmatpush1.msra.mxu0 %v62
  %1166 = vmatprep.subr.mxu0 0.0
  %1167 = vmatpush1.msra.mxu0 %v61
  %1168 = vmatprep.subr.mxu0 0.0
  %1169 = vmatpush1.msra.mxu0 %v60
  %1170 = vmatprep.subr.mxu0 0.0
  %1171 = vmatpush1.msra.mxu0 %v59
  %1172 = vmatprep.subr.mxu0 0.0
  %1173 = vmatpush2.msra.mxu0 0.0
  %1174 = vmatprep.subr.mxu0 0.0
  %1175 = vmatpush2.msra.mxu0 0.0
  %1176 = vmatprep.subr.mxu0 0.0
  %1177 = vmatpush2.msra.mxu0 0.0
  %1178 = vmatprep.subr.mxu0 0.0
  %1179 = vmatpush2.msra.mxu0 0.0
  %1180 = vmatprep.subr.mxu0 0.0
  %1181 = vmatpush2.msra.mxu0 0.0
  %1182 = vmatprep.subr.mxu0 0.0
  %1183 = vmatpush2.msra.mxu0 0.0
  %1184 = vmatprep.subr.mxu0 0.0
  %1185 = vmatpush2.msra.mxu0 0.0
  %1186 = vmatprep.subr.mxu0 0.0
  %1187 = vmatpush2.msra.mxu0 0.0
  %1188 = vmatprep.subr.mxu0 0.0
  %1189 = vmatpush2.msra.mxu0 0.0
  %1190 = vmatprep.subr.mxu0 0.0
  %1191 = vmatpush2.msra.mxu0 0.0
  %1192 = vmatprep.subr.mxu0 0.0
  %1193 = vmatpush2.msra.mxu0 0.0
  %1194 = vmatprep.subr.mxu0 0.0
  %1195 = vmatpush2.msra.mxu0 0.0
  %1196 = vmatprep.subr.mxu0 0.0
  %1197 = vmatpush2.msra.mxu0 0.0
  %1198 = vmatprep.subr.mxu0 0.0
  %1199 = vmatpush2.msra.mxu0 0.0
  %1200 = vmatprep.subr.mxu0 0.0
  %1201 = vmatpush2.msra.mxu0 0.0
  %1202 = vmatprep.subr.mxu0 0.0
  %1203 = vmatpush2.msra.mxu0 0.0
  %1204 = vmatprep.mubr.f32.mxu0 0.0
  %1205 = vmatmul.mubr.f32.gmra.mxu0 %v1138
  %v1206 = vpop.f32.mrf.mxu0
  %v1207 = vadd.f32 %v74, %v1206
  %v1208 = vpop.f32.mrf.mxu0
  %1209 = vdwg.mxu0
  %1211 = vrot.lane.b32.xlu0 %v1134, 96
  %v1212 = vpop.permute.xlu0 %1211
  %v1213 = vsel %vm76, %v1212, 0
  %1215 = vmatprep.subr.mxu0 0.0
  %1216 = vmatpush1.msra.mxu0 0.0
  %1217 = vmatprep.subr.mxu0 0.0
  %1218 = vmatpush1.msra.mxu0 0.0
  %1219 = vmatprep.subr.mxu0 0.0
  %1220 = vmatpush1.msra.mxu0 0.0
  %1221 = vmatprep.subr.mxu0 0.0
  %1222 = vmatpush1.msra.mxu0 0.0
  %1223 = vmatprep.subr.mxu0 0.0
  %1224 = vmatpush1.msra.mxu0 0.0
  %1225 = vmatprep.subr.mxu0 0.0
  %1226 = vmatpush1.msra.mxu0 0.0
  %1227 = vmatprep.subr.mxu0 0.0
  %1228 = vmatpush1.msra.mxu0 0.0
  %1229 = vmatprep.subr.mxu0 0.0
  %1230 = vmatpush1.msra.mxu0 0.0
  %1231 = vmatprep.subr.mxu0 0.0
  %1232 = vmatpush1.msra.mxu0 0.0
  %1233 = vmatprep.subr.mxu0 0.0
  %1234 = vmatpush1.msra.mxu0 0.0
  %1235 = vmatprep.subr.mxu0 0.0
  %1236 = vmatpush1.msra.mxu0 0.0
  %1237 = vmatprep.subr.mxu0 0.0
  %1238 = vmatpush1.msra.mxu0 0.0
  %1239 = vmatprep.subr.mxu0 0.0
  %1240 = vmatpush1.msra.mxu0 %v67
  %1241 = vmatprep.subr.mxu0 0.0
  %1242 = vmatpush1.msra.mxu0 %v66
  %1243 = vmatprep.subr.mxu0 0.0
  %1244 = vmatpush1.msra.mxu0 %v65
  %1245 = vmatprep.subr.mxu0 0.0
  %1246 = vmatpush1.msra.mxu0 %v64
  %1247 = vmatprep.subr.mxu0 0.0
  %1248 = vmatpush2.msra.mxu0 0.0
  %1249 = vmatprep.subr.mxu0 0.0
  %1250 = vmatpush2.msra.mxu0 0.0
  %1251 = vmatprep.subr.mxu0 0.0
  %1252 = vmatpush2.msra.mxu0 0.0
  %1253 = vmatprep.subr.mxu0 0.0
  %1254 = vmatpush2.msra.mxu0 0.0
  %1255 = vmatprep.subr.mxu0 0.0
  %1256 = vmatpush2.msra.mxu0 0.0
  %1257 = vmatprep.subr.mxu0 0.0
  %1258 = vmatpush2.msra.mxu0 0.0
  %1259 = vmatprep.subr.mxu0 0.0
  %1260 = vmatpush2.msra.mxu0 0.0
  %1261 = vmatprep.subr.mxu0 0.0
  %1262 = vmatpush2.msra.mxu0 0.0
  %1263 = vmatprep.subr.mxu0 0.0
  %1264 = vmatpush2.msra.mxu0 0.0
  %1265 = vmatprep.subr.mxu0 0.0
  %1266 = vmatpush2.msra.mxu0 0.0
  %1267 = vmatprep.subr.mxu0 0.0
  %1268 = vmatpush2.msra.mxu0 0.0
  %1269 = vmatprep.subr.mxu0 0.0
  %1270 = vmatpush2.msra.mxu0 0.0
  %1271 = vmatprep.subr.mxu0 0.0
  %1272 = vmatpush2.msra.mxu0 0.0
  %1273 = vmatprep.subr.mxu0 0.0
  %1274 = vmatpush2.msra.mxu0 0.0
  %1275 = vmatprep.subr.mxu0 0.0
  %1276 = vmatpush2.msra.mxu0 0.0
  %1277 = vmatprep.subr.mxu0 0.0
  %1278 = vmatpush2.msra.mxu0 0.0
  %1279 = vmatprep.mubr.f32.mxu0 0.0
  %1280 = vmatmul.mubr.f32.gmra.mxu0 %v1213
  %v1281 = vpop.f32.mrf.mxu0
  %v1282 = vadd.f32 %v154, %v1281
  %v1283 = vpop.f32.mrf.mxu0
  %1284 = vdwg.mxu0
  %v1285 = vadd.f32 %v1207, %v1282
  %v1286 = vxor.u32 %v1285, 2147483648
  %v1287 = vmul.f32 %v1286, 1.442695
  %v1288 = vpow.pop %v1287
  %v1289 = vadd.f32 %v1288, 1.0
  %v1290 = vrcp.pop %v1289
  %v1291 = vmul.f32 1.0, %v1290
  %1293 = vrot.lane.b32.xlu0 %v1282, 64
  %v1294 = vpop.permute.xlu0 %1293
  %v1296 = vmul.f32 %v1291, %v1294
  %1298 = vrot.lane.b32.xlu0 %v1296, 64
  %v1299 = vpop.permute.xlu0 %1298
  %v1301 = vadd.f32 %v1207, %v1299
  %v1302 = vtanh.pop %v1301
  %v1303 = vsub.f32 1.0, %v1291
  %1305 = vrot.lane.b32.xlu0 %v1302, 96
  %v1306 = vpop.permute.xlu0 %1305
  %v1308 = vmul.f32 %v1303, %v1306
  %v1309 = vmul.f32 %v1291, %v1134
  %v1310 = vadd.f32 %v1308, %v1309
  %s1311 = scalar_lea.vmem %s0, 14
  %v1312 = vld [vmem:[%s1311] sm:$0x3]
  %v1314 = vsel %vm76, %v1312, 0
  %1316 = vmatprep.subr.mxu0 0.0
  %1317 = vmatpush1.msra.mxu0 0.0
  %1318 = vmatprep.subr.mxu0 0.0
  %1319 = vmatpush1.msra.mxu0 0.0
  %1320 = vmatprep.subr.mxu0 0.0
  %1321 = vmatpush1.msra.mxu0 0.0
  %1322 = vmatprep.subr.mxu0 0.0
  %1323 = vmatpush1.msra.mxu0 0.0
  %1324 = vmatprep.subr.mxu0 0.0
  %1325 = vmatpush1.msra.mxu0 0.0
  %1326 = vmatprep.subr.mxu0 0.0
  %1327 = vmatpush1.msra.mxu0 0.0
  %1328 = vmatprep.subr.mxu0 0.0
  %1329 = vmatpush1.msra.mxu0 0.0
  %1330 = vmatprep.subr.mxu0 0.0
  %1331 = vmatpush1.msra.mxu0 0.0
  %1332 = vmatprep.subr.mxu0 0.0
  %1333 = vmatpush1.msra.mxu0 0.0
  %1334 = vmatprep.subr.mxu0 0.0
  %1335 = vmatpush1.msra.mxu0 0.0
  %1336 = vmatprep.subr.mxu0 0.0
  %1337 = vmatpush1.msra.mxu0 0.0
  %1338 = vmatprep.subr.mxu0 0.0
  %1339 = vmatpush1.msra.mxu0 0.0
  %1340 = vmatprep.subr.mxu0 0.0
  %1341 = vmatpush1.msra.mxu0 %v62
  %1342 = vmatprep.subr.mxu0 0.0
  %1343 = vmatpush1.msra.mxu0 %v61
  %1344 = vmatprep.subr.mxu0 0.0
  %1345 = vmatpush1.msra.mxu0 %v60
  %1346 = vmatprep.subr.mxu0 0.0
  %1347 = vmatpush1.msra.mxu0 %v59
  %1348 = vmatprep.subr.mxu0 0.0
  %1349 = vmatpush2.msra.mxu0 0.0
  %1350 = vmatprep.subr.mxu0 0.0
  %1351 = vmatpush2.msra.mxu0 0.0
  %1352 = vmatprep.subr.mxu0 0.0
  %1353 = vmatpush2.msra.mxu0 0.0
  %1354 = vmatprep.subr.mxu0 0.0
  %1355 = vmatpush2.msra.mxu0 0.0
  %1356 = vmatprep.subr.mxu0 0.0
  %1357 = vmatpush2.msra.mxu0 0.0
  %1358 = vmatprep.subr.mxu0 0.0
  %1359 = vmatpush2.msra.mxu0 0.0
  %1360 = vmatprep.subr.mxu0 0.0
  %1361 = vmatpush2.msra.mxu0 0.0
  %1362 = vmatprep.subr.mxu0 0.0
  %1363 = vmatpush2.msra.mxu0 0.0
  %1364 = vmatprep.subr.mxu0 0.0
  %1365 = vmatpush2.msra.mxu0 0.0
  %1366 = vmatprep.subr.mxu0 0.0
  %1367 = vmatpush2.msra.mxu0 0.0
  %1368 = vmatprep.subr.mxu0 0.0
  %1369 = vmatpush2.msra.mxu0 0.0
  %1370 = vmatprep.subr.mxu0 0.0
  %1371 = vmatpush2.msra.mxu0 0.0
  %1372 = vmatprep.subr.mxu0 0.0
  %1373 = vmatpush2.msra.mxu0 0.0
  %1374 = vmatprep.subr.mxu0 0.0
  %1375 = vmatpush2.msra.mxu0 0.0
  %1376 = vmatprep.subr.mxu0 0.0
  %1377 = vmatpush2.msra.mxu0 0.0
  %1378 = vmatprep.subr.mxu0 0.0
  %1379 = vmatpush2.msra.mxu0 0.0
  %1380 = vmatprep.mubr.f32.mxu0 0.0
  %1381 = vmatmul.mubr.f32.gmra.mxu0 %v1314
  %v1382 = vpop.f32.mrf.mxu0
  %v1383 = vadd.f32 %v74, %v1382
  %v1384 = vpop.f32.mrf.mxu0
  %1385 = vdwg.mxu0
  %1387 = vrot.lane.b32.xlu0 %v1310, 96
  %v1388 = vpop.permute.xlu0 %1387
  %v1389 = vsel %vm76, %v1388, 0
  %1391 = vmatprep.subr.mxu0 0.0
  %1392 = vmatpush1.msra.mxu0 0.0
  %1393 = vmatprep.subr.mxu0 0.0
  %1394 = vmatpush1.msra.mxu0 0.0
  %1395 = vmatprep.subr.mxu0 0.0
  %1396 = vmatpush1.msra.mxu0 0.0
  %1397 = vmatprep.subr.mxu0 0.0
  %1398 = vmatpush1.msra.mxu0 0.0
  %1399 = vmatprep.subr.mxu0 0.0
  %1400 = vmatpush1.msra.mxu0 0.0
  %1401 = vmatprep.subr.mxu0 0.0
  %1402 = vmatpush1.msra.mxu0 0.0
  %1403 = vmatprep.subr.mxu0 0.0
  %1404 = vmatpush1.msra.mxu0 0.0
  %1405 = vmatprep.subr.mxu0 0.0
  %1406 = vmatpush1.msra.mxu0 0.0
  %1407 = vmatprep.subr.mxu0 0.0
  %1408 = vmatpush1.msra.mxu0 0.0
  %1409 = vmatprep.subr.mxu0 0.0
  %1410 = vmatpush1.msra.mxu0 0.0
  %1411 = vmatprep.subr.mxu0 0.0
  %1412 = vmatpush1.msra.mxu0 0.0
  %1413 = vmatprep.subr.mxu0 0.0
  %1414 = vmatpush1.msra.mxu0 0.0
  %1415 = vmatprep.subr.mxu0 0.0
  %1416 = vmatpush1.msra.mxu0 %v67
  %1417 = vmatprep.subr.mxu0 0.0
  %1418 = vmatpush1.msra.mxu0 %v66
  %1419 = vmatprep.subr.mxu0 0.0
  %1420 = vmatpush1.msra.mxu0 %v65
  %1421 = vmatprep.subr.mxu0 0.0
  %1422 = vmatpush1.msra.mxu0 %v64
  %1423 = vmatprep.subr.mxu0 0.0
  %1424 = vmatpush2.msra.mxu0 0.0
  %1425 = vmatprep.subr.mxu0 0.0
  %1426 = vmatpush2.msra.mxu0 0.0
  %1427 = vmatprep.subr.mxu0 0.0
  %1428 = vmatpush2.msra.mxu0 0.0
  %1429 = vmatprep.subr.mxu0 0.0
  %1430 = vmatpush2.msra.mxu0 0.0
  %1431 = vmatprep.subr.mxu0 0.0
  %1432 = vmatpush2.msra.mxu0 0.0
  %1433 = vmatprep.subr.mxu0 0.0
  %1434 = vmatpush2.msra.mxu0 0.0
  %1435 = vmatprep.subr.mxu0 0.0
  %1436 = vmatpush2.msra.mxu0 0.0
  %1437 = vmatprep.subr.mxu0 0.0
  %1438 = vmatpush2.msra.mxu0 0.0
  %1439 = vmatprep.subr.mxu0 0.0
  %1440 = vmatpush2.msra.mxu0 0.0
  %1441 = vmatprep.subr.mxu0 0.0
  %1442 = vmatpush2.msra.mxu0 0.0
  %1443 = vmatprep.subr.mxu0 0.0
  %1444 = vmatpush2.msra.mxu0 0.0
  %1445 = vmatprep.subr.mxu0 0.0
  %1446 = vmatpush2.msra.mxu0 0.0
  %1447 = vmatprep.subr.mxu0 0.0
  %1448 = vmatpush2.msra.mxu0 0.0
  %1449 = vmatprep.subr.mxu0 0.0
  %1450 = vmatpush2.msra.mxu0 0.0
  %1451 = vmatprep.subr.mxu0 0.0
  %1452 = vmatpush2.msra.mxu0 0.0
  %1453 = vmatprep.subr.mxu0 0.0
  %1454 = vmatpush2.msra.mxu0 0.0
  %1455 = vmatprep.mubr.f32.mxu0 0.0
  %1456 = vmatmul.mubr.f32.gmra.mxu0 %v1389
  %v1457 = vpop.f32.mrf.mxu0
  %v1458 = vadd.f32 %v154, %v1457
  %v1459 = vpop.f32.mrf.mxu0
  %1460 = vdwg.mxu0
  %v1461 = vadd.f32 %v1383, %v1458
  %v1462 = vxor.u32 %v1461, 2147483648
  %v1463 = vmul.f32 %v1462, 1.442695
  %v1464 = vpow.pop %v1463
  %v1465 = vadd.f32 %v1464, 1.0
  %v1466 = vrcp.pop %v1465
  %v1467 = vmul.f32 1.0, %v1466
  %1469 = vrot.lane.b32.xlu0 %v1458, 64
  %v1470 = vpop.permute.xlu0 %1469
  %v1472 = vmul.f32 %v1467, %v1470
  %1474 = vrot.lane.b32.xlu0 %v1472, 64
  %v1475 = vpop.permute.xlu0 %1474
  %v1477 = vadd.f32 %v1383, %v1475
  %v1478 = vtanh.pop %v1477
  %v1479 = vsub.f32 1.0, %v1467
  %1481 = vrot.lane.b32.xlu0 %v1478, 96
  %v1482 = vpop.permute.xlu0 %1481
  %v1484 = vmul.f32 %v1479, %v1482
  %v1485 = vmul.f32 %v1467, %v1310
  %v1486 = vadd.f32 %v1484, %v1485
  %v1487 = vld [vmem:[%s13] sm:$0xff]
  %v1488 = vld [vmem:[%s13 + $0x8] sm:$0xff]
  %v1489 = vld [vmem:[%s13 + $0x10] sm:$0xff]
  %v1490 = vld [vmem:[%s13 + $0x18] sm:$0xff]
  %1493 = vrot.lane.b32.xlu0 %v1486, 96
  %v1494 = vpop.permute.xlu0 %1493
  %vm1496 = vcmask 130048
  %v1497 = vsel %vm1496, %v332, %v1494
  %vm1498 = vcmask 254976
  %1499 = vst.msk [vmem:[#allocation2] sm:$0x3] %vm1498, %v1497
  %v1501 = vsel %vm76, %v1497, 0
  %1503 = vmatprep.subr.mxu0 0.0
  %1504 = vmatpush1.msra.mxu0 0.0
  %1505 = vmatprep.subr.mxu0 0.0
  %1506 = vmatpush1.msra.mxu0 0.0
  %1507 = vmatprep.subr.mxu0 0.0
  %1508 = vmatpush1.msra.mxu0 0.0
  %1509 = vmatprep.subr.mxu0 0.0
  %1510 = vmatpush1.msra.mxu0 0.0
  %1511 = vmatprep.subr.mxu0 0.0
  %1512 = vmatpush1.msra.mxu0 0.0
  %1513 = vmatprep.subr.mxu0 0.0
  %1514 = vmatpush1.msra.mxu0 0.0
  %1515 = vmatprep.subr.mxu0 0.0
  %1516 = vmatpush1.msra.mxu0 0.0
  %1517 = vmatprep.subr.mxu0 0.0
  %1518 = vmatpush1.msra.mxu0 0.0
  %1519 = vmatprep.subr.mxu0 0.0
  %1520 = vmatpush1.msra.mxu0 0.0
  %1521 = vmatprep.subr.mxu0 0.0
  %1522 = vmatpush1.msra.mxu0 0.0
  %1523 = vmatprep.subr.mxu0 0.0
  %1524 = vmatpush1.msra.mxu0 0.0
  %1525 = vmatprep.subr.mxu0 0.0
  %1526 = vmatpush1.msra.mxu0 0.0
  %1527 = vmatprep.subr.mxu0 0.0
  %1528 = vmatpush1.msra.mxu0 %v1490
  %1529 = vmatprep.subr.mxu0 0.0
  %1530 = vmatpush1.msra.mxu0 %v1489
  %1531 = vmatprep.subr.mxu0 0.0
  %1532 = vmatpush1.msra.mxu0 %v1488
  %1533 = vmatprep.subr.mxu0 0.0
  %1534 = vmatpush1.msra.mxu0 %v1487
  %1535 = vmatprep.subr.mxu0 0.0
  %1536 = vmatpush2.msra.mxu0 0.0
  %1537 = vmatprep.subr.mxu0 0.0
  %1538 = vmatpush2.msra.mxu0 0.0
  %1539 = vmatprep.subr.mxu0 0.0
  %1540 = vmatpush2.msra.mxu0 0.0
  %1541 = vmatprep.subr.mxu0 0.0
  %1542 = vmatpush2.msra.mxu0 0.0
  %1543 = vmatprep.subr.mxu0 0.0
  %1544 = vmatpush2.msra.mxu0 0.0
  %1545 = vmatprep.subr.mxu0 0.0
  %1546 = vmatpush2.msra.mxu0 0.0
  %1547 = vmatprep.subr.mxu0 0.0
  %1548 = vmatpush2.msra.mxu0 0.0
  %1549 = vmatprep.subr.mxu0 0.0
  %1550 = vmatpush2.msra.mxu0 0.0
  %1551 = vmatprep.subr.mxu0 0.0
  %1552 = vmatpush2.msra.mxu0 0.0
  %1553 = vmatprep.subr.mxu0 0.0
  %1554 = vmatpush2.msra.mxu0 0.0
  %1555 = vmatprep.subr.mxu0 0.0
  %1556 = vmatpush2.msra.mxu0 0.0
  %1557 = vmatprep.subr.mxu0 0.0
  %1558 = vmatpush2.msra.mxu0 0.0
  %1559 = vmatprep.subr.mxu0 0.0
  %1560 = vmatpush2.msra.mxu0 0.0
  %1561 = vmatprep.subr.mxu0 0.0
  %1562 = vmatpush2.msra.mxu0 0.0
  %1563 = vmatprep.subr.mxu0 0.0
  %1564 = vmatpush2.msra.mxu0 0.0
  %1565 = vmatprep.subr.mxu0 0.0
  %1566 = vmatpush2.msra.mxu0 0.0
  %1567 = vmatprep.mubr.f32.mxu0 0.0
  %1568 = vmatmul.mubr.f32.gmra.mxu0 %v1501
  %v1569 = vpop.f32.mrf.mxu0
  %v1570 = vadd.f32 0.0, %v1569
  %v1571 = vpop.f32.mrf.mxu0
  %1572 = vdwg.mxu0
  %vm1573 = vcmask 123904
  %1574 = vst.msk [vmem:[#allocation3] sm:$0x3] %vm1573, %v1570
  %v1577 = vsel %vm1496, %v508, %v1388
  %s1578 = scalar_lea.vmem [#allocation2], 2
  %1579 = vst.msk [vmem:[%s1578] sm:$0x3] %vm1498, %v1577
  %v1581 = vsel %vm76, %v1577, 0
  %1583 = vmatprep.subr.mxu0 0.0
  %1584 = vmatpush1.msra.mxu0 0.0
  %1585 = vmatprep.subr.mxu0 0.0
  %1586 = vmatpush1.msra.mxu0 0.0
  %1587 = vmatprep.subr.mxu0 0.0
  %1588 = vmatpush1.msra.mxu0 0.0
  %1589 = vmatprep.subr.mxu0 0.0
  %1590 = vmatpush1.msra.mxu0 0.0
  %1591 = vmatprep.subr.mxu0 0.0
  %1592 = vmatpush1.msra.mxu0 0.0
  %1593 = vmatprep.subr.mxu0 0.0
  %1594 = vmatpush1.msra.mxu0 0.0
  %1595 = vmatprep.subr.mxu0 0.0
  %1596 = vmatpush1.msra.mxu0 0.0
  %1597 = vmatprep.subr.mxu0 0.0
  %1598 = vmatpush1.msra.mxu0 0.0
  %1599 = vmatprep.subr.mxu0 0.0
  %1600 = vmatpush1.msra.mxu0 0.0
  %1601 = vmatprep.subr.mxu0 0.0
  %1602 = vmatpush1.msra.mxu0 0.0
  %1603 = vmatprep.subr.mxu0 0.0
  %1604 = vmatpush1.msra.mxu0 0.0
  %1605 = vmatprep.subr.mxu0 0.0
  %1606 = vmatpush1.msra.mxu0 0.0
  %1607 = vmatprep.subr.mxu0 0.0
  %1608 = vmatpush1.msra.mxu0 %v1490
  %1609 = vmatprep.subr.mxu0 0.0
  %1610 = vmatpush1.msra.mxu0 %v1489
  %1611 = vmatprep.subr.mxu0 0.0
  %1612 = vmatpush1.msra.mxu0 %v1488
  %1613 = vmatprep.subr.mxu0 0.0
  %1614 = vmatpush1.msra.mxu0 %v1487
  %1615 = vmatprep.subr.mxu0 0.0
  %1616 = vmatpush2.msra.mxu0 0.0
  %1617 = vmatprep.subr.mxu0 0.0
  %1618 = vmatpush2.msra.mxu0 0.0
  %1619 = vmatprep.subr.mxu0 0.0
  %1620 = vmatpush2.msra.mxu0 0.0
  %1621 = vmatprep.subr.mxu0 0.0
  %1622 = vmatpush2.msra.mxu0 0.0
  %1623 = vmatprep.subr.mxu0 0.0
  %1624 = vmatpush2.msra.mxu0 0.0
  %1625 = vmatprep.subr.mxu0 0.0
  %1626 = vmatpush2.msra.mxu0 0.0
  %1627 = vmatprep.subr.mxu0 0.0
  %1628 = vmatpush2.msra.mxu0 0.0
  %1629 = vmatprep.subr.mxu0 0.0
  %1630 = vmatpush2.msra.mxu0 0.0
  %1631 = vmatprep.subr.mxu0 0.0
  %1632 = vmatpush2.msra.mxu0 0.0
  %1633 = vmatprep.subr.mxu0 0.0
  %1634 = vmatpush2.msra.mxu0 0.0
  %1635 = vmatprep.subr.mxu0 0.0
  %1636 = vmatpush2.msra.mxu0 0.0
  %1637 = vmatprep.subr.mxu0 0.0
  %1638 = vmatpush2.msra.mxu0 0.0
  %1639 = vmatprep.subr.mxu0 0.0
  %1640 = vmatpush2.msra.mxu0 0.0
  %1641 = vmatprep.subr.mxu0 0.0
  %1642 = vmatpush2.msra.mxu0 0.0
  %1643 = vmatprep.subr.mxu0 0.0
  %1644 = vmatpush2.msra.mxu0 0.0
  %1645 = vmatprep.subr.mxu0 0.0
  %1646 = vmatpush2.msra.mxu0 0.0
  %1647 = vmatprep.mubr.f32.mxu0 0.0
  %1648 = vmatmul.mubr.f32.gmra.mxu0 %v1581
  %v1649 = vpop.f32.mrf.mxu0
  %v1650 = vadd.f32 0.0, %v1649
  %v1651 = vpop.f32.mrf.mxu0
  %1652 = vdwg.mxu0
  %s1653 = scalar_lea.vmem [#allocation3], 2
  %1654 = vst.msk [vmem:[%s1653] sm:$0x3] %vm1573, %v1650
  %v1657 = vsel %vm1496, %v684, %v1212
  %s1658 = scalar_lea.vmem [#allocation2], 4
  %1659 = vst.msk [vmem:[%s1658] sm:$0x3] %vm1498, %v1657
  %v1661 = vsel %vm76, %v1657, 0
  %1663 = vmatprep.subr.mxu0 0.0
  %1664 = vmatpush1.msra.mxu0 0.0
  %1665 = vmatprep.subr.mxu0 0.0
  %1666 = vmatpush1.msra.mxu0 0.0
  %1667 = vmatprep.subr.mxu0 0.0
  %1668 = vmatpush1.msra.mxu0 0.0
  %1669 = vmatprep.subr.mxu0 0.0
  %1670 = vmatpush1.msra.mxu0 0.0
  %1671 = vmatprep.subr.mxu0 0.0
  %1672 = vmatpush1.msra.mxu0 0.0
  %1673 = vmatprep.subr.mxu0 0.0
  %1674 = vmatpush1.msra.mxu0 0.0
  %1675 = vmatprep.subr.mxu0 0.0
  %1676 = vmatpush1.msra.mxu0 0.0
  %1677 = vmatprep.subr.mxu0 0.0
  %1678 = vmatpush1.msra.mxu0 0.0
  %1679 = vmatprep.subr.mxu0 0.0
  %1680 = vmatpush1.msra.mxu0 0.0
  %1681 = vmatprep.subr.mxu0 0.0
  %1682 = vmatpush1.msra.mxu0 0.0
  %1683 = vmatprep.subr.mxu0 0.0
  %1684 = vmatpush1.msra.mxu0 0.0
  %1685 = vmatprep.subr.mxu0 0.0
  %1686 = vmatpush1.msra.mxu0 0.0
  %1687 = vmatprep.subr.mxu0 0.0
  %1688 = vmatpush1.msra.mxu0 %v1490
  %1689 = vmatprep.subr.mxu0 0.0
  %1690 = vmatpush1.msra.mxu0 %v1489
  %1691 = vmatprep.subr.mxu0 0.0
  %1692 = vmatpush1.msra.mxu0 %v1488
  %1693 = vmatprep.subr.mxu0 0.0
  %1694 = vmatpush1.msra.mxu0 %v1487
  %1695 = vmatprep.subr.mxu0 0.0
  %1696 = vmatpush2.msra.mxu0 0.0
  %1697 = vmatprep.subr.mxu0 0.0
  %1698 = vmatpush2.msra.mxu0 0.0
  %1699 = vmatprep.subr.mxu0 0.0
  %1700 = vmatpush2.msra.mxu0 0.0
  %1701 = vmatprep.subr.mxu0 0.0
  %1702 = vmatpush2.msra.mxu0 0.0
  %1703 = vmatprep.subr.mxu0 0.0
  %1704 = vmatpush2.msra.mxu0 0.0
  %1705 = vmatprep.subr.mxu0 0.0
  %1706 = vmatpush2.msra.mxu0 0.0
  %1707 = vmatprep.subr.mxu0 0.0
  %1708 = vmatpush2.msra.mxu0 0.0
  %1709 = vmatprep.subr.mxu0 0.0
  %1710 = vmatpush2.msra.mxu0 0.0
  %1711 = vmatprep.subr.mxu0 0.0
  %1712 = vmatpush2.msra.mxu0 0.0
  %1713 = vmatprep.subr.mxu0 0.0
  %1714 = vmatpush2.msra.mxu0 0.0
  %1715 = vmatprep.subr.mxu0 0.0
  %1716 = vmatpush2.msra.mxu0 0.0
  %1717 = vmatprep.subr.mxu0 0.0
  %1718 = vmatpush2.msra.mxu0 0.0
  %1719 = vmatprep.subr.mxu0 0.0
  %1720 = vmatpush2.msra.mxu0 0.0
  %1721 = vmatprep.subr.mxu0 0.0
  %1722 = vmatpush2.msra.mxu0 0.0
  %1723 = vmatprep.subr.mxu0 0.0
  %1724 = vmatpush2.msra.mxu0 0.0
  %1725 = vmatprep.subr.mxu0 0.0
  %1726 = vmatpush2.msra.mxu0 0.0
  %1727 = vmatprep.mubr.f32.mxu0 0.0
  %1728 = vmatmul.mubr.f32.gmra.mxu0 %v1661
  %v1729 = vpop.f32.mrf.mxu0
  %v1730 = vadd.f32 0.0, %v1729
  %v1731 = vpop.f32.mrf.mxu0
  %1732 = vdwg.mxu0
  %s1733 = scalar_lea.vmem [#allocation3], 4
  %1734 = vst.msk [vmem:[%s1733] sm:$0x3] %vm1573, %v1730
  %v1737 = vsel %vm1496, %v860, %v1036
  %s1738 = scalar_lea.vmem [#allocation2], 6
  %1739 = vst.msk [vmem:[%s1738] sm:$0x3] %vm1498, %v1737
  %v1741 = vsel %vm76, %v1737, 0
  %1743 = vmatprep.subr.mxu0 0.0
  %1744 = vmatpush1.msra.mxu0 0.0
  %1745 = vmatprep.subr.mxu0 0.0
  %1746 = vmatpush1.msra.mxu0 0.0
  %1747 = vmatprep.subr.mxu0 0.0
  %1748 = vmatpush1.msra.mxu0 0.0
  %1749 = vmatprep.subr.mxu0 0.0
  %1750 = vmatpush1.msra.mxu0 0.0
  %1751 = vmatprep.subr.mxu0 0.0
  %1752 = vmatpush1.msra.mxu0 0.0
  %1753 = vmatprep.subr.mxu0 0.0
  %1754 = vmatpush1.msra.mxu0 0.0
  %1755 = vmatprep.subr.mxu0 0.0
  %1756 = vmatpush1.msra.mxu0 0.0
  %1757 = vmatprep.subr.mxu0 0.0
  %1758 = vmatpush1.msra.mxu0 0.0
  %1759 = vmatprep.subr.mxu0 0.0
  %1760 = vmatpush1.msra.mxu0 0.0
  %1761 = vmatprep.subr.mxu0 0.0
  %1762 = vmatpush1.msra.mxu0 0.0
  %1763 = vmatprep.subr.mxu0 0.0
  %1764 = vmatpush1.msra.mxu0 0.0
  %1765 = vmatprep.subr.mxu0 0.0
  %1766 = vmatpush1.msra.mxu0 0.0
  %1767 = vmatprep.subr.mxu0 0.0
  %1768 = vmatpush1.msra.mxu0 %v1490
  %1769 = vmatprep.subr.mxu0 0.0
  %1770 = vmatpush1.msra.mxu0 %v1489
  %1771 = vmatprep.subr.mxu0 0.0
  %1772 = vmatpush1.msra.mxu0 %v1488
  %1773 = vmatprep.subr.mxu0 0.0
  %1774 = vmatpush1.msra.mxu0 %v1487
  %1775 = vmatprep.subr.mxu0 0.0
  %1776 = vmatpush2.msra.mxu0 0.0
  %1777 = vmatprep.subr.mxu0 0.0
  %1778 = vmatpush2.msra.mxu0 0.0
  %1779 = vmatprep.subr.mxu0 0.0
  %1780 = vmatpush2.msra.mxu0 0.0
  %1781 = vmatprep.subr.mxu0 0.0
  %1782 = vmatpush2.msra.mxu0 0.0
  %1783 = vmatprep.subr.mxu0 0.0
  %1784 = vmatpush2.msra.mxu0 0.0
  %1785 = vmatprep.subr.mxu0 0.0
  %1786 = vmatpush2.msra.mxu0 0.0
  %1787 = vmatprep.subr.mxu0 0.0
  %1788 = vmatpush2.msra.mxu0 0.0
  %1789 = vmatprep.subr.mxu0 0.0
  %1790 = vmatpush2.msra.mxu0 0.0
  %1791 = vmatprep.subr.mxu0 0.0
  %1792 = vmatpush2.msra.mxu0 0.0
  %1793 = vmatprep.subr.mxu0 0.0
  %1794 = vmatpush2.msra.mxu0 0.0
  %1795 = vmatprep.subr.mxu0 0.0
  %1796 = vmatpush2.msra.mxu0 0.0
  %1797 = vmatprep.subr.mxu0 0.0
  %1798 = vmatpush2.msra.mxu0 0.0
  %1799 = vmatprep.subr.mxu0 0.0
  %1800 = vmatpush2.msra.mxu0 0.0
  %1801 = vmatprep.subr.mxu0 0.0
  %1802 = vmatpush2.msra.mxu0 0.0
  %1803 = vmatprep.subr.mxu0 0.0
  %1804 = vmatpush2.msra.mxu0 0.0
  %1805 = vmatprep.subr.mxu0 0.0
  %1806 = vmatpush2.msra.mxu0 0.0
  %1807 = vmatprep.mubr.f32.mxu0 0.0
  %1808 = vmatmul.mubr.f32.gmra.mxu0 %v1741
  %v1809 = vpop.f32.mrf.mxu0
  %v1810 = vadd.f32 0.0, %v1809
  %v1811 = vpop.f32.mrf.mxu0
  %1812 = vdwg.mxu0
  %s1813 = scalar_lea.vmem [#allocation3], 6
  %1814 = vst.msk [vmem:[%s1813] sm:$0x3] %vm1573, %v1810
  %v1815 = vsel %vm1496, %v1036, %v860
  %s1816 = scalar_lea.vmem [#allocation2], 8
  %1817 = vst.msk [vmem:[%s1816] sm:$0x3] %vm1498, %v1815
  %v1819 = vsel %vm76, %v1815, 0
  %1821 = vmatprep.subr.mxu0 0.0
  %1822 = vmatpush1.msra.mxu0 0.0
  %1823 = vmatprep.subr.mxu0 0.0
  %1824 = vmatpush1.msra.mxu0 0.0
  %1825 = vmatprep.subr.mxu0 0.0
  %1826 = vmatpush1.msra.mxu0 0.0
  %1827 = vmatprep.subr.mxu0 0.0
  %1828 = vmatpush1.msra.mxu0 0.0
  %1829 = vmatprep.subr.mxu0 0.0
  %1830 = vmatpush1.msra.mxu0 0.0
  %1831 = vmatprep.subr.mxu0 0.0
  %1832 = vmatpush1.msra.mxu0 0.0
  %1833 = vmatprep.subr.mxu0 0.0
  %1834 = vmatpush1.msra.mxu0 0.0
  %1835 = vmatprep.subr.mxu0 0.0
  %1836 = vmatpush1.msra.mxu0 0.0
  %1837 = vmatprep.subr.mxu0 0.0
  %1838 = vmatpush1.msra.mxu0 0.0
  %1839 = vmatprep.subr.mxu0 0.0
  %1840 = vmatpush1.msra.mxu0 0.0
  %1841 = vmatprep.subr.mxu0 0.0
  %1842 = vmatpush1.msra.mxu0 0.0
  %1843 = vmatprep.subr.mxu0 0.0
  %1844 = vmatpush1.msra.mxu0 0.0
  %1845 = vmatprep.subr.mxu0 0.0
  %1846 = vmatpush1.msra.mxu0 %v1490
  %1847 = vmatprep.subr.mxu0 0.0
  %1848 = vmatpush1.msra.mxu0 %v1489
  %1849 = vmatprep.subr.mxu0 0.0
  %1850 = vmatpush1.msra.mxu0 %v1488
  %1851 = vmatprep.subr.mxu0 0.0
  %1852 = vmatpush1.msra.mxu0 %v1487
  %1853 = vmatprep.subr.mxu0 0.0
  %1854 = vmatpush2.msra.mxu0 0.0
  %1855 = vmatprep.subr.mxu0 0.0
  %1856 = vmatpush2.msra.mxu0 0.0
  %1857 = vmatprep.subr.mxu0 0.0
  %1858 = vmatpush2.msra.mxu0 0.0
  %1859 = vmatprep.subr.mxu0 0.0
  %1860 = vmatpush2.msra.mxu0 0.0
  %1861 = vmatprep.subr.mxu0 0.0
  %1862 = vmatpush2.msra.mxu0 0.0
  %1863 = vmatprep.subr.mxu0 0.0
  %1864 = vmatpush2.msra.mxu0 0.0
  %1865 = vmatprep.subr.mxu0 0.0
  %1866 = vmatpush2.msra.mxu0 0.0
  %1867 = vmatprep.subr.mxu0 0.0
  %1868 = vmatpush2.msra.mxu0 0.0
  %1869 = vmatprep.subr.mxu0 0.0
  %1870 = vmatpush2.msra.mxu0 0.0
  %1871 = vmatprep.subr.mxu0 0.0
  %1872 = vmatpush2.msra.mxu0 0.0
  %1873 = vmatprep.subr.mxu0 0.0
  %1874 = vmatpush2.msra.mxu0 0.0
  %1875 = vmatprep.subr.mxu0 0.0
  %1876 = vmatpush2.msra.mxu0 0.0
  %1877 = vmatprep.subr.mxu0 0.0
  %1878 = vmatpush2.msra.mxu0 0.0
  %1879 = vmatprep.subr.mxu0 0.0
  %1880 = vmatpush2.msra.mxu0 0.0
  %1881 = vmatprep.subr.mxu0 0.0
  %1882 = vmatpush2.msra.mxu0 0.0
  %1883 = vmatprep.subr.mxu0 0.0
  %1884 = vmatpush2.msra.mxu0 0.0
  %1885 = vmatprep.mubr.f32.mxu0 0.0
  %1886 = vmatmul.mubr.f32.gmra.mxu0 %v1819
  %v1887 = vpop.f32.mrf.mxu0
  %v1888 = vadd.f32 0.0, %v1887
  %v1889 = vpop.f32.mrf.mxu0
  %1890 = vdwg.mxu0
  %s1891 = scalar_lea.vmem [#allocation3], 8
  %1892 = vst.msk [vmem:[%s1891] sm:$0x3] %vm1573, %v1888
  %v1893 = vsel %vm1496, %v1212, %v684
  %s1894 = scalar_lea.vmem [#allocation2], 10
  %1895 = vst.msk [vmem:[%s1894] sm:$0x3] %vm1498, %v1893
  %v1897 = vsel %vm76, %v1893, 0
  %1899 = vmatprep.subr.mxu0 0.0
  %1900 = vmatpush1.msra.mxu0 0.0
  %1901 = vmatprep.subr.mxu0 0.0
  %1902 = vmatpush1.msra.mxu0 0.0
  %1903 = vmatprep.subr.mxu0 0.0
  %1904 = vmatpush1.msra.mxu0 0.0
  %1905 = vmatprep.subr.mxu0 0.0
  %1906 = vmatpush1.msra.mxu0 0.0
  %1907 = vmatprep.subr.mxu0 0.0
  %1908 = vmatpush1.msra.mxu0 0.0
  %1909 = vmatprep.subr.mxu0 0.0
  %1910 = vmatpush1.msra.mxu0 0.0
  %1911 = vmatprep.subr.mxu0 0.0
  %1912 = vmatpush1.msra.mxu0 0.0
  %1913 = vmatprep.subr.mxu0 0.0
  %1914 = vmatpush1.msra.mxu0 0.0
  %1915 = vmatprep.subr.mxu0 0.0
  %1916 = vmatpush1.msra.mxu0 0.0
  %1917 = vmatprep.subr.mxu0 0.0
  %1918 = vmatpush1.msra.mxu0 0.0
  %1919 = vmatprep.subr.mxu0 0.0
  %1920 = vmatpush1.msra.mxu0 0.0
  %1921 = vmatprep.subr.mxu0 0.0
  %1922 = vmatpush1.msra.mxu0 0.0
  %1923 = vmatprep.subr.mxu0 0.0
  %1924 = vmatpush1.msra.mxu0 %v1490
  %1925 = vmatprep.subr.mxu0 0.0
  %1926 = vmatpush1.msra.mxu0 %v1489
  %1927 = vmatprep.subr.mxu0 0.0
  %1928 = vmatpush1.msra.mxu0 %v1488
  %1929 = vmatprep.subr.mxu0 0.0
  %1930 = vmatpush1.msra.mxu0 %v1487
  %1931 = vmatprep.subr.mxu0 0.0
  %1932 = vmatpush2.msra.mxu0 0.0
  %1933 = vmatprep.subr.mxu0 0.0
  %1934 = vmatpush2.msra.mxu0 0.0
  %1935 = vmatprep.subr.mxu0 0.0
  %1936 = vmatpush2.msra.mxu0 0.0
  %1937 = vmatprep.subr.mxu0 0.0
  %1938 = vmatpush2.msra.mxu0 0.0
  %1939 = vmatprep.subr.mxu0 0.0
  %1940 = vmatpush2.msra.mxu0 0.0
  %1941 = vmatprep.subr.mxu0 0.0
  %1942 = vmatpush2.msra.mxu0 0.0
  %1943 = vmatprep.subr.mxu0 0.0
  %1944 = vmatpush2.msra.mxu0 0.0
  %1945 = vmatprep.subr.mxu0 0.0
  %1946 = vmatpush2.msra.mxu0 0.0
  %1947 = vmatprep.subr.mxu0 0.0
  %1948 = vmatpush2.msra.mxu0 0.0
  %1949 = vmatprep.subr.mxu0 0.0
  %1950 = vmatpush2.msra.mxu0 0.0
  %1951 = vmatprep.subr.mxu0 0.0
  %1952 = vmatpush2.msra.mxu0 0.0
  %1953 = vmatprep.subr.mxu0 0.0
  %1954 = vmatpush2.msra.mxu0 0.0
  %1955 = vmatprep.subr.mxu0 0.0
  %1956 = vmatpush2.msra.mxu0 0.0
  %1957 = vmatprep.subr.mxu0 0.0
  %1958 = vmatpush2.msra.mxu0 0.0
  %1959 = vmatprep.subr.mxu0 0.0
  %1960 = vmatpush2.msra.mxu0 0.0
  %1961 = vmatprep.subr.mxu0 0.0
  %1962 = vmatpush2.msra.mxu0 0.0
  %1963 = vmatprep.mubr.f32.mxu0 0.0
  %1964 = vmatmul.mubr.f32.gmra.mxu0 %v1897
  %v1965 = vpop.f32.mrf.mxu0
  %v1966 = vadd.f32 0.0, %v1965
  %v1967 = vpop.f32.mrf.mxu0
  %1968 = vdwg.mxu0
  %s1969 = scalar_lea.vmem [#allocation3], 10
  %1970 = vst.msk [vmem:[%s1969] sm:$0x3] %vm1573, %v1966
  %v1971 = vsel %vm1496, %v1388, %v508
  %s1972 = scalar_lea.vmem [#allocation2], 12
  %1973 = vst.msk [vmem:[%s1972] sm:$0x3] %vm1498, %v1971
  %v1975 = vsel %vm76, %v1971, 0
  %1977 = vmatprep.subr.mxu0 0.0
  %1978 = vmatpush1.msra.mxu0 0.0
  %1979 = vmatprep.subr.mxu0 0.0
  %1980 = vmatpush1.msra.mxu0 0.0
  %1981 = vmatprep.subr.mxu0 0.0
  %1982 = vmatpush1.msra.mxu0 0.0
  %1983 = vmatprep.subr.mxu0 0.0
  %1984 = vmatpush1.msra.mxu0 0.0
  %1985 = vmatprep.subr.mxu0 0.0
  %1986 = vmatpush1.msra.mxu0 0.0
  %1987 = vmatprep.subr.mxu0 0.0
  %1988 = vmatpush1.msra.mxu0 0.0
  %1989 = vmatprep.subr.mxu0 0.0
  %1990 = vmatpush1.msra.mxu0 0.0
  %1991 = vmatprep.subr.mxu0 0.0
  %1992 = vmatpush1.msra.mxu0 0.0
  %1993 = vmatprep.subr.mxu0 0.0
  %1994 = vmatpush1.msra.mxu0 0.0
  %1995 = vmatprep.subr.mxu0 0.0
  %1996 = vmatpush1.msra.mxu0 0.0
  %1997 = vmatprep.subr.mxu0 0.0
  %1998 = vmatpush1.msra.mxu0 0.0
  %1999 = vmatprep.subr.mxu0 0.0
  %2000 = vmatpush1.msra.mxu0 0.0
  %2001 = vmatprep.subr.mxu0 0.0
  %2002 = vmatpush1.msra.mxu0 %v1490
  %2003 = vmatprep.subr.mxu0 0.0
  %2004 = vmatpush1.msra.mxu0 %v1489
  %2005 = vmatprep.subr.mxu0 0.0
  %2006 = vmatpush1.msra.mxu0 %v1488
  %2007 = vmatprep.subr.mxu0 0.0
  %2008 = vmatpush1.msra.mxu0 %v1487
  %2009 = vmatprep.subr.mxu0 0.0
  %2010 = vmatpush2.msra.mxu0 0.0
  %2011 = vmatprep.subr.mxu0 0.0
  %2012 = vmatpush2.msra.mxu0 0.0
  %2013 = vmatprep.subr.mxu0 0.0
  %2014 = vmatpush2.msra.mxu0 0.0
  %2015 = vmatprep.subr.mxu0 0.0
  %2016 = vmatpush2.msra.mxu0 0.0
  %2017 = vmatprep.subr.mxu0 0.0
  %2018 = vmatpush2.msra.mxu0 0.0
  %2019 = vmatprep.subr.mxu0 0.0
  %2020 = vmatpush2.msra.mxu0 0.0
  %2021 = vmatprep.subr.mxu0 0.0
  %2022 = vmatpush2.msra.mxu0 0.0
  %2023 = vmatprep.subr.mxu0 0.0
  %2024 = vmatpush2.msra.mxu0 0.0
  %2025 = vmatprep.subr.mxu0 0.0
  %2026 = vmatpush2.msra.mxu0 0.0
  %2027 = vmatprep.subr.mxu0 0.0
  %2028 = vmatpush2.msra.mxu0 0.0
  %2029 = vmatprep.subr.mxu0 0.0
  %2030 = vmatpush2.msra.mxu0 0.0
  %2031 = vmatprep.subr.mxu0 0.0
  %2032 = vmatpush2.msra.mxu0 0.0
  %2033 = vmatprep.subr.mxu0 0.0
  %2034 = vmatpush2.msra.mxu0 0.0
  %2035 = vmatprep.subr.mxu0 0.0
  %2036 = vmatpush2.msra.mxu0 0.0
  %2037 = vmatprep.subr.mxu0 0.0
  %2038 = vmatpush2.msra.mxu0 0.0
  %2039 = vmatprep.subr.mxu0 0.0
  %2040 = vmatpush2.msra.mxu0 0.0
  %2041 = vmatprep.mubr.f32.mxu0 0.0
  %2042 = vmatmul.mubr.f32.gmra.mxu0 %v1975
  %v2043 = vpop.f32.mrf.mxu0
  %v2044 = vadd.f32 0.0, %v2043
  %v2045 = vpop.f32.mrf.mxu0
  %2046 = vdwg.mxu0
  %s2047 = scalar_lea.vmem [#allocation3], 12
  %2048 = vst.msk [vmem:[%s2047] sm:$0x3] %vm1573, %v2044
  %v2049 = vsel %vm1496, %v1494, %v332
  %s2050 = scalar_lea.vmem [#allocation2], 14
  %2051 = vst.msk [vmem:[%s2050] sm:$0x3] %vm1498, %v2049
  %v2053 = vsel %vm76, %v2049, 0
  %2055 = vmatprep.subr.mxu0 0.0
  %2056 = vmatpush1.msra.mxu0 0.0
  %2057 = vmatprep.subr.mxu0 0.0
  %2058 = vmatpush1.msra.mxu0 0.0
  %2059 = vmatprep.subr.mxu0 0.0
  %2060 = vmatpush1.msra.mxu0 0.0
  %2061 = vmatprep.subr.mxu0 0.0
  %2062 = vmatpush1.msra.mxu0 0.0
  %2063 = vmatprep.subr.mxu0 0.0
  %2064 = vmatpush1.msra.mxu0 0.0
  %2065 = vmatprep.subr.mxu0 0.0
  %2066 = vmatpush1.msra.mxu0 0.0
  %2067 = vmatprep.subr.mxu0 0.0
  %2068 = vmatpush1.msra.mxu0 0.0
  %2069 = vmatprep.subr.mxu0 0.0
  %2070 = vmatpush1.msra.mxu0 0.0
  %2071 = vmatprep.subr.mxu0 0.0
  %2072 = vmatpush1.msra.mxu0 0.0
  %2073 = vmatprep.subr.mxu0 0.0
  %2074 = vmatpush1.msra.mxu0 0.0
  %2075 = vmatprep.subr.mxu0 0.0
  %2076 = vmatpush1.msra.mxu0 0.0
  %2077 = vmatprep.subr.mxu0 0.0
  %2078 = vmatpush1.msra.mxu0 0.0
  %2079 = vmatprep.subr.mxu0 0.0
  %2080 = vmatpush1.msra.mxu0 %v1490
  %2081 = vmatprep.subr.mxu0 0.0
  %2082 = vmatpush1.msra.mxu0 %v1489
  %2083 = vmatprep.subr.mxu0 0.0
  %2084 = vmatpush1.msra.mxu0 %v1488
  %2085 = vmatprep.subr.mxu0 0.0
  %2086 = vmatpush1.msra.mxu0 %v1487
  %2087 = vmatprep.subr.mxu0 0.0
  %2088 = vmatpush2.msra.mxu0 0.0
  %2089 = vmatprep.subr.mxu0 0.0
  %2090 = vmatpush2.msra.mxu0 0.0
  %2091 = vmatprep.subr.mxu0 0.0
  %2092 = vmatpush2.msra.mxu0 0.0
  %2093 = vmatprep.subr.mxu0 0.0
  %2094 = vmatpush2.msra.mxu0 0.0
  %2095 = vmatprep.subr.mxu0 0.0
  %2096 = vmatpush2.msra.mxu0 0.0
  %2097 = vmatprep.subr.mxu0 0.0
  %2098 = vmatpush2.msra.mxu0 0.0
  %2099 = vmatprep.subr.mxu0 0.0
  %2100 = vmatpush2.msra.mxu0 0.0
  %2101 = vmatprep.subr.mxu0 0.0
  %2102 = vmatpush2.msra.mxu0 0.0
  %2103 = vmatprep.subr.mxu0 0.0
  %2104 = vmatpush2.msra.mxu0 0.0
  %2105 = vmatprep.subr.mxu0 0.0
  %2106 = vmatpush2.msra.mxu0 0.0
  %2107 = vmatprep.subr.mxu0 0.0
  %2108 = vmatpush2.msra.mxu0 0.0
  %2109 = vmatprep.subr.mxu0 0.0
  %2110 = vmatpush2.msra.mxu0 0.0
  %2111 = vmatprep.subr.mxu0 0.0
  %2112 = vmatpush2.msra.mxu0 0.0
  %2113 = vmatprep.subr.mxu0 0.0
  %2114 = vmatpush2.msra.mxu0 0.0
  %2115 = vmatprep.subr.mxu0 0.0
  %2116 = vmatpush2.msra.mxu0 0.0
  %2117 = vmatprep.subr.mxu0 0.0
  %2118 = vmatpush2.msra.mxu0 0.0
  %2119 = vmatprep.mubr.f32.mxu0 0.0
  %2120 = vmatmul.mubr.f32.gmra.mxu0 %v2053
  %v2121 = vpop.f32.mrf.mxu0
  %v2122 = vadd.f32 0.0, %v2121
  %v2123 = vpop.f32.mrf.mxu0
  %2124 = vdwg.mxu0
  %s2125 = scalar_lea.vmem [#allocation3], 14
  %2126 = vst.msk [vmem:[%s2125] sm:$0x3] %vm1573, %v2122
  %v2127 = vlaneseq
  %v2128 = vand.u32 %v2127, 127
  %vm2129 = vcmp.eq.s32.totalorder %v2128, 1
  %v2130 = vsel %vm2129, 1, 0
  %v2131 = vcvt.s32.f32 %v2130
  %2132 = vst.msk [vmem:[#allocation4] sm:$0x3] %vm1498, %v2131
  loop: start=1, step=1, limit=8
  $region74: #{eda_cs_forward.1} parent=0 // loop_pre_header
    _
  $region75: #{eda_cs_forward.1} parent=0 // loop_header
    %s2134 = sphi 1, %s2138
    %p2135 = scmp.ge.s32.totalorder %s2134, 8
    %v2139 = vphi %v1486, %v2651
    %v2140 = vphi 0.0, %v2651
  $region76: #{eda_cs_forward.1} parent=0 // loop_header_branch
    %2137 = sbr.rel (%p2135) target = $region80
  $region77: #{eda_cs_forward.1} parent=0 // loop_body
    %s2141 = ssub.s32 %s2134, 1
    %s2142 = smul.u32 %s2141, 2
    %s2143 = scalar_lea.vmem %s1, %s2142
    %v2144 = vld [vmem:[%s2143] sm:$0x3]
    %v2145 = vld [vmem:[#allocation3] sm:$0x3]
    %v2146 = vld [vmem:[#allocation3 + $0x2] sm:$0x3]
    %v2147 = vld [vmem:[#allocation3 + $0x4] sm:$0x3]
    %v2148 = vld [vmem:[#allocation3 + $0x6] sm:$0x3]
    %v2149 = vld [vmem:[#allocation3 + $0x8] sm:$0x3]
    %v2150 = vld [vmem:[#allocation3 + $0xa] sm:$0x3]
    %v2151 = vld [vmem:[#allocation3 + $0xc] sm:$0x3]
    %v2152 = vld [vmem:[#allocation3 + $0xe] sm:$0x3]
    %v2153 = vld [vmem:[#allocation2] sm:$0x3]
    %v2154 = vld [vmem:[#allocation2 + $0x2] sm:$0x3]
    %v2155 = vld [vmem:[#allocation2 + $0x4] sm:$0x3]
    %v2156 = vld [vmem:[#allocation2 + $0x6] sm:$0x3]
    %v2157 = vld [vmem:[#allocation2 + $0x8] sm:$0x3]
    %v2158 = vld [vmem:[#allocation2 + $0xa] sm:$0x3]
    %v2159 = vld [vmem:[#allocation2 + $0xc] sm:$0x3]
    %v2160 = vld [vmem:[#allocation2 + $0xe] sm:$0x3]
    %v2161 = vld [vmem:[%s12] sm:$0xff]
    %v2162 = vld [vmem:[%s12 + $0x8] sm:$0xff]
    %2164 = vrot.lane.b32.xlu0 %v2140, 96
    %v2165 = vpop.permute.xlu0 %2164
    %v2166 = vsel %vm1496, %v2165, 0
    %2168 = vmatprep.subr.mxu0 0.0
    %2169 = vmatpush1.msra.mxu0 0.0
    %2170 = vmatprep.subr.mxu0 0.0
    %2171 = vmatpush1.msra.mxu0 0.0
    %2172 = vmatprep.subr.mxu0 0.0
    %2173 = vmatpush1.msra.mxu0 0.0
    %2174 = vmatprep.subr.mxu0 0.0
    %2175 = vmatpush1.msra.mxu0 0.0
    %2176 = vmatprep.subr.mxu0 0.0
    %2177 = vmatpush1.msra.mxu0 0.0
    %2178 = vmatprep.subr.mxu0 0.0
    %2179 = vmatpush1.msra.mxu0 0.0
    %2180 = vmatprep.subr.mxu0 0.0
    %2181 = vmatpush1.msra.mxu0 0.0
    %2182 = vmatprep.subr.mxu0 0.0
    %2183 = vmatpush1.msra.mxu0 0.0
    %2184 = vmatprep.subr.mxu0 0.0
    %2185 = vmatpush1.msra.mxu0 0.0
    %2186 = vmatprep.subr.mxu0 0.0
    %2187 = vmatpush1.msra.mxu0 0.0
    %2188 = vmatprep.subr.mxu0 0.0
    %2189 = vmatpush1.msra.mxu0 0.0
    %2190 = vmatprep.subr.mxu0 0.0
    %2191 = vmatpush1.msra.mxu0 0.0
    %2192 = vmatprep.subr.mxu0 0.0
    %2193 = vmatpush1.msra.mxu0 0.0
    %2194 = vmatprep.subr.mxu0 0.0
    %2195 = vmatpush1.msra.mxu0 0.0
    %2196 = vmatprep.subr.mxu0 0.0
    %2197 = vmatpush1.msra.mxu0 %v2162
    %2198 = vmatprep.subr.mxu0 0.0
    %2199 = vmatpush1.msra.mxu0 %v2161
    %2200 = vmatprep.subr.mxu0 0.0
    %2201 = vmatpush2.msra.mxu0 0.0
    %2202 = vmatprep.subr.mxu0 0.0
    %2203 = vmatpush2.msra.mxu0 0.0
    %2204 = vmatprep.subr.mxu0 0.0
    %2205 = vmatpush2.msra.mxu0 0.0
    %2206 = vmatprep.subr.mxu0 0.0
    %2207 = vmatpush2.msra.mxu0 0.0
    %2208 = vmatprep.subr.mxu0 0.0
    %2209 = vmatpush2.msra.mxu0 0.0
    %2210 = vmatprep.subr.mxu0 0.0
    %2211 = vmatpush2.msra.mxu0 0.0
    %2212 = vmatprep.subr.mxu0 0.0
    %2213 = vmatpush2.msra.mxu0 0.0
    %2214 = vmatprep.subr.mxu0 0.0
    %2215 = vmatpush2.msra.mxu0 0.0
    %2216 = vmatprep.subr.mxu0 0.0
    %2217 = vmatpush2.msra.mxu0 0.0
    %2218 = vmatprep.subr.mxu0 0.0
    %2219 = vmatpush2.msra.mxu0 0.0
    %2220 = vmatprep.subr.mxu0 0.0
    %2221 = vmatpush2.msra.mxu0 0.0
    %2222 = vmatprep.subr.mxu0 0.0
    %2223 = vmatpush2.msra.mxu0 0.0
    %2224 = vmatprep.subr.mxu0 0.0
    %2225 = vmatpush2.msra.mxu0 0.0
    %2226 = vmatprep.subr.mxu0 0.0
    %2227 = vmatpush2.msra.mxu0 0.0
    %2228 = vmatprep.subr.mxu0 0.0
    %2229 = vmatpush2.msra.mxu0 0.0
    %2230 = vmatprep.subr.mxu0 0.0
    %2231 = vmatpush2.msra.mxu0 0.0
    %2232 = vmatprep.mubr.f32.mxu0 0.0
    %2233 = vmatmul.mubr.f32.gmra.mxu0 %v2166
    %v2234 = vpop.f32.mrf.mxu0
    %v2235 = vadd.f32 0.0, %v2234
    %v2236 = vpop.f32.mrf.mxu0
    %2237 = vdwg.mxu0
    %v2238 = vadd.f32 %v2145, %v2235
    %v2239 = vadd.f32 %v2146, %v2235
    %v2240 = vadd.f32 %v2147, %v2235
    %v2241 = vadd.f32 %v2148, %v2235
    %v2242 = vadd.f32 %v2149, %v2235
    %v2243 = vadd.f32 %v2150, %v2235
    %v2244 = vadd.f32 %v2151, %v2235
    %v2245 = vadd.f32 %v2152, %v2235
    %v2246 = vtanh.pop %v2238
    %v2247 = vtanh.pop %v2239
    %v2248 = vtanh.pop %v2240
    %v2249 = vtanh.pop %v2241
    %v2250 = vtanh.pop %v2242
    %v2251 = vtanh.pop %v2243
    %v2252 = vtanh.pop %v2244
    %v2253 = vtanh.pop %v2245
    %v2254 = vld [vmem:[%s14] sm:$0x1]
    %v2256 = vlaneseq
    %v2257 = vshrl.u32 %v2256, 7
    %v2258 = vsub.s32 0, %v2257
    %v2259 = vrot.slane %v2254, %v2258
    %v2261 = vmul.f32 %v2246, %v2259
    %v2262 = vmul.f32 %v2247, %v2259
    %v2263 = vmul.f32 %v2248, %v2259
    %v2264 = vmul.f32 %v2249, %v2259
    %v2265 = vmul.f32 %v2250, %v2259
    %v2266 = vmul.f32 %v2251, %v2259
    %v2267 = vmul.f32 %v2252, %v2259
    %v2268 = vmul.f32 %v2253, %v2259
    %v2269 = vsel %vm1573, %v2261, 0.0
    %2270 = vadd.xlane.f32.xlu0 %v2269
    %v2271 = vpop.xlane.xlu0 %2270
    %v2272 = vsel %vm1573, %v2262, 0.0
    %2273 = vadd.xlane.f32.xlu0 %v2272
    %v2274 = vpop.xlane.xlu0 %2273
    %v2275 = vsel %vm1573, %v2263, 0.0
    %2276 = vadd.xlane.f32.xlu0 %v2275
    %v2277 = vpop.xlane.xlu0 %2276
    %v2278 = vsel %vm1573, %v2264, 0.0
    %2279 = vadd.xlane.f32.xlu0 %v2278
    %v2280 = vpop.xlane.xlu0 %2279
    %v2281 = vsel %vm1573, %v2265, 0.0
    %2282 = vadd.xlane.f32.xlu0 %v2281
    %v2283 = vpop.xlane.xlu0 %2282
    %v2284 = vsel %vm1573, %v2266, 0.0
    %2285 = vadd.xlane.f32.xlu0 %v2284
    %v2286 = vpop.xlane.xlu0 %2285
    %v2287 = vsel %vm1573, %v2267, 0.0
    %2288 = vadd.xlane.f32.xlu0 %v2287
    %v2289 = vpop.xlane.xlu0 %2288
    %v2290 = vsel %vm1573, %v2268, 0.0
    %2291 = vadd.xlane.f32.xlu0 %v2290
    %v2292 = vpop.xlane.xlu0 %2291
    %vm2293 = vcmask 1041408
    %v2294 = vsel %vm2293, %v2271, -inf
    %v2295 = vsel %vm2293, %v2274, -inf
    %v2296 = vsel %vm2293, %v2277, -inf
    %v2297 = vsel %vm2293, %v2280, -inf
    %v2298 = vsel %vm2293, %v2283, -inf
    %v2299 = vmax.f32 %v2294, %v2298
    %v2300 = vsel %vm2293, %v2286, -inf
    %v2301 = vmax.f32 %v2295, %v2300
    %v2302 = vsel %vm2293, %v2289, -inf
    %v2303 = vmax.f32 %v2296, %v2302
    %v2304 = vsel %vm2293, %v2292, -inf
    %v2305 = vmax.f32 %v2297, %v2304
    %v2306 = vmax.f32 %v2299, %v2301
    %v2307 = vmax.f32 %v2303, %v2305
    %v2308 = vmax.f32 %v2306, %v2307
    %v2309 = vsub.f32 %v2271, %v2308
    %v2310 = vsub.f32 %v2274, %v2308
    %v2311 = vsub.f32 %v2277, %v2308
    %v2312 = vsub.f32 %v2280, %v2308
    %v2313 = vsub.f32 %v2283, %v2308
    %v2314 = vsub.f32 %v2286, %v2308
    %v2315 = vsub.f32 %v2289, %v2308
    %v2316 = vsub.f32 %v2292, %v2308
    %v2317 = vmul.f32 %v2309, 1.442695
    %v2318 = vpow.pop %v2317
    %v2319 = vmul.f32 %v2310, 1.442695
    %v2320 = vpow.pop %v2319
    %v2321 = vmul.f32 %v2311, 1.442695
    %v2322 = vpow.pop %v2321
    %v2323 = vmul.f32 %v2312, 1.442695
    %v2324 = vpow.pop %v2323
    %v2325 = vmul.f32 %v2313, 1.442695
    %v2326 = vpow.pop %v2325
    %v2327 = vmul.f32 %v2314, 1.442695
    %v2328 = vpow.pop %v2327
    %v2329 = vmul.f32 %v2315, 1.442695
    %v2330 = vpow.pop %v2329
    %v2331 = vmul.f32 %v2316, 1.442695
    %v2332 = vpow.pop %v2331
    %v2333 = vsel %vm2293, %v2318, 0.0
    %v2334 = vsel %vm2293, %v2320, 0.0
    %v2335 = vadd.f32 %v2333, %v2334
    %v2336 = vsel %vm2293, %v2322, 0.0
    %v2337 = vadd.f32 %v2335, %v2336
    %v2338 = vsel %vm2293, %v2324, 0.0
    %v2339 = vadd.f32 %v2337, %v2338
    %v2340 = vsel %vm2293, %v2326, 0.0
    %v2341 = vadd.f32 %v2339, %v2340
    %v2342 = vsel %vm2293, %v2328, 0.0
    %v2343 = vadd.f32 %v2341, %v2342
    %v2344 = vsel %vm2293, %v2330, 0.0
    %v2345 = vadd.f32 %v2343, %v2344
    %v2346 = vsel %vm2293, %v2332, 0.0
    %v2347 = vadd.f32 %v2345, %v2346
    %v2348 = vrcp.pop %v2347
    %v2349 = vmul.f32 %v2318, %v2348
    %v2350 = vmul.f32 %v2320, %v2348
    %v2351 = vmul.f32 %v2322, %v2348
    %v2352 = vmul.f32 %v2324, %v2348
    %v2353 = vmul.f32 %v2326, %v2348
    %v2354 = vmul.f32 %v2328, %v2348
    %v2355 = vmul.f32 %v2330, %v2348
    %v2356 = vmul.f32 %v2332, %v2348
    %v2357 = vmul.f32 %v2349, %v2153
    %v2358 = vmul.f32 %v2350, %v2154
    %v2359 = vmul.f32 %v2351, %v2155
    %v2360 = vmul.f32 %v2352, %v2156
    %v2361 = vmul.f32 %v2353, %v2157
    %v2362 = vmul.f32 %v2354, %v2158
    %v2363 = vmul.f32 %v2355, %v2159
    %v2364 = vmul.f32 %v2356, %v2160
    %v2365 = vsel %vm1498, %v2357, 0.0
    %v2366 = vsel %vm1498, %v2358, 0.0
    %v2367 = vadd.f32 %v2365, %v2366
    %v2368 = vsel %vm1498, %v2359, 0.0
    %v2369 = vadd.f32 %v2367, %v2368
    %v2370 = vsel %vm1498, %v2360, 0.0
    %v2371 = vadd.f32 %v2369, %v2370
    %v2372 = vsel %vm1498, %v2361, 0.0
    %v2373 = vadd.f32 %v2371, %v2372
    %v2374 = vsel %vm1498, %v2362, 0.0
    %v2375 = vadd.f32 %v2373, %v2374
    %v2376 = vsel %vm1498, %v2363, 0.0
    %v2377 = vadd.f32 %v2375, %v2376
    %v2378 = vsel %vm1498, %v2364, 0.0
    %v2379 = vadd.f32 %v2377, %v2378
    %v2380 = vld [vmem:[%s7] sm:$0xff]
    %v2381 = vld [vmem:[%s7 + $0x8] sm:$0xff]
    %v2382 = vld [vmem:[%s8] sm:$0xff]
    %v2383 = vld [vmem:[%s8 + $0x8] sm:$0xff]
    %v2384 = vld [vmem:[%s8 + $0x10] sm:$0xff]
    %v2385 = vld [vmem:[%s8 + $0x18] sm:$0xff]
    %v2387 = vsel %vm76, %v2379, 0
    %2389 = vmatprep.subr.mxu0 0.0
    %2390 = vmatpush1.msra.mxu0 0.0
    %2391 = vmatprep.subr.mxu0 0.0
    %2392 = vmatpush1.msra.mxu0 0.0
    %2393 = vmatprep.subr.mxu0 0.0
    %2394 = vmatpush1.msra.mxu0 0.0
    %2395 = vmatprep.subr.mxu0 0.0
    %2396 = vmatpush1.msra.mxu0 0.0
    %2397 = vmatprep.subr.mxu0 0.0
    %2398 = vmatpush1.msra.mxu0 0.0
    %2399 = vmatprep.subr.mxu0 0.0
    %2400 = vmatpush1.msra.mxu0 0.0
    %2401 = vmatprep.subr.mxu0 0.0
    %2402 = vmatpush1.msra.mxu0 0.0
    %2403 = vmatprep.subr.mxu0 0.0
    %2404 = vmatpush1.msra.mxu0 0.0
    %2405 = vmatprep.subr.mxu0 0.0
    %2406 = vmatpush1.msra.mxu0 0.0
    %2407 = vmatprep.subr.mxu0 0.0
    %2408 = vmatpush1.msra.mxu0 0.0
    %2409 = vmatprep.subr.mxu0 0.0
    %2410 = vmatpush1.msra.mxu0 0.0
    %2411 = vmatprep.subr.mxu0 0.0
    %2412 = vmatpush1.msra.mxu0 0.0
    %2413 = vmatprep.subr.mxu0 0.0
    %2414 = vmatpush1.msra.mxu0 %v2385
    %2415 = vmatprep.subr.mxu0 0.0
    %2416 = vmatpush1.msra.mxu0 %v2384
    %2417 = vmatprep.subr.mxu0 0.0
    %2418 = vmatpush1.msra.mxu0 %v2383
    %2419 = vmatprep.subr.mxu0 0.0
    %2420 = vmatpush1.msra.mxu0 %v2382
    %2421 = vmatprep.subr.mxu0 0.0
    %2422 = vmatpush2.msra.mxu0 0.0
    %2423 = vmatprep.subr.mxu0 0.0
    %2424 = vmatpush2.msra.mxu0 0.0
    %2425 = vmatprep.subr.mxu0 0.0
    %2426 = vmatpush2.msra.mxu0 0.0
    %2427 = vmatprep.subr.mxu0 0.0
    %2428 = vmatpush2.msra.mxu0 0.0
    %2429 = vmatprep.subr.mxu0 0.0
    %2430 = vmatpush2.msra.mxu0 0.0
    %2431 = vmatprep.subr.mxu0 0.0
    %2432 = vmatpush2.msra.mxu0 0.0
    %2433 = vmatprep.subr.mxu0 0.0
    %2434 = vmatpush2.msra.mxu0 0.0
    %2435 = vmatprep.subr.mxu0 0.0
    %2436 = vmatpush2.msra.mxu0 0.0
    %2437 = vmatprep.subr.mxu0 0.0
    %2438 = vmatpush2.msra.mxu0 0.0
    %2439 = vmatprep.subr.mxu0 0.0
    %2440 = vmatpush2.msra.mxu0 0.0
    %2441 = vmatprep.subr.mxu0 0.0
    %2442 = vmatpush2.msra.mxu0 0.0
    %2443 = vmatprep.subr.mxu0 0.0
    %2444 = vmatpush2.msra.mxu0 0.0
    %2445 = vmatprep.subr.mxu0 0.0
    %2446 = vmatpush2.msra.mxu0 0.0
    %2447 = vmatprep.subr.mxu0 0.0
    %2448 = vmatpush2.msra.mxu0 0.0
    %2449 = vmatprep.subr.mxu0 0.0
    %2450 = vmatpush2.msra.mxu0 0.0
    %2451 = vmatprep.subr.mxu0 0.0
    %2452 = vmatpush2.msra.mxu0 0.0
    %2453 = vmatprep.mubr.f32.mxu0 0.0
    %2454 = vmatmul.mubr.f32.gmra.mxu0 %v2387
    %v2455 = vpop.f32.mrf.mxu0
    %v2456 = vadd.f32 0.0, %v2455
    %v2457 = vpop.f32.mrf.mxu0
    %2458 = vdwg.mxu0
    %v2460 = vsel %vm1496, %v2144, 0
    %2462 = vmatprep.subr.mxu0 0.0
    %2463 = vmatpush1.msra.mxu0 0.0
    %2464 = vmatprep.subr.mxu0 0.0
    %2465 = vmatpush1.msra.mxu0 0.0
    %2466 = vmatprep.subr.mxu0 0.0
    %2467 = vmatpush1.msra.mxu0 0.0
    %2468 = vmatprep.subr.mxu0 0.0
    %2469 = vmatpush1.msra.mxu0 0.0
    %2470 = vmatprep.subr.mxu0 0.0
    %2471 = vmatpush1.msra.mxu0 0.0
    %2472 = vmatprep.subr.mxu0 0.0
    %2473 = vmatpush1.msra.mxu0 0.0
    %2474 = vmatprep.subr.mxu0 0.0
    %2475 = vmatpush1.msra.mxu0 0.0
    %2476 = vmatprep.subr.mxu0 0.0
    %2477 = vmatpush1.msra.mxu0 0.0
    %2478 = vmatprep.subr.mxu0 0.0
    %2479 = vmatpush1.msra.mxu0 0.0
    %2480 = vmatprep.subr.mxu0 0.0
    %2481 = vmatpush1.msra.mxu0 0.0
    %2482 = vmatprep.subr.mxu0 0.0
    %2483 = vmatpush1.msra.mxu0 0.0
    %2484 = vmatprep.subr.mxu0 0.0
    %2485 = vmatpush1.msra.mxu0 0.0
    %2486 = vmatprep.subr.mxu0 0.0
    %2487 = vmatpush1.msra.mxu0 0.0
    %2488 = vmatprep.subr.mxu0 0.0
    %2489 = vmatpush1.msra.mxu0 0.0
    %2490 = vmatprep.subr.mxu0 0.0
    %2491 = vmatpush1.msra.mxu0 %v2381
    %2492 = vmatprep.subr.mxu0 0.0
    %2493 = vmatpush1.msra.mxu0 %v2380
    %2494 = vmatprep.subr.mxu0 0.0
    %2495 = vmatpush2.msra.mxu0 0.0
    %2496 = vmatprep.subr.mxu0 0.0
    %2497 = vmatpush2.msra.mxu0 0.0
    %2498 = vmatprep.subr.mxu0 0.0
    %2499 = vmatpush2.msra.mxu0 0.0
    %2500 = vmatprep.subr.mxu0 0.0
    %2501 = vmatpush2.msra.mxu0 0.0
    %2502 = vmatprep.subr.mxu0 0.0
    %2503 = vmatpush2.msra.mxu0 0.0
    %2504 = vmatprep.subr.mxu0 0.0
    %2505 = vmatpush2.msra.mxu0 0.0
    %2506 = vmatprep.subr.mxu0 0.0
    %2507 = vmatpush2.msra.mxu0 0.0
    %2508 = vmatprep.subr.mxu0 0.0
    %2509 = vmatpush2.msra.mxu0 0.0
    %2510 = vmatprep.subr.mxu0 0.0
    %2511 = vmatpush2.msra.mxu0 0.0
    %2512 = vmatprep.subr.mxu0 0.0
    %2513 = vmatpush2.msra.mxu0 0.0
    %2514 = vmatprep.subr.mxu0 0.0
    %2515 = vmatpush2.msra.mxu0 0.0
    %2516 = vmatprep.subr.mxu0 0.0
    %2517 = vmatpush2.msra.mxu0 0.0
    %2518 = vmatprep.subr.mxu0 0.0
    %2519 = vmatpush2.msra.mxu0 0.0
    %2520 = vmatprep.subr.mxu0 0.0
    %2521 = vmatpush2.msra.mxu0 0.0
    %2522 = vmatprep.subr.mxu0 0.0
    %2523 = vmatpush2.msra.mxu0 0.0
    %2524 = vmatprep.subr.mxu0 0.0
    %2525 = vmatpush2.msra.mxu0 0.0
    %2526 = vmatprep.mubr.f32.mxu0 0.0
    %2527 = vmatmul.mubr.f32.gmra.mxu0 %v2460
    %v2528 = vpop.f32.mrf.mxu0
    %v2529 = vadd.f32 %v2456, %v2528
    %v2530 = vpop.f32.mrf.mxu0
    %2531 = vdwg.mxu0
    %v2532 = vld [vmem:[%s9] sm:$0x1]
    %v2534 = vlaneseq
    %v2535 = vshrl.u32 %v2534, 7
    %v2536 = vsub.s32 0, %v2535
    %v2537 = vrot.slane %v2532, %v2536
    %v2539 = vadd.f32 %v2529, %v2537
    %v2540 = vld [vmem:[%s10] sm:$0xff]
    %v2541 = vld [vmem:[%s10 + $0x8] sm:$0xff]
    %v2542 = vld [vmem:[%s10 + $0x10] sm:$0xff]
    %v2543 = vld [vmem:[%s10 + $0x18] sm:$0xff]
    %v2544 = vld [vmem:[%s11] sm:$0x1]
    %v2546 = vlaneseq
    %v2547 = vshrl.u32 %v2546, 7
    %v2548 = vsub.s32 0, %v2547
    %v2549 = vrot.slane %v2544, %v2548
    %2552 = vrot.lane.b32.xlu0 %v2139, 96
    %v2553 = vpop.permute.xlu0 %2552
    %v2554 = vsel %vm76, %v2553, 0
    %2556 = vmatprep.subr.mxu0 0.0
    %2557 = vmatpush1.msra.mxu0 0.0
    %2558 = vmatprep.subr.mxu0 0.0
    %2559 = vmatpush1.msra.mxu0 0.0
    %2560 = vmatprep.subr.mxu0 0.0
    %2561 = vmatpush1.msra.mxu0 0.0
    %2562 = vmatprep.subr.mxu0 0.0
    %2563 = vmatpush1.msra.mxu0 0.0
    %2564 = vmatprep.subr.mxu0 0.0
    %2565 = vmatpush1.msra.mxu0 0.0
    %2566 = vmatprep.subr.mxu0 0.0
    %2567 = vmatpush1.msra.mxu0 0.0
    %2568 = vmatprep.subr.mxu0 0.0
    %2569 = vmatpush1.msra.mxu0 0.0
    %2570 = vmatprep.subr.mxu0 0.0
    %2571 = vmatpush1.msra.mxu0 0.0
    %2572 = vmatprep.subr.mxu0 0.0
    %2573 = vmatpush1.msra.mxu0 0.0
    %2574 = vmatprep.subr.mxu0 0.0
    %2575 = vmatpush1.msra.mxu0 0.0
    %2576 = vmatprep.subr.mxu0 0.0
    %2577 = vmatpush1.msra.mxu0 0.0
    %2578 = vmatprep.subr.mxu0 0.0
    %2579 = vmatpush1.msra.mxu0 0.0
    %2580 = vmatprep.subr.mxu0 0.0
    %2581 = vmatpush1.msra.mxu0 %v2543
    %2582 = vmatprep.subr.mxu0 0.0
    %2583 = vmatpush1.msra.mxu0 %v2542
    %2584 = vmatprep.subr.mxu0 0.0
    %2585 = vmatpush1.msra.mxu0 %v2541
    %2586 = vmatprep.subr.mxu0 0.0
    %2587 = vmatpush1.msra.mxu0 %v2540
    %2588 = vmatprep.subr.mxu0 0.0
    %2589 = vmatpush2.msra.mxu0 0.0
    %2590 = vmatprep.subr.mxu0 0.0
    %2591 = vmatpush2.msra.mxu0 0.0
    %2592 = vmatprep.subr.mxu0 0.0
    %2593 = vmatpush2.msra.mxu0 0.0
    %2594 = vmatprep.subr.mxu0 0.0
    %2595 = vmatpush2.msra.mxu0 0.0
    %2596 = vmatprep.subr.mxu0 0.0
    %2597 = vmatpush2.msra.mxu0 0.0
    %2598 = vmatprep.subr.mxu0 0.0
    %2599 = vmatpush2.msra.mxu0 0.0
    %2600 = vmatprep.subr.mxu0 0.0
    %2601 = vmatpush2.msra.mxu0 0.0
    %2602 = vmatprep.subr.mxu0 0.0
    %2603 = vmatpush2.msra.mxu0 0.0
    %2604 = vmatprep.subr.mxu0 0.0
    %2605 = vmatpush2.msra.mxu0 0.0
    %2606 = vmatprep.subr.mxu0 0.0
    %2607 = vmatpush2.msra.mxu0 0.0
    %2608 = vmatprep.subr.mxu0 0.0
    %2609 = vmatpush2.msra.mxu0 0.0
    %2610 = vmatprep.subr.mxu0 0.0
    %2611 = vmatpush2.msra.mxu0 0.0
    %2612 = vmatprep.subr.mxu0 0.0
    %2613 = vmatpush2.msra.mxu0 0.0
    %2614 = vmatprep.subr.mxu0 0.0
    %2615 = vmatpush2.msra.mxu0 0.0
    %2616 = vmatprep.subr.mxu0 0.0
    %2617 = vmatpush2.msra.mxu0 0.0
    %2618 = vmatprep.subr.mxu0 0.0
    %2619 = vmatpush2.msra.mxu0 0.0
    %2620 = vmatprep.mubr.f32.mxu0 0.0
    %2621 = vmatmul.mubr.f32.gmra.mxu0 %v2554
    %v2622 = vpop.f32.mrf.mxu0
    %v2623 = vadd.f32 %v2549, %v2622
    %v2624 = vpop.f32.mrf.mxu0
    %2625 = vdwg.mxu0
    %v2626 = vadd.f32 %v2539, %v2623
    %v2627 = vxor.u32 %v2626, 2147483648
    %v2628 = vmul.f32 %v2627, 1.442695
    %v2629 = vpow.pop %v2628
    %v2630 = vadd.f32 %v2629, 1.0
    %v2631 = vrcp.pop %v2630
    %v2632 = vmul.f32 1.0, %v2631
    %2634 = vrot.lane.b32.xlu0 %v2623, 64
    %v2635 = vpop.permute.xlu0 %2634
    %v2637 = vmul.f32 %v2632, %v2635
    %2639 = vrot.lane.b32.xlu0 %v2637, 64
    %v2640 = vpop.permute.xlu0 %2639
    %v2642 = vadd.f32 %v2539, %v2640
    %v2643 = vtanh.pop %v2642
    %v2644 = vsub.f32 1.0, %v2632
    %2646 = vrot.lane.b32.xlu0 %v2643, 96
    %v2647 = vpop.permute.xlu0 %2646
    %v2649 = vmul.f32 %v2644, %v2647
    %v2650 = vmul.f32 %v2632, %v2139
    %v2651 = vadd.f32 %v2649, %v2650
    %v2652 = vld [vmem:[%s15] sm:$0xff]
    %v2653 = vld [vmem:[%s15 + $0x8] sm:$0xff]
    %v2654 = vld [vmem:[%s15 + $0x10] sm:$0xff]
    %v2655 = vld [vmem:[%s15 + $0x18] sm:$0xff]
    %v2656 = vld [vmem:[%s16] sm:$0xff]
    %v2657 = vld [vmem:[%s16 + $0x8] sm:$0xff]
    %v2658 = vld [vmem:[%s16 + $0x10] sm:$0xff]
    %v2659 = vld [vmem:[%s16 + $0x18] sm:$0xff]
    %2660 = vmatprep.subr.mxu0 0.0
    %2661 = vmatpush1.msra.mxu0 0.0
    %2662 = vmatprep.subr.mxu0 0.0
    %2663 = vmatpush1.msra.mxu0 0.0
    %2664 = vmatprep.subr.mxu0 0.0
    %2665 = vmatpush1.msra.mxu0 0.0
    %2666 = vmatprep.subr.mxu0 0.0
    %2667 = vmatpush1.msra.mxu0 0.0
    %2668 = vmatprep.subr.mxu0 0.0
    %2669 = vmatpush1.msra.mxu0 0.0
    %2670 = vmatprep.subr.mxu0 0.0
    %2671 = vmatpush1.msra.mxu0 0.0
    %2672 = vmatprep.subr.mxu0 0.0
    %2673 = vmatpush1.msra.mxu0 0.0
    %2674 = vmatprep.subr.mxu0 0.0
    %2675 = vmatpush1.msra.mxu0 0.0
    %2676 = vmatprep.subr.mxu0 0.0
    %2677 = vmatpush1.msra.mxu0 0.0
    %2678 = vmatprep.subr.mxu0 0.0
    %2679 = vmatpush1.msra.mxu0 0.0
    %2680 = vmatprep.subr.mxu0 0.0
    %2681 = vmatpush1.msra.mxu0 0.0
    %2682 = vmatprep.subr.mxu0 0.0
    %2683 = vmatpush1.msra.mxu0 0.0
    %2684 = vmatprep.subr.mxu0 0.0
    %2685 = vmatpush1.msra.mxu0 %v2659
    %2686 = vmatprep.subr.mxu0 0.0
    %2687 = vmatpush1.msra.mxu0 %v2658
    %2688 = vmatprep.subr.mxu0 0.0
    %2689 = vmatpush1.msra.mxu0 %v2657
    %2690 = vmatprep.subr.mxu0 0.0
    %2691 = vmatpush1.msra.mxu0 %v2656
    %2692 = vmatprep.subr.mxu0 0.0
    %2693 = vmatpush2.msra.mxu0 0.0
    %2694 = vmatprep.subr.mxu0 0.0
    %2695 = vmatpush2.msra.mxu0 0.0
    %2696 = vmatprep.subr.mxu0 0.0
    %2697 = vmatpush2.msra.mxu0 0.0
    %2698 = vmatprep.subr.mxu0 0.0
    %2699 = vmatpush2.msra.mxu0 0.0
    %2700 = vmatprep.subr.mxu0 0.0
    %2701 = vmatpush2.msra.mxu0 0.0
    %2702 = vmatprep.subr.mxu0 0.0
    %2703 = vmatpush2.msra.mxu0 0.0
    %2704 = vmatprep.subr.mxu0 0.0
    %2705 = vmatpush2.msra.mxu0 0.0
    %2706 = vmatprep.subr.mxu0 0.0
    %2707 = vmatpush2.msra.mxu0 0.0
    %2708 = vmatprep.subr.mxu0 0.0
    %2709 = vmatpush2.msra.mxu0 0.0
    %2710 = vmatprep.subr.mxu0 0.0
    %2711 = vmatpush2.msra.mxu0 0.0
    %2712 = vmatprep.subr.mxu0 0.0
    %2713 = vmatpush2.msra.mxu0 0.0
    %2714 = vmatprep.subr.mxu0 0.0
    %2715 = vmatpush2.msra.mxu0 0.0
    %2716 = vmatprep.subr.mxu0 0.0
    %2717 = vmatpush2.msra.mxu0 0.0
    %2718 = vmatprep.subr.mxu0 0.0
    %2719 = vmatpush2.msra.mxu0 0.0
    %2720 = vmatprep.subr.mxu0 0.0
    %2721 = vmatpush2.msra.mxu0 0.0
    %2722 = vmatprep.subr.mxu0 0.0
    %2723 = vmatpush2.msra.mxu0 0.0
    %2724 = vmatprep.mubr.f32.mxu0 0.0
    %2725 = vmatmul.mubr.f32.gmra.mxu0 %v2387
    %v2726 = vpop.f32.mrf.mxu0
    %v2727 = vadd.f32 0.0, %v2726
    %v2728 = vpop.f32.mrf.mxu0
    %2729 = vdwg.mxu0
    %2731 = vrot.lane.b32.xlu0 %v2651, 96
    %v2732 = vpop.permute.xlu0 %2731
    %v2733 = vsel %vm76, %v2732, 0
    %2735 = vmatprep.subr.mxu0 0.0
    %2736 = vmatpush1.msra.mxu0 0.0
    %2737 = vmatprep.subr.mxu0 0.0
    %2738 = vmatpush1.msra.mxu0 0.0
    %2739 = vmatprep.subr.mxu0 0.0
    %2740 = vmatpush1.msra.mxu0 0.0
    %2741 = vmatprep.subr.mxu0 0.0
    %2742 = vmatpush1.msra.mxu0 0.0
    %2743 = vmatprep.subr.mxu0 0.0
    %2744 = vmatpush1.msra.mxu0 0.0
    %2745 = vmatprep.subr.mxu0 0.0
    %2746 = vmatpush1.msra.mxu0 0.0
    %2747 = vmatprep.subr.mxu0 0.0
    %2748 = vmatpush1.msra.mxu0 0.0
    %2749 = vmatprep.subr.mxu0 0.0
    %2750 = vmatpush1.msra.mxu0 0.0
    %2751 = vmatprep.subr.mxu0 0.0
    %2752 = vmatpush1.msra.mxu0 0.0
    %2753 = vmatprep.subr.mxu0 0.0
    %2754 = vmatpush1.msra.mxu0 0.0
    %2755 = vmatprep.subr.mxu0 0.0
    %2756 = vmatpush1.msra.mxu0 0.0
    %2757 = vmatprep.subr.mxu0 0.0
    %2758 = vmatpush1.msra.mxu0 0.0
    %2759 = vmatprep.subr.mxu0 0.0
    %2760 = vmatpush1.msra.mxu0 %v2655
    %2761 = vmatprep.subr.mxu0 0.0
    %2762 = vmatpush1.msra.mxu0 %v2654
    %2763 = vmatprep.subr.mxu0 0.0
    %2764 = vmatpush1.msra.mxu0 %v2653
    %2765 = vmatprep.subr.mxu0 0.0
    %2766 = vmatpush1.msra.mxu0 %v2652
    %2767 = vmatprep.subr.mxu0 0.0
    %2768 = vmatpush2.msra.mxu0 0.0
    %2769 = vmatprep.subr.mxu0 0.0
    %2770 = vmatpush2.msra.mxu0 0.0
    %2771 = vmatprep.subr.mxu0 0.0
    %2772 = vmatpush2.msra.mxu0 0.0
    %2773 = vmatprep.subr.mxu0 0.0
    %2774 = vmatpush2.msra.mxu0 0.0
    %2775 = vmatprep.subr.mxu0 0.0
    %2776 = vmatpush2.msra.mxu0 0.0
    %2777 = vmatprep.subr.mxu0 0.0
    %2778 = vmatpush2.msra.mxu0 0.0
    %2779 = vmatprep.subr.mxu0 0.0
    %2780 = vmatpush2.msra.mxu0 0.0
    %2781 = vmatprep.subr.mxu0 0.0
    %2782 = vmatpush2.msra.mxu0 0.0
    %2783 = vmatprep.subr.mxu0 0.0
    %2784 = vmatpush2.msra.mxu0 0.0
    %2785 = vmatprep.subr.mxu0 0.0
    %2786 = vmatpush2.msra.mxu0 0.0
    %2787 = vmatprep.subr.mxu0 0.0
    %2788 = vmatpush2.msra.mxu0 0.0
    %2789 = vmatprep.subr.mxu0 0.0
    %2790 = vmatpush2.msra.mxu0 0.0
    %2791 = vmatprep.subr.mxu0 0.0
    %2792 = vmatpush2.msra.mxu0 0.0
    %2793 = vmatprep.subr.mxu0 0.0
    %2794 = vmatpush2.msra.mxu0 0.0
    %2795 = vmatprep.subr.mxu0 0.0
    %2796 = vmatpush2.msra.mxu0 0.0
    %2797 = vmatprep.subr.mxu0 0.0
    %2798 = vmatpush2.msra.mxu0 0.0
    %2799 = vmatprep.mubr.f32.mxu0 0.0
    %2800 = vmatmul.mubr.f32.gmra.mxu0 %v2733
    %v2801 = vpop.f32.mrf.mxu0
    %v2802 = vadd.f32 %v2727, %v2801
    %v2803 = vpop.f32.mrf.mxu0
    %2804 = vdwg.mxu0
    %v2805 = vld [vmem:[%s17] sm:$0x1]
    %v2807 = vlaneseq
    %v2808 = vshrl.u32 %v2807, 7
    %v2809 = vsub.s32 0, %v2808
    %v2810 = vrot.slane %v2805, %v2809
    %v2812 = vadd.f32 %v2802, %v2810
    %v2813 = vsel %vm1498, %v2812, -inf
    %2814 = vmax.xlane.f32.xlu0 %v2813
    %v2815 = vpop.xlane.xlu0 %2814
    %v2816 = vsub.f32 %v2812, %v2815
    %v2817 = vmul.f32 %v2816, 1.442695
    %v2818 = vpow.pop %v2817
    %v2819 = vsel %vm1498, %v2818, 0.0
    %2820 = vadd.xlane.f32.xlu0 %v2819
    %v2821 = vpop.xlane.xlu0 %2820
    %v2822 = vrcp.pop %v2821
    %v2823 = vmul.f32 %v2818, %v2822
    %2825 = vrot.lane.b32.xlu0 %v2539, 64
    %v2826 = vpop.permute.xlu0 %2825
    %v2828 = vadd.f32 %v2812, %v2826
    %v2829 = vxor.u32 %v2828, 2147483648
    %v2830 = vmul.f32 %v2829, 1.442695
    %v2831 = vpow.pop %v2830
    %v2832 = vadd.f32 %v2831, 1.0
    %v2833 = vrcp.pop %v2832
    %v2834 = vmul.f32 1.0, %v2833
    %v2835 = vld [vmem:[%s2] sm:$0x3]
    %v2836 = vld [vmem:[%s2 + $0x2] sm:$0x3]
    %v2837 = vld [vmem:[%s2 + $0x4] sm:$0x3]
    %v2838 = vld [vmem:[%s2 + $0x6] sm:$0x3]
    %v2839 = vld [vmem:[%s2 + $0x8] sm:$0x3]
    %v2840 = vld [vmem:[%s2 + $0xa] sm:$0x3]
    %v2841 = vld [vmem:[%s2 + $0xc] sm:$0x3]
    %v2842 = vld [vmem:[%s2 + $0xe] sm:$0x3]
    %v2843 = vmul.f32 %v2349, %v2835
    %v2844 = vmul.f32 %v2350, %v2836
    %v2845 = vmul.f32 %v2351, %v2837
    %v2846 = vmul.f32 %v2352, %v2838
    %v2847 = vmul.f32 %v2353, %v2839
    %v2848 = vmul.f32 %v2354, %v2840
    %v2849 = vmul.f32 %v2355, %v2841
    %v2850 = vmul.f32 %v2356, %v2842
    %v2851 = vsel %vm1498, %v2843, 0.0
    %v2852 = vsel %vm1498, %v2844, 0.0
    %v2853 = vadd.f32 %v2851, %v2852
    %v2854 = vsel %vm1498, %v2845, 0.0
    %v2855 = vadd.f32 %v2853, %v2854
    %v2856 = vsel %vm1498, %v2846, 0.0
    %v2857 = vadd.f32 %v2855, %v2856
    %v2858 = vsel %vm1498, %v2847, 0.0
    %v2859 = vadd.f32 %v2857, %v2858
    %v2860 = vsel %vm1498, %v2848, 0.0
    %v2861 = vadd.f32 %v2859, %v2860
    %v2862 = vsel %vm1498, %v2849, 0.0
    %v2863 = vadd.f32 %v2861, %v2862
    %v2864 = vsel %vm1498, %v2850, 0.0
    %v2865 = vadd.f32 %v2863, %v2864
    %2867 = vset.pattern.permute.xlu0 32
    %2868 = vperm.xlu0 %2867, %v2834
    %v2869 = vpop.permute.xlu0 %2868
    %v2871 = vmul.f32 %v2869, %v2823
    %v2872 = vsub.f32 1.0, %v2834
    %2874 = vset.pattern.permute.xlu0 32
    %2875 = vperm.xlu0 %2874, %v2872
    %v2876 = vpop.permute.xlu0 %2875
    %v2878 = vmul.f32 %v2876, %v2865
    %v2879 = vadd.f32 %v2871, %v2878
    %s2880 = smul.u32 %s2134, 2
    %s2881 = scalar_lea.vmem [#allocation4], %s2880
    %2882 = vst.msk [vmem:[%s2881] sm:$0x3] %vm1498, %v2879
  $region78: #{eda_cs_forward.1} parent=0 // loop_footer
    %s2138 = sadd.s32 1, %s2134
  $region79: #{eda_cs_forward.1} parent=0 // loop_footer_branch
    %2133 = sbr.rel target = $region75
  $region80: #{eda_cs_forward.1} parent=0 // loop_exit
    _
  %v2883 = vld [vmem:[#allocation4] sm:$0x3]
  %s2884 = scalar_lea.vmem [#allocation4], 2
  %v2885 = vld [vmem:[%s2884] sm:$0x3]
  %s2886 = scalar_lea.vmem [#allocation4], 4
  %v2887 = vld [vmem:[%s2886] sm:$0x3]
  %s2888 = scalar_lea.vmem [#allocation4], 6
  %v2889 = vld [vmem:[%s2888] sm:$0x3]
  %s2890 = scalar_lea.vmem [#allocation4], 8
  %v2891 = vld [vmem:[%s2890] sm:$0x3]
  %s2892 = scalar_lea.vmem [#allocation4], 10
  %v2893 = vld [vmem:[%s2892] sm:$0x3]
  %s2894 = scalar_lea.vmem [#allocation4], 12
  %v2895 = vld [vmem:[%s2894] sm:$0x3]
  %s2896 = scalar_lea.vmem [#allocation4], 14
  %v2897 = vld [vmem:[%s2896] sm:$0x3]
  %2899 = vrot.lane.b32.xlu0 %v2885, 32
  %v2900 = vpop.permute.xlu0 %2899
  %2903 = vrot.lane.b32.xlu0 %v2887, 64
  %v2904 = vpop.permute.xlu0 %2903
  %2907 = vrot.lane.b32.xlu0 %v2889, 96
  %v2908 = vpop.permute.xlu0 %2907
  %2911 = vrot.lane.b32.xlu0 %v2893, 32
  %v2912 = vpop.permute.xlu0 %2911
  %2915 = vrot.lane.b32.xlu0 %v2895, 64
  %v2916 = vpop.permute.xlu0 %2915
  %2919 = vrot.lane.b32.xlu0 %v2897, 96
  %v2920 = vpop.permute.xlu0 %2919
  %v2922 = vsel %vm76, %v2883, %v2900
  %vm2923 = vcmask 523264
  %v2924 = vsel %vm2923, %v2922, %v2904
  %vm2925 = vcmask 785408
  %v2926 = vsel %vm2925, %v2924, %v2908
  %v2927 = vsel %vm76, %v2891, %v2912
  %v2928 = vsel %vm2923, %v2927, %v2916
  %v2929 = vsel %vm2925, %v2928, %v2920
  %v2932 = vcombine.low %v2926, %v2929
  %v2934 = vunpack.c.l.s4 1983009808
  %v2935 = vunpack.c.0.s8 %v2934
  %v2936 = vlaneseq
  %v2937 = vshrl.u32 %v2936, 7
  %v2938 = vsub.s32 %v2935, %v2937
  %v2939 = vrot.slane %v2932, %v2938
  %2941 = vst [vmem:[%s18] sm:$0xf] %v2939
  // Predicated region
  $region81: #{eda_cs_forward.1} parent=0 // pred_check
    _
  $region82: #{eda_cs_forward.1} parent=0 // pred_check_branch
    %2943 = sbr.rel (0) target = $region84
  $region83: #{eda_cs_forward.1} parent=0 // pred_region
    _
  $region84: #{eda_cs_forward.1} parent=0 // pred_fallthru
    _
  // Predicated region
  $region85: #{eda_cs_forward.1} parent=0 // pred_check
    _
  $region86: #{eda_cs_forward.1} parent=0 // pred_check_branch
    %2945 = sbr.rel (0) target = $region88
  $region87: #{eda_cs_forward.1} parent=0 // pred_region
    _
  $region88: #{eda_cs_forward.1} parent=0 // pred_fallthru
    _

</llo_original>
